<compile_context>
chip_gen: v5e
topology: v5e:2x2
jax: 0.10.0
libtpu: 0.0.40
codegen_flags: <defaults>
</compile_context>

<pallas_src>
import functools

import jax
import jax.numpy as jnp
from jax.experimental import pallas as pl
from jax.experimental.pallas import tpu as pltpu


# ----------------------------------------------------------------------------
# Fused Pallas kernel: conv3x3 -> ReLU -> conv3x3(dilation=2) -> + x
# ----------------------------------------------------------------------------
def _resblock_crd_kernel(x_ref, w1_ref, b1_ref, w2_ref, b2_ref, o_ref,
                         xpad_ref, ypad_ref, *, H, W, C):
    """One batch element.

    x_ref/o_ref : (1, H, W, C) f32        (NHWC)
    w1_ref/w2_ref : (9*C, C) bf16         (im2col weight matrices)
    b1_ref/b2_ref : (1, C) f32
    xpad_ref : (H+2, W+2, C) f32 scratch  (1-px halo for conv 'C')
    ypad_ref : (H+4, W+4, C) f32 scratch  (2-px halo for conv 'D', dilation 2)
    """
    f32 = jnp.float32
    bf16 = jnp.bfloat16

    # ---- zero only the thin halo borders (interior fully overwritten) -------
    xpad_ref[0:1, :, :] = jnp.zeros((1, W + 2, C), f32)
    xpad_ref[H + 1:H + 2, :, :] = jnp.zeros((1, W + 2, C), f32)
    xpad_ref[1:H + 1, 0:1, :] = jnp.zeros((H, 1, C), f32)
    xpad_ref[1:H + 1, W + 1:W + 2, :] = jnp.zeros((H, 1, C), f32)

    ypad_ref[0:2, :, :] = jnp.zeros((2, W + 4, C), f32)
    ypad_ref[H + 2:H + 4, :, :] = jnp.zeros((2, W + 4, C), f32)
    ypad_ref[2:H + 2, 0:2, :] = jnp.zeros((H, 2, C), f32)
    ypad_ref[2:H + 2, W + 2:W + 4, :] = jnp.zeros((H, 2, C), f32)

    # ---- 'C': 3x3 conv, stride 1, pad 1 — im2col + single K=9C MXU matmul ---
    xpad_ref[1:H + 1, 1:W + 1, :] = x_ref[0]
    taps = [
        xpad_ref[ky:ky + H, kx:kx + W, :].reshape(H * W, C).astype(bf16)
        for ky in range(3) for kx in range(3)
    ]
    patch = jnp.concatenate(taps, axis=1)                     # (H*W, 9*C) bf16
    acc = jnp.dot(patch, w1_ref[...], preferred_element_type=f32)

    # ---- 'R': bias + ReLU epilogue in f32 ------------------------------------
    y = jnp.maximum(acc + b1_ref[...], 0.0)                   # (H*W, C) f32

    # ---- 'D': 3x3 conv, stride 1, pad 2, dilation 2 — im2col + one matmul ----
    ypad_ref[2:H + 2, 2:W + 2, :] = y.reshape(H, W, C)
    taps = [
        ypad_ref[2 * ky:2 * ky + H, 2 * kx:2 * kx + W, :]
        .reshape(H * W, C).astype(bf16)
        for ky in range(3) for kx in range(3)
    ]
    patch = jnp.concatenate(taps, axis=1)                     # (H*W, 9*C) bf16
    res = jnp.dot(patch, w2_ref[...], preferred_element_type=f32) + b2_ref[...]

    # ---- residual add (x re-read from the ref; fused, no extra launch) -------
    out = x_ref[0] + res.reshape(H, W, C)
    o_ref[...] = out.reshape(1, H, W, C).astype(o_ref.dtype)


# ----------------------------------------------------------------------------
# Wrapper: BlockSpecs / grid / scratch / compiler params
# ----------------------------------------------------------------------------
def resblock_crd_nhwc(x, w1, b1, w2, b2):
    """x: (N,H,W,C) NHWC. w*: (3,3,C,C) HWIO. b*: (C,). Returns (N,H,W,C)."""
    N, H, W, C = x.shape

    # im2col weight matrices: row index = (ky*3 + kx)*C + c_in, bf16 for MXU.
    w1_2d = w1.reshape(9 * C, C).astype(jnp.bfloat16)
    w2_2d = w2.reshape(9 * C, C).astype(jnp.bfloat16)

    kernel = functools.partial(_resblock_crd_kernel, H=H, W=W, C=C)

    flops = N * 2 * 2 * H * W * (9 * C) * C                  # two convs, MACs*2
    bytes_accessed = (2 * N * H * W * C * 4                  # x in + out
                      + 2 * 9 * C * C * 2                    # bf16 weights
                      + 2 * C * 4)                           # biases

    vmem_needed = (
        ((H + 2) * (W + 2) + (H + 4) * (W + 4)) * C * 4      # f32 halo scratch
        + 2 * 2 * H * W * C * 4                              # x/out blocks, 2x buffered
        + 2 * 2 * 9 * C * C * 2                              # weights, 2x buffered
        + 2 * H * W * 9 * C * 2                              # live im2col patch (bf16)
        + 4 * H * W * C * 4)                                 # f32 temporaries
    vmem_limit = int(min(96 * 1024 * 1024,
                         max(32 * 1024 * 1024, 2 * vmem_needed)))

    return pl.pallas_call(
        kernel,
        out_shape=jax.ShapeDtypeStruct((N, H, W, C), x.dtype),
        grid_spec=pltpu.PrefetchScalarGridSpec(
            num_scalar_prefetch=0,
            grid=(N,),
            in_specs=[
                pl.BlockSpec((1, H, W, C), lambda n: (n, 0, 0, 0)),   # x
                pl.BlockSpec((9 * C, C), lambda n: (0, 0)),           # w1 (im2col)
                pl.BlockSpec((1, C), lambda n: (0, 0)),               # b1
                pl.BlockSpec((9 * C, C), lambda n: (0, 0)),           # w2 (im2col)
                pl.BlockSpec((1, C), lambda n: (0, 0)),               # b2
            ],
            out_specs=pl.BlockSpec((1, H, W, C), lambda n: (n, 0, 0, 0)),
            scratch_shapes=[
                pltpu.VMEM((H + 2, W + 2, C), jnp.float32),   # pad-1 halo
                pltpu.VMEM((H + 4, W + 4, C), jnp.float32),   # pad-2 halo
            ],
        ),
        compiler_params=pltpu.CompilerParams(
            dimension_semantics=("parallel",),                # batch across TCs
            vmem_limit_bytes=vmem_limit),
        cost_estimate=pl.CostEstimate(flops=flops, transcendentals=0,
                                      bytes_accessed=bytes_accessed),
    )(x, w1_2d, b1.reshape(1, C), w2_2d, b2.reshape(1, C))


def resblock_crd_forward(x_nchw, params):
    """ResBlock_CRD forward. Input/output NCHW to match the PyTorch module.

    Prefer calling resblock_crd_nhwc directly if the surrounding model can
    stay NHWC — the two transposes below are full HBM passes.
    """
    w1, b1, w2, b2 = params
    x = jnp.transpose(x_nchw, (0, 2, 3, 1))                   # NCHW -> NHWC
    out = resblock_crd_nhwc(x, w1, b1, w2, b2)
    return jnp.transpose(out, (0, 3, 1, 2))                   # NHWC -> NCHW


# ----------------------------------------------------------------------------
# Parameter init (matches PyTorch Conv2d default: U(-1/sqrt(fan_in), +...))
# ----------------------------------------------------------------------------
def init_resblock_crd_params(key, channels=64, dtype=jnp.float32):
    k1w, k1b, k2w, k2b = jax.random.split(key, 4)
    fan_in = channels * 9
    bound = 1.0 / (fan_in ** 0.5)
    w1 = jax.random.uniform(k1w, (3, 3, channels, channels), dtype, -bound, bound)
    b1 = jax.random.uniform(k1b, (channels,), dtype, -bound, bound)
    w2 = jax.random.uniform(k2w, (3, 3, channels, channels), dtype, -bound, bound)
    b2 = jax.random.uniform(k2b, (channels,), dtype, -bound, bound)
    return (w1, b1, w2, b2)


# ----------------------------------------------------------------------------
# Pure-JAX reference (lax convs, f32) for correctness checking
# ----------------------------------------------------------------------------
def resblock_crd_reference(x_nchw, params):
    w1, b1, w2, b2 = params
    x = jnp.transpose(x_nchw, (0, 2, 3, 1))
    dn = ('NHWC', 'HWIO', 'NHWC')
    y = jax.lax.conv_general_dilated(x, w1, (1, 1), [(1, 1), (1, 1)],
                                     dimension_numbers=dn) + b1
    y = jnp.maximum(y, 0.0)
    r = jax.lax.conv_general_dilated(y, w2, (1, 1), [(2, 2), (2, 2)],
                                     rhs_dilation=(2, 2),
                                     dimension_numbers=dn) + b2
    return jnp.transpose(x + r, (0, 3, 1, 2))


if __name__ == "__main__":
    N, C, H, W = 2, 64, 16, 16                     # module default: 64 channels

    key = jax.random.PRNGKey(0)
    k_x, k_p = jax.random.split(key)
    x = jax.random.normal(k_x, (N, C, H, W), jnp.float32)      # NCHW, like PyTorch
    params = init_resblock_crd_params(k_p, channels=C)

    fwd = jax.jit(lambda x: resblock_crd_forward(x, params))
    out = fwd(x)
    jax.block_until_ready(out)
    assert out.shape == (N, C, H, W), out.shape

    # bf16 matmul operands / f32 accumulation & epilogue vs. all-f32 reference.
    ref = resblock_crd_reference(x, params)
    err = float(jnp.max(jnp.abs(out - ref)))
    assert bool(jnp.allclose(out, ref, atol=2e-2, rtol=2e-2)), err
    print("KERNEL_OK")
</pallas_src>

<mosaic_0001>
module attributes {stable_mosaic.version = 11 : i64} {
  func.func @_resblock_crd_kernel(%arg0: i32, %arg1: memref<1x16x16x64xf32, #tpu.memory_space<vmem>>, %arg2: memref<576x64xbf16, #tpu.memory_space<vmem>>, %arg3: memref<1x64xf32, #tpu.memory_space<vmem>>, %arg4: memref<576x64xbf16, #tpu.memory_space<vmem>>, %arg5: memref<1x64xf32, #tpu.memory_space<vmem>>, %arg6: memref<1x16x16x64xf32, #tpu.memory_space<vmem>>, %arg7: memref<18x18x64xf32, #tpu.memory_space<vmem>>, %arg8: memref<20x20x64xf32, #tpu.memory_space<vmem>>) attributes {dimension_semantics = [#tpu.dimension_semantics<parallel>], iteration_bounds = array<i64: 2>, scalar_prefetch = 0 : i64, scratch_operands = 2 : i64, tpu.core_type = #tpu.core_type<tc>, window_params = [{transform_indices = @transform_0, window_bounds = array<i64: 1, 16, 16, 64>}, {pipeline_mode = #tpu.pipeline_mode<synchronous>, transform_indices = @transform_1, window_bounds = array<i64: 576, 64>}, {pipeline_mode = #tpu.pipeline_mode<synchronous>, transform_indices = @transform_2, window_bounds = array<i64: 1, 64>}, {pipeline_mode = #tpu.pipeline_mode<synchronous>, transform_indices = @transform_3, window_bounds = array<i64: 576, 64>}, {pipeline_mode = #tpu.pipeline_mode<synchronous>, transform_indices = @transform_4, window_bounds = array<i64: 1, 64>}, {transform_indices = @transform_5, window_bounds = array<i64: 1, 16, 16, 64>}]} {
    %cst = arith.constant 0.000000e+00 : f32
    %0 = vector.broadcast %cst : f32 to vector<1x18x64xf32>
    %c0 = arith.constant 0 : index
    %c0_0 = arith.constant 0 : index
    %c0_1 = arith.constant 0 : index
    %1 = vector.load %arg7[%c0, %c0_0, %c0_1] : memref<18x18x64xf32, #tpu.memory_space<vmem>>, vector<1x18x64xf32>
    tpu.vector_store %arg7[%c0, %c0_0, %c0_1], %0 {strides = array<i32>} : memref<18x18x64xf32, #tpu.memory_space<vmem>>, vector<1x18x64xf32>,
    %cst_2 = arith.constant 0.000000e+00 : f32
    %2 = vector.broadcast %cst_2 : f32 to vector<1x18x64xf32>
    %c17 = arith.constant 17 : index
    %c0_3 = arith.constant 0 : index
    %c0_4 = arith.constant 0 : index
    %3 = vector.load %arg7[%c17, %c0_3, %c0_4] : memref<18x18x64xf32, #tpu.memory_space<vmem>>, vector<1x18x64xf32>
    tpu.vector_store %arg7[%c17, %c0_3, %c0_4], %2 {strides = array<i32>} : memref<18x18x64xf32, #tpu.memory_space<vmem>>, vector<1x18x64xf32>,
    %cst_5 = arith.constant 0.000000e+00 : f32
    %4 = vector.broadcast %cst_5 : f32 to vector<16x1x64xf32>
    %c1 = arith.constant 1 : index
    %c0_6 = arith.constant 0 : index
    %c0_7 = arith.constant 0 : index
    %5 = vector.load %arg7[%c1, %c0_6, %c0_7] : memref<18x18x64xf32, #tpu.memory_space<vmem>>, vector<16x1x64xf32>
    tpu.vector_store %arg7[%c1, %c0_6, %c0_7], %4 {strides = array<i32>} : memref<18x18x64xf32, #tpu.memory_space<vmem>>, vector<16x1x64xf32>,
    %cst_8 = arith.constant 0.000000e+00 : f32
    %6 = vector.broadcast %cst_8 : f32 to vector<16x1x64xf32>
    %c1_9 = arith.constant 1 : index
    %c17_10 = arith.constant 17 : index
    %c0_11 = arith.constant 0 : index
    %7 = vector.load %arg7[%c1_9, %c17_10, %c0_11] : memref<18x18x64xf32, #tpu.memory_space<vmem>>, vector<16x1x64xf32>
    tpu.vector_store %arg7[%c1_9, %c17_10, %c0_11], %6 {strides = array<i32>} : memref<18x18x64xf32, #tpu.memory_space<vmem>>, vector<16x1x64xf32>,
    %cst_12 = arith.constant 0.000000e+00 : f32
    %8 = vector.broadcast %cst_12 : f32 to vector<2x20x64xf32>
    %c0_13 = arith.constant 0 : index
    %c0_14 = arith.constant 0 : index
    %c0_15 = arith.constant 0 : index
    %9 = vector.load %arg8[%c0_13, %c0_14, %c0_15] : memref<20x20x64xf32, #tpu.memory_space<vmem>>, vector<2x20x64xf32>
    tpu.vector_store %arg8[%c0_13, %c0_14, %c0_15], %8 {strides = array<i32>} : memref<20x20x64xf32, #tpu.memory_space<vmem>>, vector<2x20x64xf32>,
    %cst_16 = arith.constant 0.000000e+00 : f32
    %10 = vector.broadcast %cst_16 : f32 to vector<2x20x64xf32>
    %c18 = arith.constant 18 : index
    %c0_17 = arith.constant 0 : index
    %c0_18 = arith.constant 0 : index
    %11 = vector.load %arg8[%c18, %c0_17, %c0_18] : memref<20x20x64xf32, #tpu.memory_space<vmem>>, vector<2x20x64xf32>
    tpu.vector_store %arg8[%c18, %c0_17, %c0_18], %10 {strides = array<i32>} : memref<20x20x64xf32, #tpu.memory_space<vmem>>, vector<2x20x64xf32>,
    %cst_19 = arith.constant 0.000000e+00 : f32
    %12 = vector.broadcast %cst_19 : f32 to vector<16x2x64xf32>
    %c2 = arith.constant 2 : index
    %c0_20 = arith.constant 0 : index
    %c0_21 = arith.constant 0 : index
    %13 = vector.load %arg8[%c2, %c0_20, %c0_21] : memref<20x20x64xf32, #tpu.memory_space<vmem>>, vector<16x2x64xf32>
    tpu.vector_store %arg8[%c2, %c0_20, %c0_21], %12 {strides = array<i32>} : memref<20x20x64xf32, #tpu.memory_space<vmem>>, vector<16x2x64xf32>,
    %cst_22 = arith.constant 0.000000e+00 : f32
    %14 = vector.broadcast %cst_22 : f32 to vector<16x2x64xf32>
    %c2_23 = arith.constant 2 : index
    %c18_24 = arith.constant 18 : index
    %c0_25 = arith.constant 0 : index
    %15 = vector.load %arg8[%c2_23, %c18_24, %c0_25] : memref<20x20x64xf32, #tpu.memory_space<vmem>>, vector<16x2x64xf32>
    tpu.vector_store %arg8[%c2_23, %c18_24, %c0_25], %14 {strides = array<i32>} : memref<20x20x64xf32, #tpu.memory_space<vmem>>, vector<16x2x64xf32>,
    %c0_26 = arith.constant 0 : index
    %c0_27 = arith.constant 0 : index
    %c0_28 = arith.constant 0 : index
    %c0_29 = arith.constant 0 : index
    %16 = vector.load %arg1[%c0_26, %c0_27, %c0_28, %c0_29] : memref<1x16x16x64xf32, #tpu.memory_space<vmem>>, vector<1x16x16x64xf32>
    %17 = vector.shape_cast %16 : vector<1x16x16x64xf32> to vector<16x16x64xf32>
    %c1_30 = arith.constant 1 : index
    %c1_31 = arith.constant 1 : index
    %c0_32 = arith.constant 0 : index
    %18 = vector.load %arg7[%c1_30, %c1_31, %c0_32] : memref<18x18x64xf32, #tpu.memory_space<vmem>>, vector<16x16x64xf32>
    tpu.vector_store %arg7[%c1_30, %c1_31, %c0_32], %17 {strides = array<i32>} : memref<18x18x64xf32, #tpu.memory_space<vmem>>, vector<16x16x64xf32>,
    %c0_33 = arith.constant 0 : index
    %c0_34 = arith.constant 0 : index
    %c0_35 = arith.constant 0 : index
    %19 = vector.load %arg7[%c0_33, %c0_34, %c0_35] : memref<18x18x64xf32, #tpu.memory_space<vmem>>, vector<16x16x64xf32>
    %20 = vector.shape_cast %19 : vector<16x16x64xf32> to vector<256x64xf32>
    %21 = arith.truncf %20 : vector<256x64xf32> to vector<256x64xbf16>
    %c0_36 = arith.constant 0 : index
    %c1_37 = arith.constant 1 : index
    %c0_38 = arith.constant 0 : index
    %22 = vector.load %arg7[%c0_36, %c1_37, %c0_38] : memref<18x18x64xf32, #tpu.memory_space<vmem>>, vector<16x16x64xf32>
    %23 = vector.shape_cast %22 : vector<16x16x64xf32> to vector<256x64xf32>
    %24 = arith.truncf %23 : vector<256x64xf32> to vector<256x64xbf16>
    %c0_39 = arith.constant 0 : index
    %c2_40 = arith.constant 2 : index
    %c0_41 = arith.constant 0 : index
    %25 = vector.load %arg7[%c0_39, %c2_40, %c0_41] : memref<18x18x64xf32, #tpu.memory_space<vmem>>, vector<16x16x64xf32>
    %26 = vector.shape_cast %25 : vector<16x16x64xf32> to vector<256x64xf32>
    %27 = arith.truncf %26 : vector<256x64xf32> to vector<256x64xbf16>
    %c1_42 = arith.constant 1 : index
    %c0_43 = arith.constant 0 : index
    %c0_44 = arith.constant 0 : index
    %28 = vector.load %arg7[%c1_42, %c0_43, %c0_44] : memref<18x18x64xf32, #tpu.memory_space<vmem>>, vector<16x16x64xf32>
    %29 = vector.shape_cast %28 : vector<16x16x64xf32> to vector<256x64xf32>
    %30 = arith.truncf %29 : vector<256x64xf32> to vector<256x64xbf16>
    %c1_45 = arith.constant 1 : index
    %c1_46 = arith.constant 1 : index
    %c0_47 = arith.constant 0 : index
    %31 = vector.load %arg7[%c1_45, %c1_46, %c0_47] : memref<18x18x64xf32, #tpu.memory_space<vmem>>, vector<16x16x64xf32>
    %32 = vector.shape_cast %31 : vector<16x16x64xf32> to vector<256x64xf32>
    %33 = arith.truncf %32 : vector<256x64xf32> to vector<256x64xbf16>
    %c1_48 = arith.constant 1 : index
    %c2_49 = arith.constant 2 : index
    %c0_50 = arith.constant 0 : index
    %34 = vector.load %arg7[%c1_48, %c2_49, %c0_50] : memref<18x18x64xf32, #tpu.memory_space<vmem>>, vector<16x16x64xf32>
    %35 = vector.shape_cast %34 : vector<16x16x64xf32> to vector<256x64xf32>
    %36 = arith.truncf %35 : vector<256x64xf32> to vector<256x64xbf16>
    %c2_51 = arith.constant 2 : index
    %c0_52 = arith.constant 0 : index
    %c0_53 = arith.constant 0 : index
    %37 = vector.load %arg7[%c2_51, %c0_52, %c0_53] : memref<18x18x64xf32, #tpu.memory_space<vmem>>, vector<16x16x64xf32>
    %38 = vector.shape_cast %37 : vector<16x16x64xf32> to vector<256x64xf32>
    %39 = arith.truncf %38 : vector<256x64xf32> to vector<256x64xbf16>
    %c2_54 = arith.constant 2 : index
    %c1_55 = arith.constant 1 : index
    %c0_56 = arith.constant 0 : index
    %40 = vector.load %arg7[%c2_54, %c1_55, %c0_56] : memref<18x18x64xf32, #tpu.memory_space<vmem>>, vector<16x16x64xf32>
    %41 = vector.shape_cast %40 : vector<16x16x64xf32> to vector<256x64xf32>
    %42 = arith.truncf %41 : vector<256x64xf32> to vector<256x64xbf16>
    %c2_57 = arith.constant 2 : index
    %c2_58 = arith.constant 2 : index
    %c0_59 = arith.constant 0 : index
    %43 = vector.load %arg7[%c2_57, %c2_58, %c0_59] : memref<18x18x64xf32, #tpu.memory_space<vmem>>, vector<16x16x64xf32>
    %44 = vector.shape_cast %43 : vector<16x16x64xf32> to vector<256x64xf32>
    %45 = arith.truncf %44 : vector<256x64xf32> to vector<256x64xbf16>
    %46 = tpu.concatenate %21, %24, %27, %30, %33, %36, %39, %42, %45 in 1 : vector<256x64xbf16>, vector<256x64xbf16>, vector<256x64xbf16>, vector<256x64xbf16>, vector<256x64xbf16>, vector<256x64xbf16>, vector<256x64xbf16>, vector<256x64xbf16>, vector<256x64xbf16> -> vector<256x576xbf16>
    %c0_60 = arith.constant 0 : index
    %c0_61 = arith.constant 0 : index
    %47 = vector.load %arg2[%c0_60, %c0_61] : memref<576x64xbf16, #tpu.memory_space<vmem>>, vector<576x64xbf16>
    %cst_62 = arith.constant dense<0.000000e+00> : vector<256x64xf32>
    %48 = tpu.matmul %46, %47, %cst_62 {dimension_numbers = #tpu.dot_dimension_numbers<[1], [0], [0], [1], [0, 0, 1, 1], [], []>} : vector<256x576xbf16>, vector<576x64xbf16>, vector<256x64xf32> -> vector<256x64xf32>
    %c0_63 = arith.constant 0 : index
    %c0_64 = arith.constant 0 : index
    %49 = vector.load %arg3[%c0_63, %c0_64] : memref<1x64xf32, #tpu.memory_space<vmem>>, vector<1x64xf32>
    %50 = vector.broadcast %49 : vector<1x64xf32> to vector<256x64xf32>
    %51 = arith.addf %48, %50 : vector<256x64xf32>
    %cst_65 = arith.constant 0.000000e+00 : f32
    %52 = vector.broadcast %cst_65 : f32 to vector<256x64xf32>
    %53 = arith.maximumf %51, %52 : vector<256x64xf32>
    %54 = vector.shape_cast %53 : vector<256x64xf32> to vector<16x16x64xf32>
    %c2_66 = arith.constant 2 : index
    %c2_67 = arith.constant 2 : index
    %c0_68 = arith.constant 0 : index
    %55 = vector.load %arg8[%c2_66, %c2_67, %c0_68] : memref<20x20x64xf32, #tpu.memory_space<vmem>>, vector<16x16x64xf32>
    tpu.vector_store %arg8[%c2_66, %c2_67, %c0_68], %54 {strides = array<i32>} : memref<20x20x64xf32, #tpu.memory_space<vmem>>, vector<16x16x64xf32>,
    %c0_69 = arith.constant 0 : index
    %c0_70 = arith.constant 0 : index
    %c0_71 = arith.constant 0 : index
    %56 = vector.load %arg8[%c0_69, %c0_70, %c0_71] : memref<20x20x64xf32, #tpu.memory_space<vmem>>, vector<16x16x64xf32>
    %57 = vector.shape_cast %56 : vector<16x16x64xf32> to vector<256x64xf32>
    %58 = arith.truncf %57 : vector<256x64xf32> to vector<256x64xbf16>
    %c0_72 = arith.constant 0 : index
    %c2_73 = arith.constant 2 : index
    %c0_74 = arith.constant 0 : index
    %59 = vector.load %arg8[%c0_72, %c2_73, %c0_74] : memref<20x20x64xf32, #tpu.memory_space<vmem>>, vector<16x16x64xf32>
    %60 = vector.shape_cast %59 : vector<16x16x64xf32> to vector<256x64xf32>
    %61 = arith.truncf %60 : vector<256x64xf32> to vector<256x64xbf16>
    %c0_75 = arith.constant 0 : index
    %c4 = arith.constant 4 : index
    %c0_76 = arith.constant 0 : index
    %62 = vector.load %arg8[%c0_75, %c4, %c0_76] : memref<20x20x64xf32, #tpu.memory_space<vmem>>, vector<16x16x64xf32>
    %63 = vector.shape_cast %62 : vector<16x16x64xf32> to vector<256x64xf32>
    %64 = arith.truncf %63 : vector<256x64xf32> to vector<256x64xbf16>
    %c2_77 = arith.constant 2 : index
    %c0_78 = arith.constant 0 : index
    %c0_79 = arith.constant 0 : index
    %65 = vector.load %arg8[%c2_77, %c0_78, %c0_79] : memref<20x20x64xf32, #tpu.memory_space<vmem>>, vector<16x16x64xf32>
    %66 = vector.shape_cast %65 : vector<16x16x64xf32> to vector<256x64xf32>
    %67 = arith.truncf %66 : vector<256x64xf32> to vector<256x64xbf16>
    %c2_80 = arith.constant 2 : index
    %c2_81 = arith.constant 2 : index
    %c0_82 = arith.constant 0 : index
    %68 = vector.load %arg8[%c2_80, %c2_81, %c0_82] : memref<20x20x64xf32, #tpu.memory_space<vmem>>, vector<16x16x64xf32>
    %69 = vector.shape_cast %68 : vector<16x16x64xf32> to vector<256x64xf32>
    %70 = arith.truncf %69 : vector<256x64xf32> to vector<256x64xbf16>
    %c2_83 = arith.constant 2 : index
    %c4_84 = arith.constant 4 : index
    %c0_85 = arith.constant 0 : index
    %71 = vector.load %arg8[%c2_83, %c4_84, %c0_85] : memref<20x20x64xf32, #tpu.memory_space<vmem>>, vector<16x16x64xf32>
    %72 = vector.shape_cast %71 : vector<16x16x64xf32> to vector<256x64xf32>
    %73 = arith.truncf %72 : vector<256x64xf32> to vector<256x64xbf16>
    %c4_86 = arith.constant 4 : index
    %c0_87 = arith.constant 0 : index
    %c0_88 = arith.constant 0 : index
    %74 = vector.load %arg8[%c4_86, %c0_87, %c0_88] : memref<20x20x64xf32, #tpu.memory_space<vmem>>, vector<16x16x64xf32>
    %75 = vector.shape_cast %74 : vector<16x16x64xf32> to vector<256x64xf32>
    %76 = arith.truncf %75 : vector<256x64xf32> to vector<256x64xbf16>
    %c4_89 = arith.constant 4 : index
    %c2_90 = arith.constant 2 : index
    %c0_91 = arith.constant 0 : index
    %77 = vector.load %arg8[%c4_89, %c2_90, %c0_91] : memref<20x20x64xf32, #tpu.memory_space<vmem>>, vector<16x16x64xf32>
    %78 = vector.shape_cast %77 : vector<16x16x64xf32> to vector<256x64xf32>
    %79 = arith.truncf %78 : vector<256x64xf32> to vector<256x64xbf16>
    %c4_92 = arith.constant 4 : index
    %c4_93 = arith.constant 4 : index
    %c0_94 = arith.constant 0 : index
    %80 = vector.load %arg8[%c4_92, %c4_93, %c0_94] : memref<20x20x64xf32, #tpu.memory_space<vmem>>, vector<16x16x64xf32>
    %81 = vector.shape_cast %80 : vector<16x16x64xf32> to vector<256x64xf32>
    %82 = arith.truncf %81 : vector<256x64xf32> to vector<256x64xbf16>
    %83 = tpu.concatenate %58, %61, %64, %67, %70, %73, %76, %79, %82 in 1 : vector<256x64xbf16>, vector<256x64xbf16>, vector<256x64xbf16>, vector<256x64xbf16>, vector<256x64xbf16>, vector<256x64xbf16>, vector<256x64xbf16>, vector<256x64xbf16>, vector<256x64xbf16> -> vector<256x576xbf16>
    %c0_95 = arith.constant 0 : index
    %c0_96 = arith.constant 0 : index
    %84 = vector.load %arg4[%c0_95, %c0_96] : memref<576x64xbf16, #tpu.memory_space<vmem>>, vector<576x64xbf16>
    %cst_97 = arith.constant dense<0.000000e+00> : vector<256x64xf32>
    %85 = tpu.matmul %83, %84, %cst_97 {dimension_numbers = #tpu.dot_dimension_numbers<[1], [0], [0], [1], [0, 0, 1, 1], [], []>} : vector<256x576xbf16>, vector<576x64xbf16>, vector<256x64xf32> -> vector<256x64xf32>
    %c0_98 = arith.constant 0 : index
    %c0_99 = arith.constant 0 : index
    %86 = vector.load %arg5[%c0_98, %c0_99] : memref<1x64xf32, #tpu.memory_space<vmem>>, vector<1x64xf32>
    %87 = vector.broadcast %86 : vector<1x64xf32> to vector<256x64xf32>
    %88 = arith.addf %85, %87 : vector<256x64xf32>
    %c0_100 = arith.constant 0 : index
    %c0_101 = arith.constant 0 : index
    %c0_102 = arith.constant 0 : index
    %c0_103 = arith.constant 0 : index
    %89 = vector.load %arg1[%c0_100, %c0_101, %c0_102, %c0_103] : memref<1x16x16x64xf32, #tpu.memory_space<vmem>>, vector<1x16x16x64xf32>
    %90 = vector.shape_cast %89 : vector<1x16x16x64xf32> to vector<16x16x64xf32>
    %91 = vector.shape_cast %88 : vector<256x64xf32> to vector<16x16x64xf32>
    %92 = arith.addf %90, %91 : vector<16x16x64xf32>
    %93 = vector.shape_cast %92 : vector<16x16x64xf32> to vector<1x16x16x64xf32>
    %c0_104 = arith.constant 0 : index
    %c0_105 = arith.constant 0 : index
    %c0_106 = arith.constant 0 : index
    %c0_107 = arith.constant 0 : index
    %94 = vector.load %arg6[%c0_104, %c0_105, %c0_106, %c0_107] : memref<1x16x16x64xf32, #tpu.memory_space<vmem>>, vector<1x16x16x64xf32>
    tpu.vector_store %arg6[%c0_104, %c0_105, %c0_106, %c0_107], %93 {strides = array<i32>} : memref<1x16x16x64xf32, #tpu.memory_space<vmem>>, vector<1x16x16x64xf32>,
    return
  }
  func.func @transform_0(%arg0: i32) -> (i32, i32, i32, i32) {
    %c0_i32 = arith.constant 0 : i32
    %c0_i32_0 = arith.constant 0 : i32
    %c0_i32_1 = arith.constant 0 : i32
    %c0_i32_2 = arith.constant 0 : i32
    return %arg0, %c0_i32, %c0_i32_0, %c0_i32_1 : i32, i32, i32, i32
  }
  func.func @transform_1(%arg0: i32) -> (i32, i32) {
    %c0_i32 = arith.constant 0 : i32
    %c0_i32_0 = arith.constant 0 : i32
    %c0_i32_1 = arith.constant 0 : i32
    return %c0_i32, %c0_i32_0 : i32, i32
  }
  func.func @transform_2(%arg0: i32) -> (i32, i32) {
    %c0_i32 = arith.constant 0 : i32
    %c0_i32_0 = arith.constant 0 : i32
    %c0_i32_1 = arith.constant 0 : i32
    return %c0_i32, %c0_i32_0 : i32, i32
  }
  func.func @transform_3(%arg0: i32) -> (i32, i32) {
    %c0_i32 = arith.constant 0 : i32
    %c0_i32_0 = arith.constant 0 : i32
    %c0_i32_1 = arith.constant 0 : i32
    return %c0_i32, %c0_i32_0 : i32, i32
  }
  func.func @transform_4(%arg0: i32) -> (i32, i32) {
    %c0_i32 = arith.constant 0 : i32
    %c0_i32_0 = arith.constant 0 : i32
    %c0_i32_1 = arith.constant 0 : i32
    return %c0_i32, %c0_i32_0 : i32, i32
  }
  func.func @transform_5(%arg0: i32) -> (i32, i32, i32, i32) {
    %c0_i32 = arith.constant 0 : i32
    %c0_i32_0 = arith.constant 0 : i32
    %c0_i32_1 = arith.constant 0 : i32
    %c0_i32_2 = arith.constant 0 : i32
    return %arg0, %c0_i32, %c0_i32_0, %c0_i32_1 : i32, i32, i32, i32
  }
}

</mosaic_0001>

<llo_original>
// kernel: _lambda_.1
$region0: #{_lambda_.1}
  #allocation0 [shape = 'u32[]', space=smem, size = 0x4, offset = 0x4, fixed_abs, tag = 'smem constant byte address 0x4 - core index']
  #allocation1 [shape = 'u32[72,128]{1,0:T(1,128)}', space=vmem, size = 0x9000, scoped, tag = 'internal scratch']
  #allocation2 [shape = 'f32[18,18,64]{2,1,0:T(8,128)}', space=vmem, size = 0x36000, scoped, tag = 'scratch operand']
  #allocation3 [shape = 'f32[20,20,64]{2,1,0:T(8,128)}', space=vmem, size = 0x3c000, scoped, tag = 'scratch operand']
  %s0 = inlined_call_operand.hbm [shape: f32[2,16,16,64], index: 0, kind: input, shape index: {}]
  %s1 = inlined_call_operand.hbm [shape: bf16[576,64], index: 1, kind: input, shape index: {}]
  %s2 = inlined_call_operand.vmem [shape: f32[1,64], index: 2, kind: input, shape index: {}]
  %s3 = inlined_call_operand.hbm [shape: bf16[576,64], index: 3, kind: input, shape index: {}]
  %s4 = inlined_call_operand.hbm [shape: f32[1,64], index: 4, kind: input, shape index: {}]
  %s5 = inlined_call_operand.hbm [shape: f32[2,16,16,64], index: 5, kind: output, shape index: {}]
  %s6 = sld [smem:[#allocation0]]
  $region69: #{_lambda_.1} parent=0
    _
  %s8 = ssub.s32 1, %s6
  %s9 = scalar_select 0, %s8, %s6
  $region1: #{_lambda_.1} parent=0
    #allocation4 [shape = 'u8[262144]{0}', space=vmem, size = 0x40000, scoped, tag = 'input window, operand 0']
    #allocation5 [shape = 's32[2]{0}', space=sflag, size = 0x8, scoped, tag = 'scoped memory for _lambda_.1']
    #allocation6 [shape = 's32[2]{0}', space=sflag, size = 0x8, scoped, tag = 'scoped memory for _lambda_.1']
    #allocation7 [shape = 'u8[147456]{0}', space=vmem, size = 0x24000, scoped, tag = 'input window, operand 1, single buffered']
    #allocation8 [shape = 's32[1]{0}', space=sflag, size = 0x4, scoped, tag = 'scoped memory for _lambda_.1']
    #allocation9 [shape = 'u8[147456]{0}', space=vmem, size = 0x24000, scoped, tag = 'input window, operand 3, single buffered']
    #allocation10 [shape = 'u8[512]{0}', space=vmem, size = 0x400, scoped, tag = 'input window, operand 4, single buffered']
    #allocation11 [shape = 's32[1]{0}', space=sflag, size = 0x4, scoped, tag = 'scoped memory for _lambda_.1']
    #allocation12 [shape = 'u8[262144]{0}', space=vmem, size = 0x40000, scoped, tag = 'output window, operand 0']
    %10 = vsyncpa [#allocation5], 0
    %s11 = scalar_lea.sflag [#allocation5], 1
    %12 = vsyncpa %s11, 0
    %13 = vsyncpa [#allocation8], 0
    %14 = vsyncpa [#allocation11], 0
    %15 = vsyncpa [#allocation6], 0
    %s16 = scalar_lea.sflag [#allocation6], 1
    %17 = vsyncpa %s16, 0
    loop: start=0, step=1, limit=4
    $region2: #{_lambda_.1} parent=1 // loop_pre_header
      _
    $region3: #{_lambda_.1} parent=1 // loop_header
      %s19 = sphi 0, %s23
      %p20 = scmp.ge.s32.totalorder %s19, 4
      %s29 = sphi 0, %s31
      %s32 = sphi 0, %s29
      %s33 = sphi 0, %s32
      %s49 = sphi 0, %s33
      %s53 = sphi 0, %s53
      %s55 = sphi 0, %s53
      %s56 = sphi 0, %s55
      %s70 = sphi 0, %s56
      %s74 = sphi 0, %s74
      %s76 = sphi 0, %s74
      %s77 = sphi 0, %s76
      %s91 = sphi 0, %s77
      %s95 = sphi 0, %s95
      %s97 = sphi 0, %s95
      %s98 = sphi 0, %s97
      %s112 = sphi 0, %s98
      %s116 = sphi 0, %s116
      %s118 = sphi 0, %s116
      %s119 = sphi 0, %s118
      %s133 = sphi 0, %s119
      %s139 = sphi 0, %s141
      %s142 = sphi 0, %s139
      %s143 = sphi 0, %s142
      %s159 = sphi 0, %s143
    $region4: #{_lambda_.1} parent=1 // loop_header_branch
      %22 = sbr.rel (%p20) target = $region8
    $region5: #{_lambda_.1} parent=1 // loop_body
      %s24 = ssub.s32 %s19, 1
      %s25 = ssub.s32 %s19, 2
      %s26 = sadd.s32 %s19, 1
      %s27 = ssub.s32 %s19, %s26
      %p28 = scmp.eq.s32.totalorder %s27, 0
      %s30 = sadd.s32 %s29, 1
      %s31 = scalar_select %p28, %s29, %s30
      %p34 = pneg %p28
      %p35 = scmp.eq.s32.totalorder %s19, 1
      %p36 = por %p34, %p35
      %p37 = scmp.ne.s32.totalorder %s29, %s32
      %p38 = scmp.eq.s32.totalorder %s19, 0
      %p39 = por %p37, %p38
      %p40 = scmp.ne.s32.totalorder %s29, %s32
      %p41 = scmp.eq.s32.totalorder %s24, 1
      %p42 = por %p40, %p41
      %p43 = scmp.ne.s32.totalorder %s32, %s33
      %p44 = scmp.eq.s32.totalorder %s24, 0
      %p45 = por %p43, %p44
      %p46 = scmp.ne.s32.totalorder %s32, %s33
      %p47 = scmp.eq.s32.totalorder %s25, 1
      %p48 = por %p46, %p47
      %p50 = scmp.ne.s32.totalorder %s33, %s49
      %p51 = scmp.eq.s32.totalorder %s25, 0
      %p52 = por %p50, %p51
      %s54 = sadd.s32 %s53, 1
      %p57 = scmp.eq.s32.totalorder %s19, 1
      %p58 = scmp.ne.s32.totalorder %s53, %s55
      %p59 = scmp.eq.s32.totalorder %s19, 0
      %p60 = por %p58, %p59
      %p61 = scmp.ne.s32.totalorder %s53, %s55
      %p62 = scmp.eq.s32.totalorder %s24, 1
      %p63 = por %p61, %p62
      %p64 = scmp.ne.s32.totalorder %s55, %s56
      %p65 = scmp.eq.s32.totalorder %s24, 0
      %p66 = por %p64, %p65
      %p67 = scmp.ne.s32.totalorder %s55, %s56
      %p68 = scmp.eq.s32.totalorder %s25, 1
      %p69 = por %p67, %p68
      %p71 = scmp.ne.s32.totalorder %s56, %s70
      %p72 = scmp.eq.s32.totalorder %s25, 0
      %p73 = por %p71, %p72
      %s75 = sadd.s32 %s74, 1
      %p78 = scmp.eq.s32.totalorder %s19, 1
      %p79 = scmp.ne.s32.totalorder %s74, %s76
      %p80 = scmp.eq.s32.totalorder %s19, 0
      %p81 = por %p79, %p80
      %p82 = scmp.ne.s32.totalorder %s74, %s76
      %p83 = scmp.eq.s32.totalorder %s24, 1
      %p84 = por %p82, %p83
      %p85 = scmp.ne.s32.totalorder %s76, %s77
      %p86 = scmp.eq.s32.totalorder %s24, 0
      %p87 = por %p85, %p86
      %p88 = scmp.ne.s32.totalorder %s76, %s77
      %p89 = scmp.eq.s32.totalorder %s25, 1
      %p90 = por %p88, %p89
      %p92 = scmp.ne.s32.totalorder %s77, %s91
      %p93 = scmp.eq.s32.totalorder %s25, 0
      %p94 = por %p92, %p93
      %s96 = sadd.s32 %s95, 1
      %p99 = scmp.eq.s32.totalorder %s19, 1
      %p100 = scmp.ne.s32.totalorder %s95, %s97
      %p101 = scmp.eq.s32.totalorder %s19, 0
      %p102 = por %p100, %p101
      %p103 = scmp.ne.s32.totalorder %s95, %s97
      %p104 = scmp.eq.s32.totalorder %s24, 1
      %p105 = por %p103, %p104
      %p106 = scmp.ne.s32.totalorder %s97, %s98
      %p107 = scmp.eq.s32.totalorder %s24, 0
      %p108 = por %p106, %p107
      %p109 = scmp.ne.s32.totalorder %s97, %s98
      %p110 = scmp.eq.s32.totalorder %s25, 1
      %p111 = por %p109, %p110
      %p113 = scmp.ne.s32.totalorder %s98, %s112
      %p114 = scmp.eq.s32.totalorder %s25, 0
      %p115 = por %p113, %p114
      %s117 = sadd.s32 %s116, 1
      %p120 = scmp.eq.s32.totalorder %s19, 1
      %p121 = scmp.ne.s32.totalorder %s116, %s118
      %p122 = scmp.eq.s32.totalorder %s19, 0
      %p123 = por %p121, %p122
      %p124 = scmp.ne.s32.totalorder %s116, %s118
      %p125 = scmp.eq.s32.totalorder %s24, 1
      %p126 = por %p124, %p125
      %p127 = scmp.ne.s32.totalorder %s118, %s119
      %p128 = scmp.eq.s32.totalorder %s24, 0
      %p129 = por %p127, %p128
      %p130 = scmp.ne.s32.totalorder %s118, %s119
      %p131 = scmp.eq.s32.totalorder %s25, 1
      %p132 = por %p130, %p131
      %p134 = scmp.ne.s32.totalorder %s119, %s133
      %p135 = scmp.eq.s32.totalorder %s25, 0
      %p136 = por %p134, %p135
      %s137 = ssub.s32 %s19, %s26
      %p138 = scmp.eq.s32.totalorder %s137, 0
      %s140 = sadd.s32 %s139, 1
      %s141 = scalar_select %p138, %s139, %s140
      %p144 = pneg %p138
      %p145 = scmp.eq.s32.totalorder %s19, 1
      %p146 = por %p144, %p145
      %p147 = scmp.ne.s32.totalorder %s139, %s142
      %p148 = scmp.eq.s32.totalorder %s19, 0
      %p149 = por %p147, %p148
      %p150 = scmp.ne.s32.totalorder %s139, %s142
      %p151 = scmp.eq.s32.totalorder %s24, 1
      %p152 = por %p150, %p151
      %p153 = scmp.ne.s32.totalorder %s142, %s143
      %p154 = scmp.eq.s32.totalorder %s24, 0
      %p155 = por %p153, %p154
      %p156 = scmp.ne.s32.totalorder %s142, %s143
      %p157 = scmp.eq.s32.totalorder %s25, 1
      %p158 = por %p156, %p157
      %p160 = scmp.ne.s32.totalorder %s143, %s159
      %p161 = scmp.eq.s32.totalorder %s25, 0
      %p162 = por %p160, %p161
      %p163 = scmp.le.s32.totalorder 1, %s19
      %p164 = scmp.lt.s32.totalorder %s19, 3
      %p165 = pnand %p163, %p164
      %p166 = pneg %p165
      // Predicated region
      $region9: #{_lambda_.1} parent=5 // pred_check
        _
      $region10: #{_lambda_.1} parent=5 // pred_check_branch
        %168 = sbr.rel (%p165) target = $region12
      $region11: #{_lambda_.1} parent=5 // pred_region
        %s169 = ssub.s32 %s19, 1
        // Predicated region
        $region13: #{_lambda_.1} parent=11 // pred_check
          %p170 = pneg %p66
        $region14: #{_lambda_.1} parent=11 // pred_check_branch
          %172 = sbr.rel (%p170) target = $region16
        $region15: #{_lambda_.1} parent=11 // pred_region
          %174 = vsyncadd [#allocation8], 0
          %s175 = sshll.u32 %s1, 4
          %s176 = int_to_ptr.hbm [resolvable:$true] %s175
          %s177 = sshll.u32 [#allocation7], 4
          %s178 = int_to_ptr.vmem [resolvable:$true] %s177
          %183 = dma.hbm_to_vmem [thread:$0]  %s176, 4608, %s178, [#allocation8], 64, 64, 4
        $region16: #{_lambda_.1} parent=11 // pred_fallthru
          _
        // Predicated region
        $region17: #{_lambda_.1} parent=11 // pred_check
          %p184 = pneg %p87
        $region18: #{_lambda_.1} parent=11 // pred_check_branch
          %186 = sbr.rel (%p184) target = $region20
        $region19: #{_lambda_.1} parent=11 // pred_region
          _
        $region20: #{_lambda_.1} parent=11 // pred_fallthru
          _
        // Predicated region
        $region21: #{_lambda_.1} parent=11 // pred_check
          %p187 = pneg %p108
        $region22: #{_lambda_.1} parent=11 // pred_check_branch
          %189 = sbr.rel (%p187) target = $region24
        $region23: #{_lambda_.1} parent=11 // pred_region
          %191 = vsyncadd [#allocation8], 0
          %s192 = sshll.u32 %s3, 4
          %s193 = int_to_ptr.hbm [resolvable:$true] %s192
          %s194 = sshll.u32 [#allocation9], 4
          %s195 = int_to_ptr.vmem [resolvable:$true] %s194
          %200 = dma.hbm_to_vmem [thread:$0]  %s193, 4608, %s195, [#allocation8], 64, 64, 4
        $region24: #{_lambda_.1} parent=11 // pred_fallthru
          _
        // Predicated region
        $region25: #{_lambda_.1} parent=11 // pred_check
          %p201 = pneg %p129
        $region26: #{_lambda_.1} parent=11 // pred_check_branch
          %203 = sbr.rel (%p201) target = $region28
        $region27: #{_lambda_.1} parent=11 // pred_region
          %205 = vsyncadd [#allocation11], 0
          %s207 = sshll.u32 %s4, 4
          %s208 = int_to_ptr.hbm [resolvable:$true] %s207
          %s209 = sshll.u32 [#allocation10], 4
          %s210 = int_to_ptr.vmem [resolvable:$true] %s209
          %212 = dma.hbm_to_vmem [thread:$0]  %s208, 16, %s210, [#allocation11]
        $region28: #{_lambda_.1} parent=11 // pred_fallthru
          _
      $region12: #{_lambda_.1} parent=5 // pred_fallthru
        _
      %p213 = scmp.lt.s32.totalorder %s19, 2
      // Predicated region
      $region29: #{_lambda_.1} parent=5 // pred_check
        %p214 = pneg %p213
      $region30: #{_lambda_.1} parent=5 // pred_check_branch
        %216 = sbr.rel (%p214) target = $region32
      $region31: #{_lambda_.1} parent=5 // pred_region
        // Predicated region
        $region33: #{_lambda_.1} parent=31 // pred_check
          %p217 = pneg %p39
        $region34: #{_lambda_.1} parent=31 // pred_check_branch
          %219 = sbr.rel (%p217) target = $region36
        $region35: #{_lambda_.1} parent=31 // pred_region
          %s220 = sand.u32 %s29, 1
          %s221 = scalar_lea.sflag [#allocation5], %s220
          %s222 = sand.u32 %s29, 1
          %s223 = smul.addr %s222, 256
          %s224 = scalar_lea.vmem [#allocation4], %s223
          %226 = vsyncadd %s221, 0
          %s227 = smul.addr %s19, 32
          %s228 = smul.addr %s227, 8
          %s229 = scalar_lea.hbm %s0, %s228
          %s230 = sshll.u32 %s229, 4
          %s231 = int_to_ptr.hbm [resolvable:$true] %s230
          %s232 = sshll.u32 %s224, 4
          %s233 = int_to_ptr.vmem [resolvable:$true] %s232
          %238 = dma.hbm_to_vmem [thread:$0]  %s231, 4096, %s233, %s221, 128, 128, 8
        $region36: #{_lambda_.1} parent=31 // pred_fallthru
          _
      $region32: #{_lambda_.1} parent=5 // pred_fallthru
        _
      %p239 = scmp.le.s32.totalorder 1, %s19
      %p240 = scmp.lt.s32.totalorder %s19, 3
      %p241 = pnand %p239, %p240
      %p242 = pneg %p241
      // Predicated region
      $region37: #{_lambda_.1} parent=5 // pred_check
        _
      $region38: #{_lambda_.1} parent=5 // pred_check_branch
        %244 = sbr.rel (%p241) target = $region40
      $region39: #{_lambda_.1} parent=5 // pred_region
        %s245 = ssub.s32 %s19, 1
        %s246 = sand.u32 %s32, 1
        %s247 = scalar_lea.sflag [#allocation5], %s246
        %s248 = sand.u32 %s32, 1
        %s249 = smul.addr %s248, 256
        %s250 = scalar_lea.vmem [#allocation4], %s249
        // Predicated region
        $region41: #{_lambda_.1} parent=39 // pred_check
          %p251 = pneg %p45
        $region42: #{_lambda_.1} parent=39 // pred_check_branch
          %253 = sbr.rel (%p251) target = $region44
        $region43: #{_lambda_.1} parent=39 // pred_region
          %255 = dma.done %s247, 4096
        $region44: #{_lambda_.1} parent=39 // pred_fallthru
          _
        // Predicated region
        $region45: #{_lambda_.1} parent=39 // pred_check
          %p256 = pneg %p66
        $region46: #{_lambda_.1} parent=39 // pred_check_branch
          %258 = sbr.rel (%p256) target = $region48
        $region47: #{_lambda_.1} parent=39 // pred_region
          %260 = dma.done [#allocation8], 4608
        $region48: #{_lambda_.1} parent=39 // pred_fallthru
          _
        // Predicated region
        $region49: #{_lambda_.1} parent=39 // pred_check
          %p261 = pneg %p108
        $region50: #{_lambda_.1} parent=39 // pred_check_branch
          %263 = sbr.rel (%p261) target = $region52
        $region51: #{_lambda_.1} parent=39 // pred_region
          %265 = dma.done [#allocation8], 4608
        $region52: #{_lambda_.1} parent=39 // pred_fallthru
          _
        // Predicated region
        $region53: #{_lambda_.1} parent=39 // pred_check
          %p266 = pneg %p129
        $region54: #{_lambda_.1} parent=39 // pred_check_branch
          %268 = sbr.rel (%p266) target = $region56
        $region55: #{_lambda_.1} parent=39 // pred_region
          %270 = dma.done [#allocation11], 16
        $region56: #{_lambda_.1} parent=39 // pred_fallthru
          _
        %s271 = sand.u32 %s32, 1
        %s272 = scalar_lea.sflag [#allocation5], %s271
        %s273 = sand.u32 %s32, 1
        %s274 = smul.addr %s273, 256
        %s275 = scalar_lea.vmem [#allocation4], %s274
        %p276 = pneg %p45
        %p277 = pneg %p42
        %p278 = pneg %p66
        %p279 = pneg %p63
        %p280 = pneg %p87
        %p281 = pneg %p84
        %p282 = pneg %p108
        %p283 = pneg %p105
        %p284 = pneg %p129
        %p285 = pneg %p126
        %p286 = pneg %p155
        %p287 = pneg %p152
        %s288 = sand.u32 %s142, 1
        %s289 = scalar_lea.sflag [#allocation6], %s288
        %s290 = sand.u32 %s142, 1
        %s291 = smul.addr %s290, 256
        %s292 = scalar_lea.vmem [#allocation12], %s291
        %vm294 = vcmask 523264
        %295 = vst.msk [vmem:[#allocation2] sm:$0xff] %vm294, 0.0
        %296 = vst.msk [vmem:[#allocation2 + $0x8] sm:$0xff] %vm294, 0.0
        %vm297 = vcmask 517120
        %298 = vst.msk [vmem:[#allocation2 + $0x10] sm:$0x3] %vm297, 0.0
        %s299 = scalar_lea.vmem [#allocation2], 408
        %300 = vst.msk [vmem:[%s299] sm:$0xff] %vm294, 0.0
        %301 = vst.msk [vmem:[%s299 + $0x8] sm:$0xff] %vm294, 0.0
        %302 = vst.msk [vmem:[%s299 + $0x10] sm:$0x3] %vm297, 0.0
        %s303 = scalar_lea.vmem [#allocation2], 24
        %vm304 = vcmask 516096
        %305 = vst.msk [vmem:[%s303] sm:$0x1] %vm304, 0.0
        %306 = vst.msk [vmem:[%s303 + $0x18] sm:$0x1] %vm304, 0.0
        %307 = vst.msk [vmem:[%s303 + $0x30] sm:$0x1] %vm304, 0.0
        %308 = vst.msk [vmem:[%s303 + $0x48] sm:$0x1] %vm304, 0.0
        %309 = vst.msk [vmem:[%s303 + $0x60] sm:$0x1] %vm304, 0.0
        %310 = vst.msk [vmem:[%s303 + $0x78] sm:$0x1] %vm304, 0.0
        %311 = vst.msk [vmem:[%s303 + $0x90] sm:$0x1] %vm304, 0.0
        %312 = vst.msk [vmem:[%s303 + $0xa8] sm:$0x1] %vm304, 0.0
        %313 = vst.msk [vmem:[%s303 + $0xc0] sm:$0x1] %vm304, 0.0
        %314 = vst.msk [vmem:[%s303 + $0xd8] sm:$0x1] %vm304, 0.0
        %315 = vst.msk [vmem:[%s303 + $0xf0] sm:$0x1] %vm304, 0.0
        %316 = vst.msk [vmem:[%s303 + $0x108] sm:$0x1] %vm304, 0.0
        %317 = vst.msk [vmem:[%s303 + $0x120] sm:$0x1] %vm304, 0.0
        %318 = vst.msk [vmem:[%s303 + $0x138] sm:$0x1] %vm304, 0.0
        %319 = vst.msk [vmem:[%s303 + $0x150] sm:$0x1] %vm304, 0.0
        %320 = vst.msk [vmem:[%s303 + $0x168] sm:$0x1] %vm304, 0.0
        %321 = vst.msk [vmem:[%s303 + $0x11] sm:$0x1] %vm304, 0.0
        %322 = vst.msk [vmem:[%s303 + $0x29] sm:$0x1] %vm304, 0.0
        %323 = vst.msk [vmem:[%s303 + $0x41] sm:$0x1] %vm304, 0.0
        %324 = vst.msk [vmem:[%s303 + $0x59] sm:$0x1] %vm304, 0.0
        %325 = vst.msk [vmem:[%s303 + $0x71] sm:$0x1] %vm304, 0.0
        %326 = vst.msk [vmem:[%s303 + $0x89] sm:$0x1] %vm304, 0.0
        %327 = vst.msk [vmem:[%s303 + $0xa1] sm:$0x1] %vm304, 0.0
        %328 = vst.msk [vmem:[%s303 + $0xb9] sm:$0x1] %vm304, 0.0
        %329 = vst.msk [vmem:[%s303 + $0xd1] sm:$0x1] %vm304, 0.0
        %330 = vst.msk [vmem:[%s303 + $0xe9] sm:$0x1] %vm304, 0.0
        %331 = vst.msk [vmem:[%s303 + $0x101] sm:$0x1] %vm304, 0.0
        %332 = vst.msk [vmem:[%s303 + $0x119] sm:$0x1] %vm304, 0.0
        %333 = vst.msk [vmem:[%s303 + $0x131] sm:$0x1] %vm304, 0.0
        %334 = vst.msk [vmem:[%s303 + $0x149] sm:$0x1] %vm304, 0.0
        %335 = vst.msk [vmem:[%s303 + $0x161] sm:$0x1] %vm304, 0.0
        %336 = vst.msk [vmem:[%s303 + $0x179] sm:$0x1] %vm304, 0.0
        %337 = vst.msk [vmem:[#allocation3] sm:$0xff] %vm294, 0.0
        %338 = vst.msk [vmem:[#allocation3 + $0x8] sm:$0xff] %vm294, 0.0
        %vm339 = vcmask 519168
        %340 = vst.msk [vmem:[#allocation3 + $0x10] sm:$0xf] %vm339, 0.0
        %341 = vst.msk [vmem:[#allocation3 + $0x18] sm:$0xff] %vm294, 0.0
        %342 = vst.msk [vmem:[#allocation3 + $0x20] sm:$0xff] %vm294, 0.0
        %343 = vst.msk [vmem:[#allocation3 + $0x28] sm:$0xf] %vm339, 0.0
        %s344 = scalar_lea.vmem [#allocation3], 432
        %345 = vst.msk [vmem:[%s344] sm:$0xff] %vm294, 0.0
        %346 = vst.msk [vmem:[%s344 + $0x8] sm:$0xff] %vm294, 0.0
        %347 = vst.msk [vmem:[%s344 + $0x10] sm:$0xf] %vm339, 0.0
        %348 = vst.msk [vmem:[%s344 + $0x18] sm:$0xff] %vm294, 0.0
        %349 = vst.msk [vmem:[%s344 + $0x20] sm:$0xff] %vm294, 0.0
        %350 = vst.msk [vmem:[%s344 + $0x28] sm:$0xf] %vm339, 0.0
        %s351 = scalar_lea.vmem [#allocation3], 48
        %352 = vst.msk [vmem:[%s351] sm:$0x3] %vm297, 0.0
        %353 = vst.msk [vmem:[%s351 + $0x18] sm:$0x3] %vm297, 0.0
        %354 = vst.msk [vmem:[%s351 + $0x30] sm:$0x3] %vm297, 0.0
        %355 = vst.msk [vmem:[%s351 + $0x48] sm:$0x3] %vm297, 0.0
        %356 = vst.msk [vmem:[%s351 + $0x60] sm:$0x3] %vm297, 0.0
        %357 = vst.msk [vmem:[%s351 + $0x78] sm:$0x3] %vm297, 0.0
        %358 = vst.msk [vmem:[%s351 + $0x90] sm:$0x3] %vm297, 0.0
        %359 = vst.msk [vmem:[%s351 + $0xa8] sm:$0x3] %vm297, 0.0
        %360 = vst.msk [vmem:[%s351 + $0xc0] sm:$0x3] %vm297, 0.0
        %361 = vst.msk [vmem:[%s351 + $0xd8] sm:$0x3] %vm297, 0.0
        %362 = vst.msk [vmem:[%s351 + $0xf0] sm:$0x3] %vm297, 0.0
        %363 = vst.msk [vmem:[%s351 + $0x108] sm:$0x3] %vm297, 0.0
        %364 = vst.msk [vmem:[%s351 + $0x120] sm:$0x3] %vm297, 0.0
        %365 = vst.msk [vmem:[%s351 + $0x138] sm:$0x3] %vm297, 0.0
        %366 = vst.msk [vmem:[%s351 + $0x150] sm:$0x3] %vm297, 0.0
        %367 = vst.msk [vmem:[%s351 + $0x168] sm:$0x3] %vm297, 0.0
        %368 = vst.msk [vmem:[%s351 + $0x12] sm:$0x3] %vm297, 0.0
        %369 = vst.msk [vmem:[%s351 + $0x2a] sm:$0x3] %vm297, 0.0
        %370 = vst.msk [vmem:[%s351 + $0x42] sm:$0x3] %vm297, 0.0
        %371 = vst.msk [vmem:[%s351 + $0x5a] sm:$0x3] %vm297, 0.0
        %372 = vst.msk [vmem:[%s351 + $0x72] sm:$0x3] %vm297, 0.0
        %373 = vst.msk [vmem:[%s351 + $0x8a] sm:$0x3] %vm297, 0.0
        %374 = vst.msk [vmem:[%s351 + $0xa2] sm:$0x3] %vm297, 0.0
        %375 = vst.msk [vmem:[%s351 + $0xba] sm:$0x3] %vm297, 0.0
        %376 = vst.msk [vmem:[%s351 + $0xd2] sm:$0x3] %vm297, 0.0
        %377 = vst.msk [vmem:[%s351 + $0xea] sm:$0x3] %vm297, 0.0
        %378 = vst.msk [vmem:[%s351 + $0x102] sm:$0x3] %vm297, 0.0
        %379 = vst.msk [vmem:[%s351 + $0x11a] sm:$0x3] %vm297, 0.0
        %380 = vst.msk [vmem:[%s351 + $0x132] sm:$0x3] %vm297, 0.0
        %381 = vst.msk [vmem:[%s351 + $0x14a] sm:$0x3] %vm297, 0.0
        %382 = vst.msk [vmem:[%s351 + $0x162] sm:$0x3] %vm297, 0.0
        %383 = vst.msk [vmem:[%s351 + $0x17a] sm:$0x3] %vm297, 0.0
        %v384 = vld [vmem:[%s250] sm:$0xff]
        %v385 = vld [vmem:[%s250 + $0x8] sm:$0xff]
        %v386 = vld [vmem:[%s250 + $0x10] sm:$0xff]
        %v387 = vld [vmem:[%s250 + $0x18] sm:$0xff]
        %v388 = vld [vmem:[%s250 + $0x20] sm:$0xff]
        %v389 = vld [vmem:[%s250 + $0x28] sm:$0xff]
        %v390 = vld [vmem:[%s250 + $0x30] sm:$0xff]
        %v391 = vld [vmem:[%s250 + $0x38] sm:$0xff]
        %v392 = vld [vmem:[%s250 + $0x40] sm:$0xff]
        %v393 = vld [vmem:[%s250 + $0x48] sm:$0xff]
        %v394 = vld [vmem:[%s250 + $0x50] sm:$0xff]
        %v395 = vld [vmem:[%s250 + $0x58] sm:$0xff]
        %v396 = vld [vmem:[%s250 + $0x60] sm:$0xff]
        %v397 = vld [vmem:[%s250 + $0x68] sm:$0xff]
        %v398 = vld [vmem:[%s250 + $0x70] sm:$0xff]
        %v399 = vld [vmem:[%s250 + $0x78] sm:$0xff]
        %v400 = vld [vmem:[%s250 + $0x80] sm:$0xff]
        %v401 = vld [vmem:[%s250 + $0x88] sm:$0xff]
        %v402 = vld [vmem:[%s250 + $0x90] sm:$0xff]
        %v403 = vld [vmem:[%s250 + $0x98] sm:$0xff]
        %v404 = vld [vmem:[%s250 + $0xa0] sm:$0xff]
        %v405 = vld [vmem:[%s250 + $0xa8] sm:$0xff]
        %v406 = vld [vmem:[%s250 + $0xb0] sm:$0xff]
        %v407 = vld [vmem:[%s250 + $0xb8] sm:$0xff]
        %v408 = vld [vmem:[%s250 + $0xc0] sm:$0xff]
        %v409 = vld [vmem:[%s250 + $0xc8] sm:$0xff]
        %v410 = vld [vmem:[%s250 + $0xd0] sm:$0xff]
        %v411 = vld [vmem:[%s250 + $0xd8] sm:$0xff]
        %v412 = vld [vmem:[%s250 + $0xe0] sm:$0xff]
        %v413 = vld [vmem:[%s250 + $0xe8] sm:$0xff]
        %v414 = vld [vmem:[%s250 + $0xf0] sm:$0xff]
        %v415 = vld [vmem:[%s250 + $0xf8] sm:$0xff]
        %416 = vst.msk [vmem:[%s303 + $0x1] sm:$0xff] %vm294, %v384
        %417 = vst.msk [vmem:[%s303 + $0x9] sm:$0xff] %vm294, %v385
        %418 = vst.msk [vmem:[%s303 + $0x19] sm:$0xff] %vm294, %v386
        %419 = vst.msk [vmem:[%s303 + $0x21] sm:$0xff] %vm294, %v387
        %420 = vst.msk [vmem:[%s303 + $0x31] sm:$0xff] %vm294, %v388
        %421 = vst.msk [vmem:[%s303 + $0x39] sm:$0xff] %vm294, %v389
        %422 = vst.msk [vmem:[%s303 + $0x49] sm:$0xff] %vm294, %v390
        %423 = vst.msk [vmem:[%s303 + $0x51] sm:$0xff] %vm294, %v391
        %424 = vst.msk [vmem:[%s303 + $0x61] sm:$0xff] %vm294, %v392
        %425 = vst.msk [vmem:[%s303 + $0x69] sm:$0xff] %vm294, %v393
        %426 = vst.msk [vmem:[%s303 + $0x79] sm:$0xff] %vm294, %v394
        %427 = vst.msk [vmem:[%s303 + $0x81] sm:$0xff] %vm294, %v395
        %428 = vst.msk [vmem:[%s303 + $0x91] sm:$0xff] %vm294, %v396
        %429 = vst.msk [vmem:[%s303 + $0x99] sm:$0xff] %vm294, %v397
        %430 = vst.msk [vmem:[%s303 + $0xa9] sm:$0xff] %vm294, %v398
        %431 = vst.msk [vmem:[%s303 + $0xb1] sm:$0xff] %vm294, %v399
        %432 = vst.msk [vmem:[%s303 + $0xc1] sm:$0xff] %vm294, %v400
        %433 = vst.msk [vmem:[%s303 + $0xc9] sm:$0xff] %vm294, %v401
        %434 = vst.msk [vmem:[%s303 + $0xd9] sm:$0xff] %vm294, %v402
        %435 = vst.msk [vmem:[%s303 + $0xe1] sm:$0xff] %vm294, %v403
        %436 = vst.msk [vmem:[%s303 + $0xf1] sm:$0xff] %vm294, %v404
        %437 = vst.msk [vmem:[%s303 + $0xf9] sm:$0xff] %vm294, %v405
        %438 = vst.msk [vmem:[%s303 + $0x109] sm:$0xff] %vm294, %v406
        %439 = vst.msk [vmem:[%s303 + $0x111] sm:$0xff] %vm294, %v407
        %440 = vst.msk [vmem:[%s303 + $0x121] sm:$0xff] %vm294, %v408
        %441 = vst.msk [vmem:[%s303 + $0x129] sm:$0xff] %vm294, %v409
        %442 = vst.msk [vmem:[%s303 + $0x139] sm:$0xff] %vm294, %v410
        %443 = vst.msk [vmem:[%s303 + $0x141] sm:$0xff] %vm294, %v411
        %444 = vst.msk [vmem:[%s303 + $0x151] sm:$0xff] %vm294, %v412
        %445 = vst.msk [vmem:[%s303 + $0x159] sm:$0xff] %vm294, %v413
        %446 = vst.msk [vmem:[%s303 + $0x169] sm:$0xff] %vm294, %v414
        %447 = vst.msk [vmem:[%s303 + $0x171] sm:$0xff] %vm294, %v415
        %v448 = vld [vmem:[#allocation2] sm:$0xff]
        %v449 = vld [vmem:[#allocation2 + $0x8] sm:$0xff]
        %v450 = vld [vmem:[#allocation2 + $0x18] sm:$0xff]
        %v451 = vld [vmem:[#allocation2 + $0x20] sm:$0xff]
        %v452 = vld [vmem:[#allocation2 + $0x30] sm:$0xff]
        %v453 = vld [vmem:[#allocation2 + $0x38] sm:$0xff]
        %v454 = vld [vmem:[#allocation2 + $0x48] sm:$0xff]
        %v455 = vld [vmem:[#allocation2 + $0x50] sm:$0xff]
        %v456 = vld [vmem:[#allocation2 + $0x60] sm:$0xff]
        %v457 = vld [vmem:[#allocation2 + $0x68] sm:$0xff]
        %v458 = vld [vmem:[#allocation2 + $0x78] sm:$0xff]
        %v459 = vld [vmem:[#allocation2 + $0x80] sm:$0xff]
        %v460 = vld [vmem:[#allocation2 + $0x90] sm:$0xff]
        %v461 = vld [vmem:[#allocation2 + $0x98] sm:$0xff]
        %v462 = vld [vmem:[#allocation2 + $0xa8] sm:$0xff]
        %v463 = vld [vmem:[#allocation2 + $0xb0] sm:$0xff]
        %v464 = vld [vmem:[#allocation2 + $0xc0] sm:$0xff]
        %v465 = vld [vmem:[#allocation2 + $0xc8] sm:$0xff]
        %v466 = vld [vmem:[#allocation2 + $0xd8] sm:$0xff]
        %v467 = vld [vmem:[#allocation2 + $0xe0] sm:$0xff]
        %v468 = vld [vmem:[#allocation2 + $0xf0] sm:$0xff]
        %v469 = vld [vmem:[#allocation2 + $0xf8] sm:$0xff]
        %v470 = vld [vmem:[#allocation2 + $0x108] sm:$0xff]
        %v471 = vld [vmem:[#allocation2 + $0x110] sm:$0xff]
        %v472 = vld [vmem:[#allocation2 + $0x120] sm:$0xff]
        %v473 = vld [vmem:[#allocation2 + $0x128] sm:$0xff]
        %v474 = vld [vmem:[#allocation2 + $0x138] sm:$0xff]
        %v475 = vld [vmem:[#allocation2 + $0x140] sm:$0xff]
        %v476 = vld [vmem:[#allocation2 + $0x150] sm:$0xff]
        %v477 = vld [vmem:[#allocation2 + $0x158] sm:$0xff]
        %v478 = vld [vmem:[#allocation2 + $0x168] sm:$0xff]
        %v479 = vld [vmem:[#allocation2 + $0x170] sm:$0xff]
        %v480 = vpack.c.bf16 %v448, %v448
        %v481 = vpack.c.bf16 %v449, %v449
        %v482 = vpack.c.bf16 %v450, %v450
        %v483 = vpack.c.bf16 %v451, %v451
        %v484 = vpack.c.bf16 %v452, %v452
        %v485 = vpack.c.bf16 %v453, %v453
        %v486 = vpack.c.bf16 %v454, %v454
        %v487 = vpack.c.bf16 %v455, %v455
        %v488 = vpack.c.bf16 %v456, %v456
        %v489 = vpack.c.bf16 %v457, %v457
        %v490 = vpack.c.bf16 %v458, %v458
        %v491 = vpack.c.bf16 %v459, %v459
        %v492 = vpack.c.bf16 %v460, %v460
        %v493 = vpack.c.bf16 %v461, %v461
        %v494 = vpack.c.bf16 %v462, %v462
        %v495 = vpack.c.bf16 %v463, %v463
        %v496 = vpack.c.bf16 %v464, %v464
        %v497 = vpack.c.bf16 %v465, %v465
        %v498 = vpack.c.bf16 %v466, %v466
        %v499 = vpack.c.bf16 %v467, %v467
        %v500 = vpack.c.bf16 %v468, %v468
        %v501 = vpack.c.bf16 %v469, %v469
        %v502 = vpack.c.bf16 %v470, %v470
        %v503 = vpack.c.bf16 %v471, %v471
        %v504 = vpack.c.bf16 %v472, %v472
        %v505 = vpack.c.bf16 %v473, %v473
        %v506 = vpack.c.bf16 %v474, %v474
        %v507 = vpack.c.bf16 %v475, %v475
        %v508 = vpack.c.bf16 %v476, %v476
        %v509 = vpack.c.bf16 %v477, %v477
        %v510 = vpack.c.bf16 %v478, %v478
        %v511 = vpack.c.bf16 %v479, %v479
        %v512 = vld [vmem:[#allocation2 + $0x1] sm:$0xff]
        %v513 = vld [vmem:[#allocation2 + $0x9] sm:$0xff]
        %v514 = vld [vmem:[#allocation2 + $0x19] sm:$0xff]
        %v515 = vld [vmem:[#allocation2 + $0x21] sm:$0xff]
        %v516 = vld [vmem:[#allocation2 + $0x31] sm:$0xff]
        %v517 = vld [vmem:[#allocation2 + $0x39] sm:$0xff]
        %v518 = vld [vmem:[#allocation2 + $0x49] sm:$0xff]
        %v519 = vld [vmem:[#allocation2 + $0x51] sm:$0xff]
        %v520 = vld [vmem:[#allocation2 + $0x61] sm:$0xff]
        %v521 = vld [vmem:[#allocation2 + $0x69] sm:$0xff]
        %v522 = vld [vmem:[#allocation2 + $0x79] sm:$0xff]
        %v523 = vld [vmem:[#allocation2 + $0x81] sm:$0xff]
        %v524 = vld [vmem:[#allocation2 + $0x91] sm:$0xff]
        %v525 = vld [vmem:[#allocation2 + $0x99] sm:$0xff]
        %v526 = vld [vmem:[#allocation2 + $0xa9] sm:$0xff]
        %v527 = vld [vmem:[#allocation2 + $0xb1] sm:$0xff]
        %v528 = vld [vmem:[#allocation2 + $0xc1] sm:$0xff]
        %v529 = vld [vmem:[#allocation2 + $0xc9] sm:$0xff]
        %v530 = vld [vmem:[#allocation2 + $0xd9] sm:$0xff]
        %v531 = vld [vmem:[#allocation2 + $0xe1] sm:$0xff]
        %v532 = vld [vmem:[#allocation2 + $0xf1] sm:$0xff]
        %v533 = vld [vmem:[#allocation2 + $0xf9] sm:$0xff]
        %v534 = vld [vmem:[#allocation2 + $0x109] sm:$0xff]
        %v535 = vld [vmem:[#allocation2 + $0x111] sm:$0xff]
        %v536 = vld [vmem:[#allocation2 + $0x121] sm:$0xff]
        %v537 = vld [vmem:[#allocation2 + $0x129] sm:$0xff]
        %v538 = vld [vmem:[#allocation2 + $0x139] sm:$0xff]
        %v539 = vld [vmem:[#allocation2 + $0x141] sm:$0xff]
        %v540 = vld [vmem:[#allocation2 + $0x151] sm:$0xff]
        %v541 = vld [vmem:[#allocation2 + $0x159] sm:$0xff]
        %v542 = vld [vmem:[#allocation2 + $0x169] sm:$0xff]
        %v543 = vld [vmem:[#allocation2 + $0x171] sm:$0xff]
        %v544 = vpack.c.bf16 %v512, %v512
        %v545 = vpack.c.bf16 %v513, %v513
        %v546 = vpack.c.bf16 %v514, %v514
        %v547 = vpack.c.bf16 %v515, %v515
        %v548 = vpack.c.bf16 %v516, %v516
        %v549 = vpack.c.bf16 %v517, %v517
        %v550 = vpack.c.bf16 %v518, %v518
        %v551 = vpack.c.bf16 %v519, %v519
        %v552 = vpack.c.bf16 %v520, %v520
        %v553 = vpack.c.bf16 %v521, %v521
        %v554 = vpack.c.bf16 %v522, %v522
        %v555 = vpack.c.bf16 %v523, %v523
        %v556 = vpack.c.bf16 %v524, %v524
        %v557 = vpack.c.bf16 %v525, %v525
        %v558 = vpack.c.bf16 %v526, %v526
        %v559 = vpack.c.bf16 %v527, %v527
        %v560 = vpack.c.bf16 %v528, %v528
        %v561 = vpack.c.bf16 %v529, %v529
        %v562 = vpack.c.bf16 %v530, %v530
        %v563 = vpack.c.bf16 %v531, %v531
        %v564 = vpack.c.bf16 %v532, %v532
        %v565 = vpack.c.bf16 %v533, %v533
        %v566 = vpack.c.bf16 %v534, %v534
        %v567 = vpack.c.bf16 %v535, %v535
        %v568 = vpack.c.bf16 %v536, %v536
        %v569 = vpack.c.bf16 %v537, %v537
        %v570 = vpack.c.bf16 %v538, %v538
        %v571 = vpack.c.bf16 %v539, %v539
        %v572 = vpack.c.bf16 %v540, %v540
        %v573 = vpack.c.bf16 %v541, %v541
        %v574 = vpack.c.bf16 %v542, %v542
        %v575 = vpack.c.bf16 %v543, %v543
        %v576 = vld [vmem:[#allocation2 + $0x2] sm:$0xff]
        %v577 = vld [vmem:[#allocation2 + $0xa] sm:$0xff]
        %v578 = vld [vmem:[#allocation2 + $0x1a] sm:$0xff]
        %v579 = vld [vmem:[#allocation2 + $0x22] sm:$0xff]
        %v580 = vld [vmem:[#allocation2 + $0x32] sm:$0xff]
        %v581 = vld [vmem:[#allocation2 + $0x3a] sm:$0xff]
        %v582 = vld [vmem:[#allocation2 + $0x4a] sm:$0xff]
        %v583 = vld [vmem:[#allocation2 + $0x52] sm:$0xff]
        %v584 = vld [vmem:[#allocation2 + $0x62] sm:$0xff]
        %v585 = vld [vmem:[#allocation2 + $0x6a] sm:$0xff]
        %v586 = vld [vmem:[#allocation2 + $0x7a] sm:$0xff]
        %v587 = vld [vmem:[#allocation2 + $0x82] sm:$0xff]
        %v588 = vld [vmem:[#allocation2 + $0x92] sm:$0xff]
        %v589 = vld [vmem:[#allocation2 + $0x9a] sm:$0xff]
        %v590 = vld [vmem:[#allocation2 + $0xaa] sm:$0xff]
        %v591 = vld [vmem:[#allocation2 + $0xb2] sm:$0xff]
        %v592 = vld [vmem:[#allocation2 + $0xc2] sm:$0xff]
        %v593 = vld [vmem:[#allocation2 + $0xca] sm:$0xff]
        %v594 = vld [vmem:[#allocation2 + $0xda] sm:$0xff]
        %v595 = vld [vmem:[#allocation2 + $0xe2] sm:$0xff]
        %v596 = vld [vmem:[#allocation2 + $0xf2] sm:$0xff]
        %v597 = vld [vmem:[#allocation2 + $0xfa] sm:$0xff]
        %v598 = vld [vmem:[#allocation2 + $0x10a] sm:$0xff]
        %v599 = vld [vmem:[#allocation2 + $0x112] sm:$0xff]
        %v600 = vld [vmem:[#allocation2 + $0x122] sm:$0xff]
        %v601 = vld [vmem:[#allocation2 + $0x12a] sm:$0xff]
        %v602 = vld [vmem:[#allocation2 + $0x13a] sm:$0xff]
        %v603 = vld [vmem:[#allocation2 + $0x142] sm:$0xff]
        %v604 = vld [vmem:[#allocation2 + $0x152] sm:$0xff]
        %v605 = vld [vmem:[#allocation2 + $0x15a] sm:$0xff]
        %v606 = vld [vmem:[#allocation2 + $0x16a] sm:$0xff]
        %v607 = vld [vmem:[#allocation2 + $0x172] sm:$0xff]
        %v608 = vpack.c.bf16 %v576, %v576
        %v609 = vpack.c.bf16 %v577, %v577
        %v610 = vpack.c.bf16 %v578, %v578
        %v611 = vpack.c.bf16 %v579, %v579
        %v612 = vpack.c.bf16 %v580, %v580
        %v613 = vpack.c.bf16 %v581, %v581
        %v614 = vpack.c.bf16 %v582, %v582
        %v615 = vpack.c.bf16 %v583, %v583
        %v616 = vpack.c.bf16 %v584, %v584
        %v617 = vpack.c.bf16 %v585, %v585
        %v618 = vpack.c.bf16 %v586, %v586
        %v619 = vpack.c.bf16 %v587, %v587
        %v620 = vpack.c.bf16 %v588, %v588
        %v621 = vpack.c.bf16 %v589, %v589
        %v622 = vpack.c.bf16 %v590, %v590
        %v623 = vpack.c.bf16 %v591, %v591
        %v624 = vpack.c.bf16 %v592, %v592
        %v625 = vpack.c.bf16 %v593, %v593
        %v626 = vpack.c.bf16 %v594, %v594
        %v627 = vpack.c.bf16 %v595, %v595
        %v628 = vpack.c.bf16 %v596, %v596
        %v629 = vpack.c.bf16 %v597, %v597
        %v630 = vpack.c.bf16 %v598, %v598
        %v631 = vpack.c.bf16 %v599, %v599
        %v632 = vpack.c.bf16 %v600, %v600
        %v633 = vpack.c.bf16 %v601, %v601
        %v634 = vpack.c.bf16 %v602, %v602
        %v635 = vpack.c.bf16 %v603, %v603
        %v636 = vpack.c.bf16 %v604, %v604
        %v637 = vpack.c.bf16 %v605, %v605
        %v638 = vpack.c.bf16 %v606, %v606
        %v639 = vpack.c.bf16 %v607, %v607
        %v640 = vld [vmem:[%s303] sm:$0xff]
        %v641 = vld [vmem:[%s303 + $0x8] sm:$0xff]
        %v642 = vld [vmem:[%s303 + $0x18] sm:$0xff]
        %v643 = vld [vmem:[%s303 + $0x20] sm:$0xff]
        %v644 = vld [vmem:[%s303 + $0x30] sm:$0xff]
        %v645 = vld [vmem:[%s303 + $0x38] sm:$0xff]
        %v646 = vld [vmem:[%s303 + $0x48] sm:$0xff]
        %v647 = vld [vmem:[%s303 + $0x50] sm:$0xff]
        %v648 = vld [vmem:[%s303 + $0x60] sm:$0xff]
        %v649 = vld [vmem:[%s303 + $0x68] sm:$0xff]
        %v650 = vld [vmem:[%s303 + $0x78] sm:$0xff]
        %v651 = vld [vmem:[%s303 + $0x80] sm:$0xff]
        %v652 = vld [vmem:[%s303 + $0x90] sm:$0xff]
        %v653 = vld [vmem:[%s303 + $0x98] sm:$0xff]
        %v654 = vld [vmem:[%s303 + $0xa8] sm:$0xff]
        %v655 = vld [vmem:[%s303 + $0xb0] sm:$0xff]
        %v656 = vld [vmem:[%s303 + $0xc0] sm:$0xff]
        %v657 = vld [vmem:[%s303 + $0xc8] sm:$0xff]
        %v658 = vld [vmem:[%s303 + $0xd8] sm:$0xff]
        %v659 = vld [vmem:[%s303 + $0xe0] sm:$0xff]
        %v660 = vld [vmem:[%s303 + $0xf0] sm:$0xff]
        %v661 = vld [vmem:[%s303 + $0xf8] sm:$0xff]
        %v662 = vld [vmem:[%s303 + $0x108] sm:$0xff]
        %v663 = vld [vmem:[%s303 + $0x110] sm:$0xff]
        %v664 = vld [vmem:[%s303 + $0x120] sm:$0xff]
        %v665 = vld [vmem:[%s303 + $0x128] sm:$0xff]
        %v666 = vld [vmem:[%s303 + $0x138] sm:$0xff]
        %v667 = vld [vmem:[%s303 + $0x140] sm:$0xff]
        %v668 = vld [vmem:[%s303 + $0x150] sm:$0xff]
        %v669 = vld [vmem:[%s303 + $0x158] sm:$0xff]
        %v670 = vld [vmem:[%s303 + $0x168] sm:$0xff]
        %v671 = vld [vmem:[%s303 + $0x170] sm:$0xff]
        %v672 = vpack.c.bf16 %v640, %v640
        %v673 = vpack.c.bf16 %v641, %v641
        %v674 = vpack.c.bf16 %v642, %v642
        %v675 = vpack.c.bf16 %v643, %v643
        %v676 = vpack.c.bf16 %v644, %v644
        %v677 = vpack.c.bf16 %v645, %v645
        %v678 = vpack.c.bf16 %v646, %v646
        %v679 = vpack.c.bf16 %v647, %v647
        %v680 = vpack.c.bf16 %v648, %v648
        %v681 = vpack.c.bf16 %v649, %v649
        %v682 = vpack.c.bf16 %v650, %v650
        %v683 = vpack.c.bf16 %v651, %v651
        %v684 = vpack.c.bf16 %v652, %v652
        %v685 = vpack.c.bf16 %v653, %v653
        %v686 = vpack.c.bf16 %v654, %v654
        %v687 = vpack.c.bf16 %v655, %v655
        %v688 = vpack.c.bf16 %v656, %v656
        %v689 = vpack.c.bf16 %v657, %v657
        %v690 = vpack.c.bf16 %v658, %v658
        %v691 = vpack.c.bf16 %v659, %v659
        %v692 = vpack.c.bf16 %v660, %v660
        %v693 = vpack.c.bf16 %v661, %v661
        %v694 = vpack.c.bf16 %v662, %v662
        %v695 = vpack.c.bf16 %v663, %v663
        %v696 = vpack.c.bf16 %v664, %v664
        %v697 = vpack.c.bf16 %v665, %v665
        %v698 = vpack.c.bf16 %v666, %v666
        %v699 = vpack.c.bf16 %v667, %v667
        %v700 = vpack.c.bf16 %v668, %v668
        %v701 = vpack.c.bf16 %v669, %v669
        %v702 = vpack.c.bf16 %v670, %v670
        %v703 = vpack.c.bf16 %v671, %v671
        %v704 = vld [vmem:[%s303 + $0x1] sm:$0xff]
        %v705 = vld [vmem:[%s303 + $0x9] sm:$0xff]
        %v706 = vld [vmem:[%s303 + $0x19] sm:$0xff]
        %v707 = vld [vmem:[%s303 + $0x21] sm:$0xff]
        %v708 = vld [vmem:[%s303 + $0x31] sm:$0xff]
        %v709 = vld [vmem:[%s303 + $0x39] sm:$0xff]
        %v710 = vld [vmem:[%s303 + $0x49] sm:$0xff]
        %v711 = vld [vmem:[%s303 + $0x51] sm:$0xff]
        %v712 = vld [vmem:[%s303 + $0x61] sm:$0xff]
        %v713 = vld [vmem:[%s303 + $0x69] sm:$0xff]
        %v714 = vld [vmem:[%s303 + $0x79] sm:$0xff]
        %v715 = vld [vmem:[%s303 + $0x81] sm:$0xff]
        %v716 = vld [vmem:[%s303 + $0x91] sm:$0xff]
        %v717 = vld [vmem:[%s303 + $0x99] sm:$0xff]
        %v718 = vld [vmem:[%s303 + $0xa9] sm:$0xff]
        %v719 = vld [vmem:[%s303 + $0xb1] sm:$0xff]
        %v720 = vld [vmem:[%s303 + $0xc1] sm:$0xff]
        %v721 = vld [vmem:[%s303 + $0xc9] sm:$0xff]
        %v722 = vld [vmem:[%s303 + $0xd9] sm:$0xff]
        %v723 = vld [vmem:[%s303 + $0xe1] sm:$0xff]
        %v724 = vld [vmem:[%s303 + $0xf1] sm:$0xff]
        %v725 = vld [vmem:[%s303 + $0xf9] sm:$0xff]
        %v726 = vld [vmem:[%s303 + $0x109] sm:$0xff]
        %v727 = vld [vmem:[%s303 + $0x111] sm:$0xff]
        %v728 = vld [vmem:[%s303 + $0x121] sm:$0xff]
        %v729 = vld [vmem:[%s303 + $0x129] sm:$0xff]
        %v730 = vld [vmem:[%s303 + $0x139] sm:$0xff]
        %v731 = vld [vmem:[%s303 + $0x141] sm:$0xff]
        %v732 = vld [vmem:[%s303 + $0x151] sm:$0xff]
        %v733 = vld [vmem:[%s303 + $0x159] sm:$0xff]
        %v734 = vld [vmem:[%s303 + $0x169] sm:$0xff]
        %v735 = vld [vmem:[%s303 + $0x171] sm:$0xff]
        %v736 = vpack.c.bf16 %v704, %v704
        %v737 = vpack.c.bf16 %v705, %v705
        %v738 = vpack.c.bf16 %v706, %v706
        %v739 = vpack.c.bf16 %v707, %v707
        %v740 = vpack.c.bf16 %v708, %v708
        %v741 = vpack.c.bf16 %v709, %v709
        %v742 = vpack.c.bf16 %v710, %v710
        %v743 = vpack.c.bf16 %v711, %v711
        %v744 = vpack.c.bf16 %v712, %v712
        %v745 = vpack.c.bf16 %v713, %v713
        %v746 = vpack.c.bf16 %v714, %v714
        %v747 = vpack.c.bf16 %v715, %v715
        %v748 = vpack.c.bf16 %v716, %v716
        %v749 = vpack.c.bf16 %v717, %v717
        %v750 = vpack.c.bf16 %v718, %v718
        %v751 = vpack.c.bf16 %v719, %v719
        %v752 = vpack.c.bf16 %v720, %v720
        %v753 = vpack.c.bf16 %v721, %v721
        %v754 = vpack.c.bf16 %v722, %v722
        %v755 = vpack.c.bf16 %v723, %v723
        %v756 = vpack.c.bf16 %v724, %v724
        %v757 = vpack.c.bf16 %v725, %v725
        %v758 = vpack.c.bf16 %v726, %v726
        %v759 = vpack.c.bf16 %v727, %v727
        %v760 = vpack.c.bf16 %v728, %v728
        %v761 = vpack.c.bf16 %v729, %v729
        %v762 = vpack.c.bf16 %v730, %v730
        %v763 = vpack.c.bf16 %v731, %v731
        %v764 = vpack.c.bf16 %v732, %v732
        %v765 = vpack.c.bf16 %v733, %v733
        %v766 = vpack.c.bf16 %v734, %v734
        %v767 = vpack.c.bf16 %v735, %v735
        %v768 = vld [vmem:[%s303 + $0x2] sm:$0xff]
        %v769 = vld [vmem:[%s303 + $0xa] sm:$0xff]
        %v770 = vld [vmem:[%s303 + $0x1a] sm:$0xff]
        %v771 = vld [vmem:[%s303 + $0x22] sm:$0xff]
        %v772 = vld [vmem:[%s303 + $0x32] sm:$0xff]
        %v773 = vld [vmem:[%s303 + $0x3a] sm:$0xff]
        %v774 = vld [vmem:[%s303 + $0x4a] sm:$0xff]
        %v775 = vld [vmem:[%s303 + $0x52] sm:$0xff]
        %v776 = vld [vmem:[%s303 + $0x62] sm:$0xff]
        %v777 = vld [vmem:[%s303 + $0x6a] sm:$0xff]
        %v778 = vld [vmem:[%s303 + $0x7a] sm:$0xff]
        %v779 = vld [vmem:[%s303 + $0x82] sm:$0xff]
        %v780 = vld [vmem:[%s303 + $0x92] sm:$0xff]
        %v781 = vld [vmem:[%s303 + $0x9a] sm:$0xff]
        %v782 = vld [vmem:[%s303 + $0xaa] sm:$0xff]
        %v783 = vld [vmem:[%s303 + $0xb2] sm:$0xff]
        %v784 = vld [vmem:[%s303 + $0xc2] sm:$0xff]
        %v785 = vld [vmem:[%s303 + $0xca] sm:$0xff]
        %v786 = vld [vmem:[%s303 + $0xda] sm:$0xff]
        %v787 = vld [vmem:[%s303 + $0xe2] sm:$0xff]
        %v788 = vld [vmem:[%s303 + $0xf2] sm:$0xff]
        %v789 = vld [vmem:[%s303 + $0xfa] sm:$0xff]
        %v790 = vld [vmem:[%s303 + $0x10a] sm:$0xff]
        %v791 = vld [vmem:[%s303 + $0x112] sm:$0xff]
        %v792 = vld [vmem:[%s303 + $0x122] sm:$0xff]
        %v793 = vld [vmem:[%s303 + $0x12a] sm:$0xff]
        %v794 = vld [vmem:[%s303 + $0x13a] sm:$0xff]
        %v795 = vld [vmem:[%s303 + $0x142] sm:$0xff]
        %v796 = vld [vmem:[%s303 + $0x152] sm:$0xff]
        %v797 = vld [vmem:[%s303 + $0x15a] sm:$0xff]
        %v798 = vld [vmem:[%s303 + $0x16a] sm:$0xff]
        %v799 = vld [vmem:[%s303 + $0x172] sm:$0xff]
        %v800 = vpack.c.bf16 %v768, %v768
        %v801 = vpack.c.bf16 %v769, %v769
        %v802 = vpack.c.bf16 %v770, %v770
        %v803 = vpack.c.bf16 %v771, %v771
        %v804 = vpack.c.bf16 %v772, %v772
        %v805 = vpack.c.bf16 %v773, %v773
        %v806 = vpack.c.bf16 %v774, %v774
        %v807 = vpack.c.bf16 %v775, %v775
        %v808 = vpack.c.bf16 %v776, %v776
        %v809 = vpack.c.bf16 %v777, %v777
        %v810 = vpack.c.bf16 %v778, %v778
        %v811 = vpack.c.bf16 %v779, %v779
        %v812 = vpack.c.bf16 %v780, %v780
        %v813 = vpack.c.bf16 %v781, %v781
        %v814 = vpack.c.bf16 %v782, %v782
        %v815 = vpack.c.bf16 %v783, %v783
        %v816 = vpack.c.bf16 %v784, %v784
        %v817 = vpack.c.bf16 %v785, %v785
        %v818 = vpack.c.bf16 %v786, %v786
        %v819 = vpack.c.bf16 %v787, %v787
        %v820 = vpack.c.bf16 %v788, %v788
        %v821 = vpack.c.bf16 %v789, %v789
        %v822 = vpack.c.bf16 %v790, %v790
        %v823 = vpack.c.bf16 %v791, %v791
        %v824 = vpack.c.bf16 %v792, %v792
        %v825 = vpack.c.bf16 %v793, %v793
        %v826 = vpack.c.bf16 %v794, %v794
        %v827 = vpack.c.bf16 %v795, %v795
        %v828 = vpack.c.bf16 %v796, %v796
        %v829 = vpack.c.bf16 %v797, %v797
        %v830 = vpack.c.bf16 %v798, %v798
        %v831 = vpack.c.bf16 %v799, %v799
        %s832 = scalar_lea.vmem [#allocation2], 48
        %v833 = vld [vmem:[%s832] sm:$0xff]
        %v834 = vld [vmem:[%s832 + $0x8] sm:$0xff]
        %v835 = vld [vmem:[%s832 + $0x18] sm:$0xff]
        %v836 = vld [vmem:[%s832 + $0x20] sm:$0xff]
        %v837 = vld [vmem:[%s832 + $0x30] sm:$0xff]
        %v838 = vld [vmem:[%s832 + $0x38] sm:$0xff]
        %v839 = vld [vmem:[%s832 + $0x48] sm:$0xff]
        %v840 = vld [vmem:[%s832 + $0x50] sm:$0xff]
        %v841 = vld [vmem:[%s832 + $0x60] sm:$0xff]
        %v842 = vld [vmem:[%s832 + $0x68] sm:$0xff]
        %v843 = vld [vmem:[%s832 + $0x78] sm:$0xff]
        %v844 = vld [vmem:[%s832 + $0x80] sm:$0xff]
        %v845 = vld [vmem:[%s832 + $0x90] sm:$0xff]
        %v846 = vld [vmem:[%s832 + $0x98] sm:$0xff]
        %v847 = vld [vmem:[%s832 + $0xa8] sm:$0xff]
        %v848 = vld [vmem:[%s832 + $0xb0] sm:$0xff]
        %v849 = vld [vmem:[%s832 + $0xc0] sm:$0xff]
        %v850 = vld [vmem:[%s832 + $0xc8] sm:$0xff]
        %v851 = vld [vmem:[%s832 + $0xd8] sm:$0xff]
        %v852 = vld [vmem:[%s832 + $0xe0] sm:$0xff]
        %v853 = vld [vmem:[%s832 + $0xf0] sm:$0xff]
        %v854 = vld [vmem:[%s832 + $0xf8] sm:$0xff]
        %v855 = vld [vmem:[%s832 + $0x108] sm:$0xff]
        %v856 = vld [vmem:[%s832 + $0x110] sm:$0xff]
        %v857 = vld [vmem:[%s832 + $0x120] sm:$0xff]
        %v858 = vld [vmem:[%s832 + $0x128] sm:$0xff]
        %v859 = vld [vmem:[%s832 + $0x138] sm:$0xff]
        %v860 = vld [vmem:[%s832 + $0x140] sm:$0xff]
        %v861 = vld [vmem:[%s832 + $0x150] sm:$0xff]
        %v862 = vld [vmem:[%s832 + $0x158] sm:$0xff]
        %v863 = vld [vmem:[%s832 + $0x168] sm:$0xff]
        %v864 = vld [vmem:[%s832 + $0x170] sm:$0xff]
        %v865 = vpack.c.bf16 %v833, %v833
        %v866 = vpack.c.bf16 %v834, %v834
        %v867 = vpack.c.bf16 %v835, %v835
        %v868 = vpack.c.bf16 %v836, %v836
        %v869 = vpack.c.bf16 %v837, %v837
        %v870 = vpack.c.bf16 %v838, %v838
        %v871 = vpack.c.bf16 %v839, %v839
        %v872 = vpack.c.bf16 %v840, %v840
        %v873 = vpack.c.bf16 %v841, %v841
        %v874 = vpack.c.bf16 %v842, %v842
        %v875 = vpack.c.bf16 %v843, %v843
        %v876 = vpack.c.bf16 %v844, %v844
        %v877 = vpack.c.bf16 %v845, %v845
        %v878 = vpack.c.bf16 %v846, %v846
        %v879 = vpack.c.bf16 %v847, %v847
        %v880 = vpack.c.bf16 %v848, %v848
        %v881 = vpack.c.bf16 %v849, %v849
        %v882 = vpack.c.bf16 %v850, %v850
        %v883 = vpack.c.bf16 %v851, %v851
        %v884 = vpack.c.bf16 %v852, %v852
        %v885 = vpack.c.bf16 %v853, %v853
        %v886 = vpack.c.bf16 %v854, %v854
        %v887 = vpack.c.bf16 %v855, %v855
        %v888 = vpack.c.bf16 %v856, %v856
        %v889 = vpack.c.bf16 %v857, %v857
        %v890 = vpack.c.bf16 %v858, %v858
        %v891 = vpack.c.bf16 %v859, %v859
        %v892 = vpack.c.bf16 %v860, %v860
        %v893 = vpack.c.bf16 %v861, %v861
        %v894 = vpack.c.bf16 %v862, %v862
        %v895 = vpack.c.bf16 %v863, %v863
        %v896 = vpack.c.bf16 %v864, %v864
        %v897 = vld [vmem:[%s832 + $0x1] sm:$0xff]
        %v898 = vld [vmem:[%s832 + $0x9] sm:$0xff]
        %v899 = vld [vmem:[%s832 + $0x19] sm:$0xff]
        %v900 = vld [vmem:[%s832 + $0x21] sm:$0xff]
        %v901 = vld [vmem:[%s832 + $0x31] sm:$0xff]
        %v902 = vld [vmem:[%s832 + $0x39] sm:$0xff]
        %v903 = vld [vmem:[%s832 + $0x49] sm:$0xff]
        %v904 = vld [vmem:[%s832 + $0x51] sm:$0xff]
        %v905 = vld [vmem:[%s832 + $0x61] sm:$0xff]
        %v906 = vld [vmem:[%s832 + $0x69] sm:$0xff]
        %v907 = vld [vmem:[%s832 + $0x79] sm:$0xff]
        %v908 = vld [vmem:[%s832 + $0x81] sm:$0xff]
        %v909 = vld [vmem:[%s832 + $0x91] sm:$0xff]
        %v910 = vld [vmem:[%s832 + $0x99] sm:$0xff]
        %v911 = vld [vmem:[%s832 + $0xa9] sm:$0xff]
        %v912 = vld [vmem:[%s832 + $0xb1] sm:$0xff]
        %v913 = vld [vmem:[%s832 + $0xc1] sm:$0xff]
        %v914 = vld [vmem:[%s832 + $0xc9] sm:$0xff]
        %v915 = vld [vmem:[%s832 + $0xd9] sm:$0xff]
        %v916 = vld [vmem:[%s832 + $0xe1] sm:$0xff]
        %v917 = vld [vmem:[%s832 + $0xf1] sm:$0xff]
        %v918 = vld [vmem:[%s832 + $0xf9] sm:$0xff]
        %v919 = vld [vmem:[%s832 + $0x109] sm:$0xff]
        %v920 = vld [vmem:[%s832 + $0x111] sm:$0xff]
        %v921 = vld [vmem:[%s832 + $0x121] sm:$0xff]
        %v922 = vld [vmem:[%s832 + $0x129] sm:$0xff]
        %v923 = vld [vmem:[%s832 + $0x139] sm:$0xff]
        %v924 = vld [vmem:[%s832 + $0x141] sm:$0xff]
        %v925 = vld [vmem:[%s832 + $0x151] sm:$0xff]
        %v926 = vld [vmem:[%s832 + $0x159] sm:$0xff]
        %v927 = vld [vmem:[%s832 + $0x169] sm:$0xff]
        %v928 = vld [vmem:[%s832 + $0x171] sm:$0xff]
        %v929 = vpack.c.bf16 %v897, %v897
        %v930 = vpack.c.bf16 %v898, %v898
        %v931 = vpack.c.bf16 %v899, %v899
        %v932 = vpack.c.bf16 %v900, %v900
        %v933 = vpack.c.bf16 %v901, %v901
        %v934 = vpack.c.bf16 %v902, %v902
        %v935 = vpack.c.bf16 %v903, %v903
        %v936 = vpack.c.bf16 %v904, %v904
        %v937 = vpack.c.bf16 %v905, %v905
        %v938 = vpack.c.bf16 %v906, %v906
        %v939 = vpack.c.bf16 %v907, %v907
        %v940 = vpack.c.bf16 %v908, %v908
        %v941 = vpack.c.bf16 %v909, %v909
        %v942 = vpack.c.bf16 %v910, %v910
        %v943 = vpack.c.bf16 %v911, %v911
        %v944 = vpack.c.bf16 %v912, %v912
        %v945 = vpack.c.bf16 %v913, %v913
        %v946 = vpack.c.bf16 %v914, %v914
        %v947 = vpack.c.bf16 %v915, %v915
        %v948 = vpack.c.bf16 %v916, %v916
        %v949 = vpack.c.bf16 %v917, %v917
        %v950 = vpack.c.bf16 %v918, %v918
        %v951 = vpack.c.bf16 %v919, %v919
        %v952 = vpack.c.bf16 %v920, %v920
        %v953 = vpack.c.bf16 %v921, %v921
        %v954 = vpack.c.bf16 %v922, %v922
        %v955 = vpack.c.bf16 %v923, %v923
        %v956 = vpack.c.bf16 %v924, %v924
        %v957 = vpack.c.bf16 %v925, %v925
        %v958 = vpack.c.bf16 %v926, %v926
        %v959 = vpack.c.bf16 %v927, %v927
        %v960 = vpack.c.bf16 %v928, %v928
        %v961 = vld [vmem:[%s832 + $0x2] sm:$0xff]
        %v962 = vld [vmem:[%s832 + $0xa] sm:$0xff]
        %v963 = vld [vmem:[%s832 + $0x1a] sm:$0xff]
        %v964 = vld [vmem:[%s832 + $0x22] sm:$0xff]
        %v965 = vld [vmem:[%s832 + $0x32] sm:$0xff]
        %v966 = vld [vmem:[%s832 + $0x3a] sm:$0xff]
        %v967 = vld [vmem:[%s832 + $0x4a] sm:$0xff]
        %v968 = vld [vmem:[%s832 + $0x52] sm:$0xff]
        %v969 = vld [vmem:[%s832 + $0x62] sm:$0xff]
        %v970 = vld [vmem:[%s832 + $0x6a] sm:$0xff]
        %v971 = vld [vmem:[%s832 + $0x7a] sm:$0xff]
        %v972 = vld [vmem:[%s832 + $0x82] sm:$0xff]
        %v973 = vld [vmem:[%s832 + $0x92] sm:$0xff]
        %v974 = vld [vmem:[%s832 + $0x9a] sm:$0xff]
        %v975 = vld [vmem:[%s832 + $0xaa] sm:$0xff]
        %v976 = vld [vmem:[%s832 + $0xb2] sm:$0xff]
        %v977 = vld [vmem:[%s832 + $0xc2] sm:$0xff]
        %v978 = vld [vmem:[%s832 + $0xca] sm:$0xff]
        %v979 = vld [vmem:[%s832 + $0xda] sm:$0xff]
        %v980 = vld [vmem:[%s832 + $0xe2] sm:$0xff]
        %v981 = vld [vmem:[%s832 + $0xf2] sm:$0xff]
        %v982 = vld [vmem:[%s832 + $0xfa] sm:$0xff]
        %v983 = vld [vmem:[%s832 + $0x10a] sm:$0xff]
        %v984 = vld [vmem:[%s832 + $0x112] sm:$0xff]
        %v985 = vld [vmem:[%s832 + $0x122] sm:$0xff]
        %v986 = vld [vmem:[%s832 + $0x12a] sm:$0xff]
        %v987 = vld [vmem:[%s832 + $0x13a] sm:$0xff]
        %v988 = vld [vmem:[%s832 + $0x142] sm:$0xff]
        %v989 = vld [vmem:[%s832 + $0x152] sm:$0xff]
        %v990 = vld [vmem:[%s832 + $0x15a] sm:$0xff]
        %v991 = vld [vmem:[%s832 + $0x16a] sm:$0xff]
        %v992 = vld [vmem:[%s832 + $0x172] sm:$0xff]
        %v993 = vpack.c.bf16 %v961, %v961
        %v994 = vpack.c.bf16 %v962, %v962
        %v995 = vpack.c.bf16 %v963, %v963
        %v996 = vpack.c.bf16 %v964, %v964
        %v997 = vpack.c.bf16 %v965, %v965
        %v998 = vpack.c.bf16 %v966, %v966
        %v999 = vpack.c.bf16 %v967, %v967
        %v1000 = vpack.c.bf16 %v968, %v968
        %v1001 = vpack.c.bf16 %v969, %v969
        %v1002 = vpack.c.bf16 %v970, %v970
        %v1003 = vpack.c.bf16 %v971, %v971
        %v1004 = vpack.c.bf16 %v972, %v972
        %v1005 = vpack.c.bf16 %v973, %v973
        %v1006 = vpack.c.bf16 %v974, %v974
        %v1007 = vpack.c.bf16 %v975, %v975
        %v1008 = vpack.c.bf16 %v976, %v976
        %v1009 = vpack.c.bf16 %v977, %v977
        %v1010 = vpack.c.bf16 %v978, %v978
        %v1011 = vpack.c.bf16 %v979, %v979
        %v1012 = vpack.c.bf16 %v980, %v980
        %v1013 = vpack.c.bf16 %v981, %v981
        %v1014 = vpack.c.bf16 %v982, %v982
        %v1015 = vpack.c.bf16 %v983, %v983
        %v1016 = vpack.c.bf16 %v984, %v984
        %v1017 = vpack.c.bf16 %v985, %v985
        %v1018 = vpack.c.bf16 %v986, %v986
        %v1019 = vpack.c.bf16 %v987, %v987
        %v1020 = vpack.c.bf16 %v988, %v988
        %v1021 = vpack.c.bf16 %v989, %v989
        %v1022 = vpack.c.bf16 %v990, %v990
        %v1023 = vpack.c.bf16 %v991, %v991
        %v1024 = vpack.c.bf16 %v992, %v992
        %v1057 = vunpack.c.l.b16 %v480
        %v1058 = vunpack.c.l.b16 %v481
        %v1059 = vunpack.c.l.b16 %v482
        %v1060 = vunpack.c.l.b16 %v483
        %v1061 = vunpack.c.l.b16 %v484
        %v1062 = vunpack.c.l.b16 %v485
        %v1063 = vunpack.c.l.b16 %v486
        %v1064 = vunpack.c.l.b16 %v487
        %v1065 = vunpack.c.l.b16 %v488
        %v1066 = vunpack.c.l.b16 %v489
        %v1067 = vunpack.c.l.b16 %v490
        %v1068 = vunpack.c.l.b16 %v491
        %v1069 = vunpack.c.l.b16 %v492
        %v1070 = vunpack.c.l.b16 %v493
        %v1071 = vunpack.c.l.b16 %v494
        %v1072 = vunpack.c.l.b16 %v495
        %v1073 = vunpack.c.l.b16 %v496
        %v1074 = vunpack.c.l.b16 %v497
        %v1075 = vunpack.c.l.b16 %v498
        %v1076 = vunpack.c.l.b16 %v499
        %v1077 = vunpack.c.l.b16 %v500
        %v1078 = vunpack.c.l.b16 %v501
        %v1079 = vunpack.c.l.b16 %v502
        %v1080 = vunpack.c.l.b16 %v503
        %v1081 = vunpack.c.l.b16 %v504
        %v1082 = vunpack.c.l.b16 %v505
        %v1083 = vunpack.c.l.b16 %v506
        %v1084 = vunpack.c.l.b16 %v507
        %v1085 = vunpack.c.l.b16 %v508
        %v1086 = vunpack.c.l.b16 %v509
        %v1087 = vunpack.c.l.b16 %v510
        %v1088 = vunpack.c.l.b16 %v511
        %v1089 = vpack.c.b16 %v1058, %v1057
        %v1090 = vpack.c.b16 %v1060, %v1059
        %v1091 = vpack.c.b16 %v1062, %v1061
        %v1092 = vpack.c.b16 %v1064, %v1063
        %v1093 = vpack.c.b16 %v1066, %v1065
        %v1094 = vpack.c.b16 %v1068, %v1067
        %v1095 = vpack.c.b16 %v1070, %v1069
        %v1096 = vpack.c.b16 %v1072, %v1071
        %v1097 = vpack.c.b16 %v1074, %v1073
        %v1098 = vpack.c.b16 %v1076, %v1075
        %v1099 = vpack.c.b16 %v1078, %v1077
        %v1100 = vpack.c.b16 %v1080, %v1079
        %v1101 = vpack.c.b16 %v1082, %v1081
        %v1102 = vpack.c.b16 %v1084, %v1083
        %v1103 = vpack.c.b16 %v1086, %v1085
        %v1104 = vpack.c.b16 %v1088, %v1087
        %v1137 = vunpack.c.l.b16 %v544
        %v1138 = vunpack.c.l.b16 %v545
        %v1139 = vunpack.c.l.b16 %v546
        %v1140 = vunpack.c.l.b16 %v547
        %v1141 = vunpack.c.l.b16 %v548
        %v1142 = vunpack.c.l.b16 %v549
        %v1143 = vunpack.c.l.b16 %v550
        %v1144 = vunpack.c.l.b16 %v551
        %v1145 = vunpack.c.l.b16 %v552
        %v1146 = vunpack.c.l.b16 %v553
        %v1147 = vunpack.c.l.b16 %v554
        %v1148 = vunpack.c.l.b16 %v555
        %v1149 = vunpack.c.l.b16 %v556
        %v1150 = vunpack.c.l.b16 %v557
        %v1151 = vunpack.c.l.b16 %v558
        %v1152 = vunpack.c.l.b16 %v559
        %v1153 = vunpack.c.l.b16 %v560
        %v1154 = vunpack.c.l.b16 %v561
        %v1155 = vunpack.c.l.b16 %v562
        %v1156 = vunpack.c.l.b16 %v563
        %v1157 = vunpack.c.l.b16 %v564
        %v1158 = vunpack.c.l.b16 %v565
        %v1159 = vunpack.c.l.b16 %v566
        %v1160 = vunpack.c.l.b16 %v567
        %v1161 = vunpack.c.l.b16 %v568
        %v1162 = vunpack.c.l.b16 %v569
        %v1163 = vunpack.c.l.b16 %v570
        %v1164 = vunpack.c.l.b16 %v571
        %v1165 = vunpack.c.l.b16 %v572
        %v1166 = vunpack.c.l.b16 %v573
        %v1167 = vunpack.c.l.b16 %v574
        %v1168 = vunpack.c.l.b16 %v575
        %v1169 = vpack.c.b16 %v1138, %v1137
        %v1170 = vpack.c.b16 %v1140, %v1139
        %v1171 = vpack.c.b16 %v1142, %v1141
        %v1172 = vpack.c.b16 %v1144, %v1143
        %v1173 = vpack.c.b16 %v1146, %v1145
        %v1174 = vpack.c.b16 %v1148, %v1147
        %v1175 = vpack.c.b16 %v1150, %v1149
        %v1176 = vpack.c.b16 %v1152, %v1151
        %v1177 = vpack.c.b16 %v1154, %v1153
        %v1178 = vpack.c.b16 %v1156, %v1155
        %v1179 = vpack.c.b16 %v1158, %v1157
        %v1180 = vpack.c.b16 %v1160, %v1159
        %v1181 = vpack.c.b16 %v1162, %v1161
        %v1182 = vpack.c.b16 %v1164, %v1163
        %v1183 = vpack.c.b16 %v1166, %v1165
        %v1184 = vpack.c.b16 %v1168, %v1167
        %1185 = vrot.lane.b32.xlu0 %v1169, 64
        %v1186 = vpop.permute.xlu0 %1185
        %1187 = vrot.lane.b32.xlu0 %v1170, 64
        %v1188 = vpop.permute.xlu0 %1187
        %1189 = vrot.lane.b32.xlu0 %v1171, 64
        %v1190 = vpop.permute.xlu0 %1189
        %1191 = vrot.lane.b32.xlu0 %v1172, 64
        %v1192 = vpop.permute.xlu0 %1191
        %1193 = vrot.lane.b32.xlu0 %v1173, 64
        %v1194 = vpop.permute.xlu0 %1193
        %1195 = vrot.lane.b32.xlu0 %v1174, 64
        %v1196 = vpop.permute.xlu0 %1195
        %1197 = vrot.lane.b32.xlu0 %v1175, 64
        %v1198 = vpop.permute.xlu0 %1197
        %1199 = vrot.lane.b32.xlu0 %v1176, 64
        %v1200 = vpop.permute.xlu0 %1199
        %1201 = vrot.lane.b32.xlu0 %v1177, 64
        %v1202 = vpop.permute.xlu0 %1201
        %1203 = vrot.lane.b32.xlu0 %v1178, 64
        %v1204 = vpop.permute.xlu0 %1203
        %1205 = vrot.lane.b32.xlu0 %v1179, 64
        %v1206 = vpop.permute.xlu0 %1205
        %1207 = vrot.lane.b32.xlu0 %v1180, 64
        %v1208 = vpop.permute.xlu0 %1207
        %1209 = vrot.lane.b32.xlu0 %v1181, 64
        %v1210 = vpop.permute.xlu0 %1209
        %1211 = vrot.lane.b32.xlu0 %v1182, 64
        %v1212 = vpop.permute.xlu0 %1211
        %1213 = vrot.lane.b32.xlu0 %v1183, 64
        %v1214 = vpop.permute.xlu0 %1213
        %1215 = vrot.lane.b32.xlu0 %v1184, 64
        %v1216 = vpop.permute.xlu0 %1215
        %v1249 = vunpack.c.l.b16 %v608
        %v1250 = vunpack.c.l.b16 %v609
        %v1251 = vunpack.c.l.b16 %v610
        %v1252 = vunpack.c.l.b16 %v611
        %v1253 = vunpack.c.l.b16 %v612
        %v1254 = vunpack.c.l.b16 %v613
        %v1255 = vunpack.c.l.b16 %v614
        %v1256 = vunpack.c.l.b16 %v615
        %v1257 = vunpack.c.l.b16 %v616
        %v1258 = vunpack.c.l.b16 %v617
        %v1259 = vunpack.c.l.b16 %v618
        %v1260 = vunpack.c.l.b16 %v619
        %v1261 = vunpack.c.l.b16 %v620
        %v1262 = vunpack.c.l.b16 %v621
        %v1263 = vunpack.c.l.b16 %v622
        %v1264 = vunpack.c.l.b16 %v623
        %v1265 = vunpack.c.l.b16 %v624
        %v1266 = vunpack.c.l.b16 %v625
        %v1267 = vunpack.c.l.b16 %v626
        %v1268 = vunpack.c.l.b16 %v627
        %v1269 = vunpack.c.l.b16 %v628
        %v1270 = vunpack.c.l.b16 %v629
        %v1271 = vunpack.c.l.b16 %v630
        %v1272 = vunpack.c.l.b16 %v631
        %v1273 = vunpack.c.l.b16 %v632
        %v1274 = vunpack.c.l.b16 %v633
        %v1275 = vunpack.c.l.b16 %v634
        %v1276 = vunpack.c.l.b16 %v635
        %v1277 = vunpack.c.l.b16 %v636
        %v1278 = vunpack.c.l.b16 %v637
        %v1279 = vunpack.c.l.b16 %v638
        %v1280 = vunpack.c.l.b16 %v639
        %v1281 = vpack.c.b16 %v1250, %v1249
        %v1282 = vpack.c.b16 %v1252, %v1251
        %v1283 = vpack.c.b16 %v1254, %v1253
        %v1284 = vpack.c.b16 %v1256, %v1255
        %v1285 = vpack.c.b16 %v1258, %v1257
        %v1286 = vpack.c.b16 %v1260, %v1259
        %v1287 = vpack.c.b16 %v1262, %v1261
        %v1288 = vpack.c.b16 %v1264, %v1263
        %v1289 = vpack.c.b16 %v1266, %v1265
        %v1290 = vpack.c.b16 %v1268, %v1267
        %v1291 = vpack.c.b16 %v1270, %v1269
        %v1292 = vpack.c.b16 %v1272, %v1271
        %v1293 = vpack.c.b16 %v1274, %v1273
        %v1294 = vpack.c.b16 %v1276, %v1275
        %v1295 = vpack.c.b16 %v1278, %v1277
        %v1296 = vpack.c.b16 %v1280, %v1279
        %v1329 = vunpack.c.l.b16 %v672
        %v1330 = vunpack.c.l.b16 %v673
        %v1331 = vunpack.c.l.b16 %v674
        %v1332 = vunpack.c.l.b16 %v675
        %v1333 = vunpack.c.l.b16 %v676
        %v1334 = vunpack.c.l.b16 %v677
        %v1335 = vunpack.c.l.b16 %v678
        %v1336 = vunpack.c.l.b16 %v679
        %v1337 = vunpack.c.l.b16 %v680
        %v1338 = vunpack.c.l.b16 %v681
        %v1339 = vunpack.c.l.b16 %v682
        %v1340 = vunpack.c.l.b16 %v683
        %v1341 = vunpack.c.l.b16 %v684
        %v1342 = vunpack.c.l.b16 %v685
        %v1343 = vunpack.c.l.b16 %v686
        %v1344 = vunpack.c.l.b16 %v687
        %v1345 = vunpack.c.l.b16 %v688
        %v1346 = vunpack.c.l.b16 %v689
        %v1347 = vunpack.c.l.b16 %v690
        %v1348 = vunpack.c.l.b16 %v691
        %v1349 = vunpack.c.l.b16 %v692
        %v1350 = vunpack.c.l.b16 %v693
        %v1351 = vunpack.c.l.b16 %v694
        %v1352 = vunpack.c.l.b16 %v695
        %v1353 = vunpack.c.l.b16 %v696
        %v1354 = vunpack.c.l.b16 %v697
        %v1355 = vunpack.c.l.b16 %v698
        %v1356 = vunpack.c.l.b16 %v699
        %v1357 = vunpack.c.l.b16 %v700
        %v1358 = vunpack.c.l.b16 %v701
        %v1359 = vunpack.c.l.b16 %v702
        %v1360 = vunpack.c.l.b16 %v703
        %v1361 = vpack.c.b16 %v1330, %v1329
        %v1362 = vpack.c.b16 %v1332, %v1331
        %v1363 = vpack.c.b16 %v1334, %v1333
        %v1364 = vpack.c.b16 %v1336, %v1335
        %v1365 = vpack.c.b16 %v1338, %v1337
        %v1366 = vpack.c.b16 %v1340, %v1339
        %v1367 = vpack.c.b16 %v1342, %v1341
        %v1368 = vpack.c.b16 %v1344, %v1343
        %v1369 = vpack.c.b16 %v1346, %v1345
        %v1370 = vpack.c.b16 %v1348, %v1347
        %v1371 = vpack.c.b16 %v1350, %v1349
        %v1372 = vpack.c.b16 %v1352, %v1351
        %v1373 = vpack.c.b16 %v1354, %v1353
        %v1374 = vpack.c.b16 %v1356, %v1355
        %v1375 = vpack.c.b16 %v1358, %v1357
        %v1376 = vpack.c.b16 %v1360, %v1359
        %1377 = vrot.lane.b32.xlu0 %v1361, 64
        %v1378 = vpop.permute.xlu0 %1377
        %1379 = vrot.lane.b32.xlu0 %v1362, 64
        %v1380 = vpop.permute.xlu0 %1379
        %1381 = vrot.lane.b32.xlu0 %v1363, 64
        %v1382 = vpop.permute.xlu0 %1381
        %1383 = vrot.lane.b32.xlu0 %v1364, 64
        %v1384 = vpop.permute.xlu0 %1383
        %1385 = vrot.lane.b32.xlu0 %v1365, 64
        %v1386 = vpop.permute.xlu0 %1385
        %1387 = vrot.lane.b32.xlu0 %v1366, 64
        %v1388 = vpop.permute.xlu0 %1387
        %1389 = vrot.lane.b32.xlu0 %v1367, 64
        %v1390 = vpop.permute.xlu0 %1389
        %1391 = vrot.lane.b32.xlu0 %v1368, 64
        %v1392 = vpop.permute.xlu0 %1391
        %1393 = vrot.lane.b32.xlu0 %v1369, 64
        %v1394 = vpop.permute.xlu0 %1393
        %1395 = vrot.lane.b32.xlu0 %v1370, 64
        %v1396 = vpop.permute.xlu0 %1395
        %1397 = vrot.lane.b32.xlu0 %v1371, 64
        %v1398 = vpop.permute.xlu0 %1397
        %1399 = vrot.lane.b32.xlu0 %v1372, 64
        %v1400 = vpop.permute.xlu0 %1399
        %1401 = vrot.lane.b32.xlu0 %v1373, 64
        %v1402 = vpop.permute.xlu0 %1401
        %1403 = vrot.lane.b32.xlu0 %v1374, 64
        %v1404 = vpop.permute.xlu0 %1403
        %1405 = vrot.lane.b32.xlu0 %v1375, 64
        %v1406 = vpop.permute.xlu0 %1405
        %1407 = vrot.lane.b32.xlu0 %v1376, 64
        %v1408 = vpop.permute.xlu0 %1407
        %v1441 = vunpack.c.l.b16 %v736
        %v1442 = vunpack.c.l.b16 %v737
        %v1443 = vunpack.c.l.b16 %v738
        %v1444 = vunpack.c.l.b16 %v739
        %v1445 = vunpack.c.l.b16 %v740
        %v1446 = vunpack.c.l.b16 %v741
        %v1447 = vunpack.c.l.b16 %v742
        %v1448 = vunpack.c.l.b16 %v743
        %v1449 = vunpack.c.l.b16 %v744
        %v1450 = vunpack.c.l.b16 %v745
        %v1451 = vunpack.c.l.b16 %v746
        %v1452 = vunpack.c.l.b16 %v747
        %v1453 = vunpack.c.l.b16 %v748
        %v1454 = vunpack.c.l.b16 %v749
        %v1455 = vunpack.c.l.b16 %v750
        %v1456 = vunpack.c.l.b16 %v751
        %v1457 = vunpack.c.l.b16 %v752
        %v1458 = vunpack.c.l.b16 %v753
        %v1459 = vunpack.c.l.b16 %v754
        %v1460 = vunpack.c.l.b16 %v755
        %v1461 = vunpack.c.l.b16 %v756
        %v1462 = vunpack.c.l.b16 %v757
        %v1463 = vunpack.c.l.b16 %v758
        %v1464 = vunpack.c.l.b16 %v759
        %v1465 = vunpack.c.l.b16 %v760
        %v1466 = vunpack.c.l.b16 %v761
        %v1467 = vunpack.c.l.b16 %v762
        %v1468 = vunpack.c.l.b16 %v763
        %v1469 = vunpack.c.l.b16 %v764
        %v1470 = vunpack.c.l.b16 %v765
        %v1471 = vunpack.c.l.b16 %v766
        %v1472 = vunpack.c.l.b16 %v767
        %v1473 = vpack.c.b16 %v1442, %v1441
        %v1474 = vpack.c.b16 %v1444, %v1443
        %v1475 = vpack.c.b16 %v1446, %v1445
        %v1476 = vpack.c.b16 %v1448, %v1447
        %v1477 = vpack.c.b16 %v1450, %v1449
        %v1478 = vpack.c.b16 %v1452, %v1451
        %v1479 = vpack.c.b16 %v1454, %v1453
        %v1480 = vpack.c.b16 %v1456, %v1455
        %v1481 = vpack.c.b16 %v1458, %v1457
        %v1482 = vpack.c.b16 %v1460, %v1459
        %v1483 = vpack.c.b16 %v1462, %v1461
        %v1484 = vpack.c.b16 %v1464, %v1463
        %v1485 = vpack.c.b16 %v1466, %v1465
        %v1486 = vpack.c.b16 %v1468, %v1467
        %v1487 = vpack.c.b16 %v1470, %v1469
        %v1488 = vpack.c.b16 %v1472, %v1471
        %v1521 = vunpack.c.l.b16 %v800
        %v1522 = vunpack.c.l.b16 %v801
        %v1523 = vunpack.c.l.b16 %v802
        %v1524 = vunpack.c.l.b16 %v803
        %v1525 = vunpack.c.l.b16 %v804
        %v1526 = vunpack.c.l.b16 %v805
        %v1527 = vunpack.c.l.b16 %v806
        %v1528 = vunpack.c.l.b16 %v807
        %v1529 = vunpack.c.l.b16 %v808
        %v1530 = vunpack.c.l.b16 %v809
        %v1531 = vunpack.c.l.b16 %v810
        %v1532 = vunpack.c.l.b16 %v811
        %v1533 = vunpack.c.l.b16 %v812
        %v1534 = vunpack.c.l.b16 %v813
        %v1535 = vunpack.c.l.b16 %v814
        %v1536 = vunpack.c.l.b16 %v815
        %v1537 = vunpack.c.l.b16 %v816
        %v1538 = vunpack.c.l.b16 %v817
        %v1539 = vunpack.c.l.b16 %v818
        %v1540 = vunpack.c.l.b16 %v819
        %v1541 = vunpack.c.l.b16 %v820
        %v1542 = vunpack.c.l.b16 %v821
        %v1543 = vunpack.c.l.b16 %v822
        %v1544 = vunpack.c.l.b16 %v823
        %v1545 = vunpack.c.l.b16 %v824
        %v1546 = vunpack.c.l.b16 %v825
        %v1547 = vunpack.c.l.b16 %v826
        %v1548 = vunpack.c.l.b16 %v827
        %v1549 = vunpack.c.l.b16 %v828
        %v1550 = vunpack.c.l.b16 %v829
        %v1551 = vunpack.c.l.b16 %v830
        %v1552 = vunpack.c.l.b16 %v831
        %v1553 = vpack.c.b16 %v1522, %v1521
        %v1554 = vpack.c.b16 %v1524, %v1523
        %v1555 = vpack.c.b16 %v1526, %v1525
        %v1556 = vpack.c.b16 %v1528, %v1527
        %v1557 = vpack.c.b16 %v1530, %v1529
        %v1558 = vpack.c.b16 %v1532, %v1531
        %v1559 = vpack.c.b16 %v1534, %v1533
        %v1560 = vpack.c.b16 %v1536, %v1535
        %v1561 = vpack.c.b16 %v1538, %v1537
        %v1562 = vpack.c.b16 %v1540, %v1539
        %v1563 = vpack.c.b16 %v1542, %v1541
        %v1564 = vpack.c.b16 %v1544, %v1543
        %v1565 = vpack.c.b16 %v1546, %v1545
        %v1566 = vpack.c.b16 %v1548, %v1547
        %v1567 = vpack.c.b16 %v1550, %v1549
        %v1568 = vpack.c.b16 %v1552, %v1551
        %1569 = vrot.lane.b32.xlu0 %v1553, 64
        %v1570 = vpop.permute.xlu0 %1569
        %1571 = vrot.lane.b32.xlu0 %v1554, 64
        %v1572 = vpop.permute.xlu0 %1571
        %1573 = vrot.lane.b32.xlu0 %v1555, 64
        %v1574 = vpop.permute.xlu0 %1573
        %1575 = vrot.lane.b32.xlu0 %v1556, 64
        %v1576 = vpop.permute.xlu0 %1575
        %1577 = vrot.lane.b32.xlu0 %v1557, 64
        %v1578 = vpop.permute.xlu0 %1577
        %1579 = vrot.lane.b32.xlu0 %v1558, 64
        %v1580 = vpop.permute.xlu0 %1579
        %1581 = vrot.lane.b32.xlu0 %v1559, 64
        %v1582 = vpop.permute.xlu0 %1581
        %1583 = vrot.lane.b32.xlu0 %v1560, 64
        %v1584 = vpop.permute.xlu0 %1583
        %1585 = vrot.lane.b32.xlu0 %v1561, 64
        %v1586 = vpop.permute.xlu0 %1585
        %1587 = vrot.lane.b32.xlu0 %v1562, 64
        %v1588 = vpop.permute.xlu0 %1587
        %1589 = vrot.lane.b32.xlu0 %v1563, 64
        %v1590 = vpop.permute.xlu0 %1589
        %1591 = vrot.lane.b32.xlu0 %v1564, 64
        %v1592 = vpop.permute.xlu0 %1591
        %1593 = vrot.lane.b32.xlu0 %v1565, 64
        %v1594 = vpop.permute.xlu0 %1593
        %1595 = vrot.lane.b32.xlu0 %v1566, 64
        %v1596 = vpop.permute.xlu0 %1595
        %1597 = vrot.lane.b32.xlu0 %v1567, 64
        %v1598 = vpop.permute.xlu0 %1597
        %1599 = vrot.lane.b32.xlu0 %v1568, 64
        %v1600 = vpop.permute.xlu0 %1599
        %v1633 = vunpack.c.l.b16 %v865
        %v1634 = vunpack.c.l.b16 %v866
        %v1635 = vunpack.c.l.b16 %v867
        %v1636 = vunpack.c.l.b16 %v868
        %v1637 = vunpack.c.l.b16 %v869
        %v1638 = vunpack.c.l.b16 %v870
        %v1639 = vunpack.c.l.b16 %v871
        %v1640 = vunpack.c.l.b16 %v872
        %v1641 = vunpack.c.l.b16 %v873
        %v1642 = vunpack.c.l.b16 %v874
        %v1643 = vunpack.c.l.b16 %v875
        %v1644 = vunpack.c.l.b16 %v876
        %v1645 = vunpack.c.l.b16 %v877
        %v1646 = vunpack.c.l.b16 %v878
        %v1647 = vunpack.c.l.b16 %v879
        %v1648 = vunpack.c.l.b16 %v880
        %v1649 = vunpack.c.l.b16 %v881
        %v1650 = vunpack.c.l.b16 %v882
        %v1651 = vunpack.c.l.b16 %v883
        %v1652 = vunpack.c.l.b16 %v884
        %v1653 = vunpack.c.l.b16 %v885
        %v1654 = vunpack.c.l.b16 %v886
        %v1655 = vunpack.c.l.b16 %v887
        %v1656 = vunpack.c.l.b16 %v888
        %v1657 = vunpack.c.l.b16 %v889
        %v1658 = vunpack.c.l.b16 %v890
        %v1659 = vunpack.c.l.b16 %v891
        %v1660 = vunpack.c.l.b16 %v892
        %v1661 = vunpack.c.l.b16 %v893
        %v1662 = vunpack.c.l.b16 %v894
        %v1663 = vunpack.c.l.b16 %v895
        %v1664 = vunpack.c.l.b16 %v896
        %v1665 = vpack.c.b16 %v1634, %v1633
        %v1666 = vpack.c.b16 %v1636, %v1635
        %v1667 = vpack.c.b16 %v1638, %v1637
        %v1668 = vpack.c.b16 %v1640, %v1639
        %v1669 = vpack.c.b16 %v1642, %v1641
        %v1670 = vpack.c.b16 %v1644, %v1643
        %v1671 = vpack.c.b16 %v1646, %v1645
        %v1672 = vpack.c.b16 %v1648, %v1647
        %v1673 = vpack.c.b16 %v1650, %v1649
        %v1674 = vpack.c.b16 %v1652, %v1651
        %v1675 = vpack.c.b16 %v1654, %v1653
        %v1676 = vpack.c.b16 %v1656, %v1655
        %v1677 = vpack.c.b16 %v1658, %v1657
        %v1678 = vpack.c.b16 %v1660, %v1659
        %v1679 = vpack.c.b16 %v1662, %v1661
        %v1680 = vpack.c.b16 %v1664, %v1663
        %v1713 = vunpack.c.l.b16 %v929
        %v1714 = vunpack.c.l.b16 %v930
        %v1715 = vunpack.c.l.b16 %v931
        %v1716 = vunpack.c.l.b16 %v932
        %v1717 = vunpack.c.l.b16 %v933
        %v1718 = vunpack.c.l.b16 %v934
        %v1719 = vunpack.c.l.b16 %v935
        %v1720 = vunpack.c.l.b16 %v936
        %v1721 = vunpack.c.l.b16 %v937
        %v1722 = vunpack.c.l.b16 %v938
        %v1723 = vunpack.c.l.b16 %v939
        %v1724 = vunpack.c.l.b16 %v940
        %v1725 = vunpack.c.l.b16 %v941
        %v1726 = vunpack.c.l.b16 %v942
        %v1727 = vunpack.c.l.b16 %v943
        %v1728 = vunpack.c.l.b16 %v944
        %v1729 = vunpack.c.l.b16 %v945
        %v1730 = vunpack.c.l.b16 %v946
        %v1731 = vunpack.c.l.b16 %v947
        %v1732 = vunpack.c.l.b16 %v948
        %v1733 = vunpack.c.l.b16 %v949
        %v1734 = vunpack.c.l.b16 %v950
        %v1735 = vunpack.c.l.b16 %v951
        %v1736 = vunpack.c.l.b16 %v952
        %v1737 = vunpack.c.l.b16 %v953
        %v1738 = vunpack.c.l.b16 %v954
        %v1739 = vunpack.c.l.b16 %v955
        %v1740 = vunpack.c.l.b16 %v956
        %v1741 = vunpack.c.l.b16 %v957
        %v1742 = vunpack.c.l.b16 %v958
        %v1743 = vunpack.c.l.b16 %v959
        %v1744 = vunpack.c.l.b16 %v960
        %v1745 = vpack.c.b16 %v1714, %v1713
        %v1746 = vpack.c.b16 %v1716, %v1715
        %v1747 = vpack.c.b16 %v1718, %v1717
        %v1748 = vpack.c.b16 %v1720, %v1719
        %v1749 = vpack.c.b16 %v1722, %v1721
        %v1750 = vpack.c.b16 %v1724, %v1723
        %v1751 = vpack.c.b16 %v1726, %v1725
        %v1752 = vpack.c.b16 %v1728, %v1727
        %v1753 = vpack.c.b16 %v1730, %v1729
        %v1754 = vpack.c.b16 %v1732, %v1731
        %v1755 = vpack.c.b16 %v1734, %v1733
        %v1756 = vpack.c.b16 %v1736, %v1735
        %v1757 = vpack.c.b16 %v1738, %v1737
        %v1758 = vpack.c.b16 %v1740, %v1739
        %v1759 = vpack.c.b16 %v1742, %v1741
        %v1760 = vpack.c.b16 %v1744, %v1743
        %1761 = vrot.lane.b32.xlu0 %v1745, 64
        %v1762 = vpop.permute.xlu0 %1761
        %1763 = vrot.lane.b32.xlu0 %v1746, 64
        %v1764 = vpop.permute.xlu0 %1763
        %1765 = vrot.lane.b32.xlu0 %v1747, 64
        %v1766 = vpop.permute.xlu0 %1765
        %1767 = vrot.lane.b32.xlu0 %v1748, 64
        %v1768 = vpop.permute.xlu0 %1767
        %1769 = vrot.lane.b32.xlu0 %v1749, 64
        %v1770 = vpop.permute.xlu0 %1769
        %1771 = vrot.lane.b32.xlu0 %v1750, 64
        %v1772 = vpop.permute.xlu0 %1771
        %1773 = vrot.lane.b32.xlu0 %v1751, 64
        %v1774 = vpop.permute.xlu0 %1773
        %1775 = vrot.lane.b32.xlu0 %v1752, 64
        %v1776 = vpop.permute.xlu0 %1775
        %1777 = vrot.lane.b32.xlu0 %v1753, 64
        %v1778 = vpop.permute.xlu0 %1777
        %1779 = vrot.lane.b32.xlu0 %v1754, 64
        %v1780 = vpop.permute.xlu0 %1779
        %1781 = vrot.lane.b32.xlu0 %v1755, 64
        %v1782 = vpop.permute.xlu0 %1781
        %1783 = vrot.lane.b32.xlu0 %v1756, 64
        %v1784 = vpop.permute.xlu0 %1783
        %1785 = vrot.lane.b32.xlu0 %v1757, 64
        %v1786 = vpop.permute.xlu0 %1785
        %1787 = vrot.lane.b32.xlu0 %v1758, 64
        %v1788 = vpop.permute.xlu0 %1787
        %1789 = vrot.lane.b32.xlu0 %v1759, 64
        %v1790 = vpop.permute.xlu0 %1789
        %1791 = vrot.lane.b32.xlu0 %v1760, 64
        %v1792 = vpop.permute.xlu0 %1791
        %v1825 = vunpack.c.l.b16 %v993
        %v1826 = vunpack.c.l.b16 %v994
        %v1827 = vunpack.c.l.b16 %v995
        %v1828 = vunpack.c.l.b16 %v996
        %v1829 = vunpack.c.l.b16 %v997
        %v1830 = vunpack.c.l.b16 %v998
        %v1831 = vunpack.c.l.b16 %v999
        %v1832 = vunpack.c.l.b16 %v1000
        %v1833 = vunpack.c.l.b16 %v1001
        %v1834 = vunpack.c.l.b16 %v1002
        %v1835 = vunpack.c.l.b16 %v1003
        %v1836 = vunpack.c.l.b16 %v1004
        %v1837 = vunpack.c.l.b16 %v1005
        %v1838 = vunpack.c.l.b16 %v1006
        %v1839 = vunpack.c.l.b16 %v1007
        %v1840 = vunpack.c.l.b16 %v1008
        %v1841 = vunpack.c.l.b16 %v1009
        %v1842 = vunpack.c.l.b16 %v1010
        %v1843 = vunpack.c.l.b16 %v1011
        %v1844 = vunpack.c.l.b16 %v1012
        %v1845 = vunpack.c.l.b16 %v1013
        %v1846 = vunpack.c.l.b16 %v1014
        %v1847 = vunpack.c.l.b16 %v1015
        %v1848 = vunpack.c.l.b16 %v1016
        %v1849 = vunpack.c.l.b16 %v1017
        %v1850 = vunpack.c.l.b16 %v1018
        %v1851 = vunpack.c.l.b16 %v1019
        %v1852 = vunpack.c.l.b16 %v1020
        %v1853 = vunpack.c.l.b16 %v1021
        %v1854 = vunpack.c.l.b16 %v1022
        %v1855 = vunpack.c.l.b16 %v1023
        %v1856 = vunpack.c.l.b16 %v1024
        %v1857 = vpack.c.b16 %v1826, %v1825
        %v1858 = vpack.c.b16 %v1828, %v1827
        %v1859 = vpack.c.b16 %v1830, %v1829
        %v1860 = vpack.c.b16 %v1832, %v1831
        %v1861 = vpack.c.b16 %v1834, %v1833
        %v1862 = vpack.c.b16 %v1836, %v1835
        %v1863 = vpack.c.b16 %v1838, %v1837
        %v1864 = vpack.c.b16 %v1840, %v1839
        %v1865 = vpack.c.b16 %v1842, %v1841
        %v1866 = vpack.c.b16 %v1844, %v1843
        %v1867 = vpack.c.b16 %v1846, %v1845
        %v1868 = vpack.c.b16 %v1848, %v1847
        %v1869 = vpack.c.b16 %v1850, %v1849
        %v1870 = vpack.c.b16 %v1852, %v1851
        %v1871 = vpack.c.b16 %v1854, %v1853
        %v1872 = vpack.c.b16 %v1856, %v1855
        %v1875 = vsel %vm294, %v1089, %v1186
        %v1879 = vsel %vm294, %v1090, %v1188
        %v1883 = vsel %vm294, %v1091, %v1190
        %v1887 = vsel %vm294, %v1092, %v1192
        %v1891 = vsel %vm294, %v1093, %v1194
        %v1895 = vsel %vm294, %v1094, %v1196
        %v1899 = vsel %vm294, %v1095, %v1198
        %v1903 = vsel %vm294, %v1096, %v1200
        %v1907 = vsel %vm294, %v1097, %v1202
        %v1911 = vsel %vm294, %v1098, %v1204
        %v1915 = vsel %vm294, %v1099, %v1206
        %v1919 = vsel %vm294, %v1100, %v1208
        %v1923 = vsel %vm294, %v1101, %v1210
        %v1927 = vsel %vm294, %v1102, %v1212
        %v1931 = vsel %vm294, %v1103, %v1214
        %v1935 = vsel %vm294, %v1104, %v1216
        %v1939 = vsel %vm294, %v1281, %v1378
        %v1943 = vsel %vm294, %v1282, %v1380
        %v1947 = vsel %vm294, %v1283, %v1382
        %v1951 = vsel %vm294, %v1284, %v1384
        %v1955 = vsel %vm294, %v1285, %v1386
        %v1959 = vsel %vm294, %v1286, %v1388
        %v1963 = vsel %vm294, %v1287, %v1390
        %v1967 = vsel %vm294, %v1288, %v1392
        %v1971 = vsel %vm294, %v1289, %v1394
        %v1975 = vsel %vm294, %v1290, %v1396
        %v1979 = vsel %vm294, %v1291, %v1398
        %v1983 = vsel %vm294, %v1292, %v1400
        %v1987 = vsel %vm294, %v1293, %v1402
        %v1991 = vsel %vm294, %v1294, %v1404
        %v1995 = vsel %vm294, %v1295, %v1406
        %v1999 = vsel %vm294, %v1296, %v1408
        %v2003 = vsel %vm294, %v1473, %v1570
        %v2007 = vsel %vm294, %v1474, %v1572
        %v2011 = vsel %vm294, %v1475, %v1574
        %v2015 = vsel %vm294, %v1476, %v1576
        %v2019 = vsel %vm294, %v1477, %v1578
        %v2023 = vsel %vm294, %v1478, %v1580
        %v2027 = vsel %vm294, %v1479, %v1582
        %v2031 = vsel %vm294, %v1480, %v1584
        %v2035 = vsel %vm294, %v1481, %v1586
        %v2039 = vsel %vm294, %v1482, %v1588
        %v2043 = vsel %vm294, %v1483, %v1590
        %v2047 = vsel %vm294, %v1484, %v1592
        %v2051 = vsel %vm294, %v1485, %v1594
        %v2055 = vsel %vm294, %v1486, %v1596
        %v2059 = vsel %vm294, %v1487, %v1598
        %v2063 = vsel %vm294, %v1488, %v1600
        %v2067 = vsel %vm294, %v1665, %v1762
        %v2071 = vsel %vm294, %v1666, %v1764
        %v2075 = vsel %vm294, %v1667, %v1766
        %v2079 = vsel %vm294, %v1668, %v1768
        %v2083 = vsel %vm294, %v1669, %v1770
        %v2087 = vsel %vm294, %v1670, %v1772
        %v2091 = vsel %vm294, %v1671, %v1774
        %v2095 = vsel %vm294, %v1672, %v1776
        %v2099 = vsel %vm294, %v1673, %v1778
        %v2103 = vsel %vm294, %v1674, %v1780
        %v2107 = vsel %vm294, %v1675, %v1782
        %v2111 = vsel %vm294, %v1676, %v1784
        %v2115 = vsel %vm294, %v1677, %v1786
        %v2119 = vsel %vm294, %v1678, %v1788
        %v2123 = vsel %vm294, %v1679, %v1790
        %v2127 = vsel %vm294, %v1680, %v1792
        %v2129 = vld [vmem:[#allocation7] sm:$0xf]
        %v2130 = vld [vmem:[#allocation7 + $0x4] sm:$0xf]
        %v2131 = vld [vmem:[#allocation7 + $0x8] sm:$0xf]
        %v2132 = vld [vmem:[#allocation7 + $0xc] sm:$0xf]
        %v2133 = vld [vmem:[#allocation7 + $0x10] sm:$0xf]
        %v2134 = vld [vmem:[#allocation7 + $0x14] sm:$0xf]
        %v2135 = vld [vmem:[#allocation7 + $0x18] sm:$0xf]
        %v2136 = vld [vmem:[#allocation7 + $0x1c] sm:$0xf]
        %v2137 = vld [vmem:[#allocation7 + $0x20] sm:$0xf]
        %v2138 = vld [vmem:[#allocation7 + $0x24] sm:$0xf]
        %v2139 = vld [vmem:[#allocation7 + $0x28] sm:$0xf]
        %v2140 = vld [vmem:[#allocation7 + $0x2c] sm:$0xf]
        %v2141 = vld [vmem:[#allocation7 + $0x30] sm:$0xf]
        %v2142 = vld [vmem:[#allocation7 + $0x34] sm:$0xf]
        %v2143 = vld [vmem:[#allocation7 + $0x38] sm:$0xf]
        %v2144 = vld [vmem:[#allocation7 + $0x3c] sm:$0xf]
        %v2145 = vld [vmem:[#allocation7 + $0x40] sm:$0xf]
        %v2146 = vld [vmem:[#allocation7 + $0x44] sm:$0xf]
        %v2147 = vld [vmem:[#allocation7 + $0x48] sm:$0xf]
        %v2148 = vld [vmem:[#allocation7 + $0x4c] sm:$0xf]
        %v2149 = vld [vmem:[#allocation7 + $0x50] sm:$0xf]
        %v2150 = vld [vmem:[#allocation7 + $0x54] sm:$0xf]
        %v2151 = vld [vmem:[#allocation7 + $0x58] sm:$0xf]
        %v2152 = vld [vmem:[#allocation7 + $0x5c] sm:$0xf]
        %v2153 = vld [vmem:[#allocation7 + $0x60] sm:$0xf]
        %v2154 = vld [vmem:[#allocation7 + $0x64] sm:$0xf]
        %v2155 = vld [vmem:[#allocation7 + $0x68] sm:$0xf]
        %v2156 = vld [vmem:[#allocation7 + $0x6c] sm:$0xf]
        %v2157 = vld [vmem:[#allocation7 + $0x70] sm:$0xf]
        %v2158 = vld [vmem:[#allocation7 + $0x74] sm:$0xf]
        %v2159 = vld [vmem:[#allocation7 + $0x78] sm:$0xf]
        %v2160 = vld [vmem:[#allocation7 + $0x7c] sm:$0xf]
        %v2161 = vld [vmem:[#allocation7 + $0x80] sm:$0xf]
        %v2162 = vld [vmem:[#allocation7 + $0x84] sm:$0xf]
        %v2163 = vld [vmem:[#allocation7 + $0x88] sm:$0xf]
        %v2164 = vld [vmem:[#allocation7 + $0x8c] sm:$0xf]
        %v2165 = vld [vmem:[#allocation7 + $0x90] sm:$0xf]
        %v2166 = vld [vmem:[#allocation7 + $0x94] sm:$0xf]
        %v2167 = vld [vmem:[#allocation7 + $0x98] sm:$0xf]
        %v2168 = vld [vmem:[#allocation7 + $0x9c] sm:$0xf]
        %v2169 = vld [vmem:[#allocation7 + $0xa0] sm:$0xf]
        %v2170 = vld [vmem:[#allocation7 + $0xa4] sm:$0xf]
        %v2171 = vld [vmem:[#allocation7 + $0xa8] sm:$0xf]
        %v2172 = vld [vmem:[#allocation7 + $0xac] sm:$0xf]
        %v2173 = vld [vmem:[#allocation7 + $0xb0] sm:$0xf]
        %v2174 = vld [vmem:[#allocation7 + $0xb4] sm:$0xf]
        %v2175 = vld [vmem:[#allocation7 + $0xb8] sm:$0xf]
        %v2176 = vld [vmem:[#allocation7 + $0xbc] sm:$0xf]
        %v2177 = vld [vmem:[#allocation7 + $0xc0] sm:$0xf]
        %v2178 = vld [vmem:[#allocation7 + $0xc4] sm:$0xf]
        %v2179 = vld [vmem:[#allocation7 + $0xc8] sm:$0xf]
        %v2180 = vld [vmem:[#allocation7 + $0xcc] sm:$0xf]
        %v2181 = vld [vmem:[#allocation7 + $0xd0] sm:$0xf]
        %v2182 = vld [vmem:[#allocation7 + $0xd4] sm:$0xf]
        %v2183 = vld [vmem:[#allocation7 + $0xd8] sm:$0xf]
        %v2184 = vld [vmem:[#allocation7 + $0xdc] sm:$0xf]
        %v2185 = vld [vmem:[#allocation7 + $0xe0] sm:$0xf]
        %v2186 = vld [vmem:[#allocation7 + $0xe4] sm:$0xf]
        %v2187 = vld [vmem:[#allocation7 + $0xe8] sm:$0xf]
        %v2188 = vld [vmem:[#allocation7 + $0xec] sm:$0xf]
        %v2189 = vld [vmem:[#allocation7 + $0xf0] sm:$0xf]
        %v2190 = vld [vmem:[#allocation7 + $0xf4] sm:$0xf]
        %v2191 = vld [vmem:[#allocation7 + $0xf8] sm:$0xf]
        %v2192 = vld [vmem:[#allocation7 + $0xfc] sm:$0xf]
        %v2193 = vld [vmem:[#allocation7 + $0x100] sm:$0xf]
        %v2194 = vld [vmem:[#allocation7 + $0x104] sm:$0xf]
        %v2195 = vld [vmem:[#allocation7 + $0x108] sm:$0xf]
        %v2196 = vld [vmem:[#allocation7 + $0x10c] sm:$0xf]
        %v2197 = vld [vmem:[#allocation7 + $0x110] sm:$0xf]
        %v2198 = vld [vmem:[#allocation7 + $0x114] sm:$0xf]
        %v2199 = vld [vmem:[#allocation7 + $0x118] sm:$0xf]
        %v2200 = vld [vmem:[#allocation7 + $0x11c] sm:$0xf]
        %v2201 = vld [vmem:[%s2] sm:$0x1]
        %v2203 = vperm.slane %v2201, 0
        %v2277 = vunpack.c.l.b16 %v2129
        %v2278 = vunpack.c.l.b16 %v2130
        %v2279 = vunpack.c.l.b16 %v2131
        %v2280 = vunpack.c.l.b16 %v2132
        %v2281 = vunpack.c.l.b16 %v2133
        %v2282 = vunpack.c.l.b16 %v2134
        %v2283 = vunpack.c.l.b16 %v2135
        %v2284 = vunpack.c.l.b16 %v2136
        %v2285 = vunpack.c.l.b16 %v2137
        %v2286 = vunpack.c.l.b16 %v2138
        %v2287 = vunpack.c.l.b16 %v2139
        %v2288 = vunpack.c.l.b16 %v2140
        %v2289 = vunpack.c.l.b16 %v2141
        %v2290 = vunpack.c.l.b16 %v2142
        %v2291 = vunpack.c.l.b16 %v2143
        %v2292 = vunpack.c.l.b16 %v2144
        %v2293 = vunpack.c.l.b16 %v2145
        %v2294 = vunpack.c.l.b16 %v2146
        %v2295 = vunpack.c.l.b16 %v2147
        %v2296 = vunpack.c.l.b16 %v2148
        %v2297 = vunpack.c.l.b16 %v2149
        %v2298 = vunpack.c.l.b16 %v2150
        %v2299 = vunpack.c.l.b16 %v2151
        %v2300 = vunpack.c.l.b16 %v2152
        %v2301 = vunpack.c.l.b16 %v2153
        %v2302 = vunpack.c.l.b16 %v2154
        %v2303 = vunpack.c.l.b16 %v2155
        %v2304 = vunpack.c.l.b16 %v2156
        %v2305 = vunpack.c.l.b16 %v2157
        %v2306 = vunpack.c.l.b16 %v2158
        %v2307 = vunpack.c.l.b16 %v2159
        %v2308 = vunpack.c.l.b16 %v2160
        %v2309 = vunpack.c.l.b16 %v2161
        %v2310 = vunpack.c.l.b16 %v2162
        %v2311 = vunpack.c.l.b16 %v2163
        %v2312 = vunpack.c.l.b16 %v2164
        %v2313 = vunpack.c.l.b16 %v2165
        %v2314 = vunpack.c.l.b16 %v2166
        %v2315 = vunpack.c.l.b16 %v2167
        %v2316 = vunpack.c.l.b16 %v2168
        %v2317 = vunpack.c.l.b16 %v2169
        %v2318 = vunpack.c.l.b16 %v2170
        %v2319 = vunpack.c.l.b16 %v2171
        %v2320 = vunpack.c.l.b16 %v2172
        %v2321 = vunpack.c.l.b16 %v2173
        %v2322 = vunpack.c.l.b16 %v2174
        %v2323 = vunpack.c.l.b16 %v2175
        %v2324 = vunpack.c.l.b16 %v2176
        %v2325 = vunpack.c.l.b16 %v2177
        %v2326 = vunpack.c.l.b16 %v2178
        %v2327 = vunpack.c.l.b16 %v2179
        %v2328 = vunpack.c.l.b16 %v2180
        %v2329 = vunpack.c.l.b16 %v2181
        %v2330 = vunpack.c.l.b16 %v2182
        %v2331 = vunpack.c.l.b16 %v2183
        %v2332 = vunpack.c.l.b16 %v2184
        %v2333 = vunpack.c.l.b16 %v2185
        %v2334 = vunpack.c.l.b16 %v2186
        %v2335 = vunpack.c.l.b16 %v2187
        %v2336 = vunpack.c.l.b16 %v2188
        %v2337 = vunpack.c.l.b16 %v2189
        %v2338 = vunpack.c.l.b16 %v2190
        %v2339 = vunpack.c.l.b16 %v2191
        %v2340 = vunpack.c.l.b16 %v2192
        %v2341 = vunpack.c.l.b16 %v2193
        %v2342 = vunpack.c.l.b16 %v2194
        %v2343 = vunpack.c.l.b16 %v2195
        %v2344 = vunpack.c.l.b16 %v2196
        %v2345 = vunpack.c.l.b16 %v2197
        %v2346 = vunpack.c.l.b16 %v2198
        %v2347 = vunpack.c.l.b16 %v2199
        %v2348 = vunpack.c.l.b16 %v2200
        %v2349 = vpack.c.b16 %v2278, %v2277
        %v2350 = vpack.c.b16 %v2280, %v2279
        %v2351 = vpack.c.b16 %v2282, %v2281
        %v2352 = vpack.c.b16 %v2284, %v2283
        %v2353 = vpack.c.b16 %v2286, %v2285
        %v2354 = vpack.c.b16 %v2288, %v2287
        %v2355 = vpack.c.b16 %v2290, %v2289
        %v2356 = vpack.c.b16 %v2292, %v2291
        %v2357 = vpack.c.b16 %v2294, %v2293
        %v2358 = vpack.c.b16 %v2296, %v2295
        %v2359 = vpack.c.b16 %v2298, %v2297
        %v2360 = vpack.c.b16 %v2300, %v2299
        %v2361 = vpack.c.b16 %v2302, %v2301
        %v2362 = vpack.c.b16 %v2304, %v2303
        %v2363 = vpack.c.b16 %v2306, %v2305
        %v2364 = vpack.c.b16 %v2308, %v2307
        %v2365 = vpack.c.b16 %v2310, %v2309
        %v2366 = vpack.c.b16 %v2312, %v2311
        %v2367 = vpack.c.b16 %v2314, %v2313
        %v2368 = vpack.c.b16 %v2316, %v2315
        %v2369 = vpack.c.b16 %v2318, %v2317
        %v2370 = vpack.c.b16 %v2320, %v2319
        %v2371 = vpack.c.b16 %v2322, %v2321
        %v2372 = vpack.c.b16 %v2324, %v2323
        %v2373 = vpack.c.b16 %v2326, %v2325
        %v2374 = vpack.c.b16 %v2328, %v2327
        %v2375 = vpack.c.b16 %v2330, %v2329
        %v2376 = vpack.c.b16 %v2332, %v2331
        %v2377 = vpack.c.b16 %v2334, %v2333
        %v2378 = vpack.c.b16 %v2336, %v2335
        %v2379 = vpack.c.b16 %v2338, %v2337
        %v2380 = vpack.c.b16 %v2340, %v2339
        %v2381 = vpack.c.b16 %v2342, %v2341
        %v2382 = vpack.c.b16 %v2344, %v2343
        %v2383 = vpack.c.b16 %v2346, %v2345
        %v2384 = vpack.c.b16 %v2348, %v2347
        %v2422 = vsel %vm294, %v1857, 0
        %v2425 = vsel %vm294, %v1858, 0
        %v2428 = vsel %vm294, %v1859, 0
        %v2431 = vsel %vm294, %v1860, 0
        %v2434 = vsel %vm294, %v1861, 0
        %v2437 = vsel %vm294, %v1862, 0
        %v2440 = vsel %vm294, %v1863, 0
        %v2443 = vsel %vm294, %v1864, 0
        %v2446 = vsel %vm294, %v1865, 0
        %v2449 = vsel %vm294, %v1866, 0
        %v2452 = vsel %vm294, %v1867, 0
        %v2455 = vsel %vm294, %v1868, 0
        %v2458 = vsel %vm294, %v1869, 0
        %v2461 = vsel %vm294, %v1870, 0
        %v2464 = vsel %vm294, %v1871, 0
        %v2467 = vsel %vm294, %v1872, 0
        %2469 = vmatpush.bf16.msra.mxu0 %v2356
        %2470 = vmatpush.bf16.msra.mxu0 %v2355
        %2471 = vmatpush.bf16.msra.mxu0 %v2354
        %2472 = vmatpush.bf16.msra.mxu0 %v2353
        %2473 = vmatpush.bf16.msra.mxu0 %v2352
        %2474 = vmatpush.bf16.msra.mxu0 %v2351
        %2475 = vmatpush.bf16.msra.mxu0 %v2350
        %2476 = vmatpush.bf16.msra.mxu0 %v2349
        %2477 = vmatmul.bf16.gmra.mxu0 %v1875
        %v2478 = vpop.f32.mrf.mxu0
        %v2479 = vadd.f32 %v2203, %v2478
        %v2480 = vpop.f32.mrf.mxu0
        %v2481 = vadd.f32 %v2203, %v2480
        %2482 = vmatmul.bf16.gmra.mxu0 %v1879
        %v2483 = vpop.f32.mrf.mxu0
        %v2484 = vadd.f32 %v2203, %v2483
        %v2485 = vpop.f32.mrf.mxu0
        %v2486 = vadd.f32 %v2203, %v2485
        %2487 = vmatmul.bf16.gmra.mxu0 %v1883
        %v2488 = vpop.f32.mrf.mxu0
        %v2489 = vadd.f32 %v2203, %v2488
        %v2490 = vpop.f32.mrf.mxu0
        %v2491 = vadd.f32 %v2203, %v2490
        %2492 = vmatmul.bf16.gmra.mxu0 %v1887
        %v2493 = vpop.f32.mrf.mxu0
        %v2494 = vadd.f32 %v2203, %v2493
        %v2495 = vpop.f32.mrf.mxu0
        %v2496 = vadd.f32 %v2203, %v2495
        %2497 = vmatmul.bf16.gmra.mxu0 %v1891
        %v2498 = vpop.f32.mrf.mxu0
        %v2499 = vadd.f32 %v2203, %v2498
        %v2500 = vpop.f32.mrf.mxu0
        %v2501 = vadd.f32 %v2203, %v2500
        %2502 = vmatmul.bf16.gmra.mxu0 %v1895
        %v2503 = vpop.f32.mrf.mxu0
        %v2504 = vadd.f32 %v2203, %v2503
        %v2505 = vpop.f32.mrf.mxu0
        %v2506 = vadd.f32 %v2203, %v2505
        %2507 = vmatmul.bf16.gmra.mxu0 %v1899
        %v2508 = vpop.f32.mrf.mxu0
        %v2509 = vadd.f32 %v2203, %v2508
        %v2510 = vpop.f32.mrf.mxu0
        %v2511 = vadd.f32 %v2203, %v2510
        %2512 = vmatmul.bf16.gmra.mxu0 %v1903
        %v2513 = vpop.f32.mrf.mxu0
        %v2514 = vadd.f32 %v2203, %v2513
        %v2515 = vpop.f32.mrf.mxu0
        %v2516 = vadd.f32 %v2203, %v2515
        %2517 = vmatmul.bf16.gmra.mxu0 %v1907
        %v2518 = vpop.f32.mrf.mxu0
        %v2519 = vadd.f32 %v2203, %v2518
        %v2520 = vpop.f32.mrf.mxu0
        %v2521 = vadd.f32 %v2203, %v2520
        %2522 = vmatmul.bf16.gmra.mxu0 %v1911
        %v2523 = vpop.f32.mrf.mxu0
        %v2524 = vadd.f32 %v2203, %v2523
        %v2525 = vpop.f32.mrf.mxu0
        %v2526 = vadd.f32 %v2203, %v2525
        %2527 = vmatmul.bf16.gmra.mxu0 %v1915
        %v2528 = vpop.f32.mrf.mxu0
        %v2529 = vadd.f32 %v2203, %v2528
        %v2530 = vpop.f32.mrf.mxu0
        %v2531 = vadd.f32 %v2203, %v2530
        %2532 = vmatmul.bf16.gmra.mxu0 %v1919
        %v2533 = vpop.f32.mrf.mxu0
        %v2534 = vadd.f32 %v2203, %v2533
        %v2535 = vpop.f32.mrf.mxu0
        %v2536 = vadd.f32 %v2203, %v2535
        %2537 = vmatmul.bf16.gmra.mxu0 %v1923
        %v2538 = vpop.f32.mrf.mxu0
        %v2539 = vadd.f32 %v2203, %v2538
        %v2540 = vpop.f32.mrf.mxu0
        %v2541 = vadd.f32 %v2203, %v2540
        %2542 = vmatmul.bf16.gmra.mxu0 %v1927
        %v2543 = vpop.f32.mrf.mxu0
        %v2544 = vadd.f32 %v2203, %v2543
        %v2545 = vpop.f32.mrf.mxu0
        %v2546 = vadd.f32 %v2203, %v2545
        %2547 = vmatmul.bf16.gmra.mxu0 %v1931
        %v2548 = vpop.f32.mrf.mxu0
        %v2549 = vadd.f32 %v2203, %v2548
        %v2550 = vpop.f32.mrf.mxu0
        %v2551 = vadd.f32 %v2203, %v2550
        %2552 = vmatmul.bf16.gmra.mxu0 %v1935
        %v2553 = vpop.f32.mrf.mxu0
        %v2554 = vadd.f32 %v2203, %v2553
        %v2555 = vpop.f32.mrf.mxu0
        %v2556 = vadd.f32 %v2203, %v2555
        %2557 = vdwg.mxu0
        %2558 = vmatpush.bf16.msra.mxu0 %v2364
        %2559 = vmatpush.bf16.msra.mxu0 %v2363
        %2560 = vmatpush.bf16.msra.mxu0 %v2362
        %2561 = vmatpush.bf16.msra.mxu0 %v2361
        %2562 = vmatpush.bf16.msra.mxu0 %v2360
        %2563 = vmatpush.bf16.msra.mxu0 %v2359
        %2564 = vmatpush.bf16.msra.mxu0 %v2358
        %2565 = vmatpush.bf16.msra.mxu0 %v2357
        %2566 = vmatmul.bf16.gmra.mxu0 %v1939
        %v2567 = vpop.f32.mrf.mxu0
        %v2568 = vadd.f32 %v2479, %v2567
        %v2569 = vpop.f32.mrf.mxu0
        %v2570 = vadd.f32 %v2481, %v2569
        %2571 = vmatmul.bf16.gmra.mxu0 %v1943
        %v2572 = vpop.f32.mrf.mxu0
        %v2573 = vadd.f32 %v2484, %v2572
        %v2574 = vpop.f32.mrf.mxu0
        %v2575 = vadd.f32 %v2486, %v2574
        %2576 = vmatmul.bf16.gmra.mxu0 %v1947
        %v2577 = vpop.f32.mrf.mxu0
        %v2578 = vadd.f32 %v2489, %v2577
        %v2579 = vpop.f32.mrf.mxu0
        %v2580 = vadd.f32 %v2491, %v2579
        %2581 = vmatmul.bf16.gmra.mxu0 %v1951
        %v2582 = vpop.f32.mrf.mxu0
        %v2583 = vadd.f32 %v2494, %v2582
        %v2584 = vpop.f32.mrf.mxu0
        %v2585 = vadd.f32 %v2496, %v2584
        %2586 = vmatmul.bf16.gmra.mxu0 %v1955
        %v2587 = vpop.f32.mrf.mxu0
        %v2588 = vadd.f32 %v2499, %v2587
        %v2589 = vpop.f32.mrf.mxu0
        %v2590 = vadd.f32 %v2501, %v2589
        %2591 = vmatmul.bf16.gmra.mxu0 %v1959
        %v2592 = vpop.f32.mrf.mxu0
        %v2593 = vadd.f32 %v2504, %v2592
        %v2594 = vpop.f32.mrf.mxu0
        %v2595 = vadd.f32 %v2506, %v2594
        %2596 = vmatmul.bf16.gmra.mxu0 %v1963
        %v2597 = vpop.f32.mrf.mxu0
        %v2598 = vadd.f32 %v2509, %v2597
        %v2599 = vpop.f32.mrf.mxu0
        %v2600 = vadd.f32 %v2511, %v2599
        %2601 = vmatmul.bf16.gmra.mxu0 %v1967
        %v2602 = vpop.f32.mrf.mxu0
        %v2603 = vadd.f32 %v2514, %v2602
        %v2604 = vpop.f32.mrf.mxu0
        %v2605 = vadd.f32 %v2516, %v2604
        %2606 = vmatmul.bf16.gmra.mxu0 %v1971
        %v2607 = vpop.f32.mrf.mxu0
        %v2608 = vadd.f32 %v2519, %v2607
        %v2609 = vpop.f32.mrf.mxu0
        %v2610 = vadd.f32 %v2521, %v2609
        %2611 = vmatmul.bf16.gmra.mxu0 %v1975
        %v2612 = vpop.f32.mrf.mxu0
        %v2613 = vadd.f32 %v2524, %v2612
        %v2614 = vpop.f32.mrf.mxu0
        %v2615 = vadd.f32 %v2526, %v2614
        %2616 = vmatmul.bf16.gmra.mxu0 %v1979
        %v2617 = vpop.f32.mrf.mxu0
        %v2618 = vadd.f32 %v2529, %v2617
        %v2619 = vpop.f32.mrf.mxu0
        %v2620 = vadd.f32 %v2531, %v2619
        %2621 = vmatmul.bf16.gmra.mxu0 %v1983
        %v2622 = vpop.f32.mrf.mxu0
        %v2623 = vadd.f32 %v2534, %v2622
        %v2624 = vpop.f32.mrf.mxu0
        %v2625 = vadd.f32 %v2536, %v2624
        %2626 = vmatmul.bf16.gmra.mxu0 %v1987
        %v2627 = vpop.f32.mrf.mxu0
        %v2628 = vadd.f32 %v2539, %v2627
        %v2629 = vpop.f32.mrf.mxu0
        %v2630 = vadd.f32 %v2541, %v2629
        %2631 = vmatmul.bf16.gmra.mxu0 %v1991
        %v2632 = vpop.f32.mrf.mxu0
        %v2633 = vadd.f32 %v2544, %v2632
        %v2634 = vpop.f32.mrf.mxu0
        %v2635 = vadd.f32 %v2546, %v2634
        %2636 = vmatmul.bf16.gmra.mxu0 %v1995
        %v2637 = vpop.f32.mrf.mxu0
        %v2638 = vadd.f32 %v2549, %v2637
        %v2639 = vpop.f32.mrf.mxu0
        %v2640 = vadd.f32 %v2551, %v2639
        %2641 = vmatmul.bf16.gmra.mxu0 %v1999
        %v2642 = vpop.f32.mrf.mxu0
        %v2643 = vadd.f32 %v2554, %v2642
        %v2644 = vpop.f32.mrf.mxu0
        %v2645 = vadd.f32 %v2556, %v2644
        %2646 = vdwg.mxu0
        %2647 = vmatpush.bf16.msra.mxu0 %v2372
        %2648 = vmatpush.bf16.msra.mxu0 %v2371
        %2649 = vmatpush.bf16.msra.mxu0 %v2370
        %2650 = vmatpush.bf16.msra.mxu0 %v2369
        %2651 = vmatpush.bf16.msra.mxu0 %v2368
        %2652 = vmatpush.bf16.msra.mxu0 %v2367
        %2653 = vmatpush.bf16.msra.mxu0 %v2366
        %2654 = vmatpush.bf16.msra.mxu0 %v2365
        %2655 = vmatmul.bf16.gmra.mxu0 %v2003
        %v2656 = vpop.f32.mrf.mxu0
        %v2657 = vadd.f32 %v2568, %v2656
        %v2658 = vpop.f32.mrf.mxu0
        %v2659 = vadd.f32 %v2570, %v2658
        %2660 = vmatmul.bf16.gmra.mxu0 %v2007
        %v2661 = vpop.f32.mrf.mxu0
        %v2662 = vadd.f32 %v2573, %v2661
        %v2663 = vpop.f32.mrf.mxu0
        %v2664 = vadd.f32 %v2575, %v2663
        %2665 = vmatmul.bf16.gmra.mxu0 %v2011
        %v2666 = vpop.f32.mrf.mxu0
        %v2667 = vadd.f32 %v2578, %v2666
        %v2668 = vpop.f32.mrf.mxu0
        %v2669 = vadd.f32 %v2580, %v2668
        %2670 = vmatmul.bf16.gmra.mxu0 %v2015
        %v2671 = vpop.f32.mrf.mxu0
        %v2672 = vadd.f32 %v2583, %v2671
        %v2673 = vpop.f32.mrf.mxu0
        %v2674 = vadd.f32 %v2585, %v2673
        %2675 = vmatmul.bf16.gmra.mxu0 %v2019
        %v2676 = vpop.f32.mrf.mxu0
        %v2677 = vadd.f32 %v2588, %v2676
        %v2678 = vpop.f32.mrf.mxu0
        %v2679 = vadd.f32 %v2590, %v2678
        %2680 = vmatmul.bf16.gmra.mxu0 %v2023
        %v2681 = vpop.f32.mrf.mxu0
        %v2682 = vadd.f32 %v2593, %v2681
        %v2683 = vpop.f32.mrf.mxu0
        %v2684 = vadd.f32 %v2595, %v2683
        %2685 = vmatmul.bf16.gmra.mxu0 %v2027
        %v2686 = vpop.f32.mrf.mxu0
        %v2687 = vadd.f32 %v2598, %v2686
        %v2688 = vpop.f32.mrf.mxu0
        %v2689 = vadd.f32 %v2600, %v2688
        %2690 = vmatmul.bf16.gmra.mxu0 %v2031
        %v2691 = vpop.f32.mrf.mxu0
        %v2692 = vadd.f32 %v2603, %v2691
        %v2693 = vpop.f32.mrf.mxu0
        %v2694 = vadd.f32 %v2605, %v2693
        %2695 = vmatmul.bf16.gmra.mxu0 %v2035
        %v2696 = vpop.f32.mrf.mxu0
        %v2697 = vadd.f32 %v2608, %v2696
        %v2698 = vpop.f32.mrf.mxu0
        %v2699 = vadd.f32 %v2610, %v2698
        %2700 = vmatmul.bf16.gmra.mxu0 %v2039
        %v2701 = vpop.f32.mrf.mxu0
        %v2702 = vadd.f32 %v2613, %v2701
        %v2703 = vpop.f32.mrf.mxu0
        %v2704 = vadd.f32 %v2615, %v2703
        %2705 = vmatmul.bf16.gmra.mxu0 %v2043
        %v2706 = vpop.f32.mrf.mxu0
        %v2707 = vadd.f32 %v2618, %v2706
        %v2708 = vpop.f32.mrf.mxu0
        %v2709 = vadd.f32 %v2620, %v2708
        %2710 = vmatmul.bf16.gmra.mxu0 %v2047
        %v2711 = vpop.f32.mrf.mxu0
        %v2712 = vadd.f32 %v2623, %v2711
        %v2713 = vpop.f32.mrf.mxu0
        %v2714 = vadd.f32 %v2625, %v2713
        %2715 = vmatmul.bf16.gmra.mxu0 %v2051
        %v2716 = vpop.f32.mrf.mxu0
        %v2717 = vadd.f32 %v2628, %v2716
        %v2718 = vpop.f32.mrf.mxu0
        %v2719 = vadd.f32 %v2630, %v2718
        %2720 = vmatmul.bf16.gmra.mxu0 %v2055
        %v2721 = vpop.f32.mrf.mxu0
        %v2722 = vadd.f32 %v2633, %v2721
        %v2723 = vpop.f32.mrf.mxu0
        %v2724 = vadd.f32 %v2635, %v2723
        %2725 = vmatmul.bf16.gmra.mxu0 %v2059
        %v2726 = vpop.f32.mrf.mxu0
        %v2727 = vadd.f32 %v2638, %v2726
        %v2728 = vpop.f32.mrf.mxu0
        %v2729 = vadd.f32 %v2640, %v2728
        %2730 = vmatmul.bf16.gmra.mxu0 %v2063
        %v2731 = vpop.f32.mrf.mxu0
        %v2732 = vadd.f32 %v2643, %v2731
        %v2733 = vpop.f32.mrf.mxu0
        %v2734 = vadd.f32 %v2645, %v2733
        %2735 = vdwg.mxu0
        %2736 = vmatpush.bf16.msra.mxu0 %v2380
        %2737 = vmatpush.bf16.msra.mxu0 %v2379
        %2738 = vmatpush.bf16.msra.mxu0 %v2378
        %2739 = vmatpush.bf16.msra.mxu0 %v2377
        %2740 = vmatpush.bf16.msra.mxu0 %v2376
        %2741 = vmatpush.bf16.msra.mxu0 %v2375
        %2742 = vmatpush.bf16.msra.mxu0 %v2374
        %2743 = vmatpush.bf16.msra.mxu0 %v2373
        %2744 = vmatmul.bf16.gmra.mxu0 %v2067
        %v2745 = vpop.f32.mrf.mxu0
        %v2746 = vadd.f32 %v2657, %v2745
        %v2747 = vpop.f32.mrf.mxu0
        %v2748 = vadd.f32 %v2659, %v2747
        %2749 = vmatmul.bf16.gmra.mxu0 %v2071
        %v2750 = vpop.f32.mrf.mxu0
        %v2751 = vadd.f32 %v2662, %v2750
        %v2752 = vpop.f32.mrf.mxu0
        %v2753 = vadd.f32 %v2664, %v2752
        %2754 = vmatmul.bf16.gmra.mxu0 %v2075
        %v2755 = vpop.f32.mrf.mxu0
        %v2756 = vadd.f32 %v2667, %v2755
        %v2757 = vpop.f32.mrf.mxu0
        %v2758 = vadd.f32 %v2669, %v2757
        %2759 = vmatmul.bf16.gmra.mxu0 %v2079
        %v2760 = vpop.f32.mrf.mxu0
        %v2761 = vadd.f32 %v2672, %v2760
        %v2762 = vpop.f32.mrf.mxu0
        %v2763 = vadd.f32 %v2674, %v2762
        %2764 = vmatmul.bf16.gmra.mxu0 %v2083
        %v2765 = vpop.f32.mrf.mxu0
        %v2766 = vadd.f32 %v2677, %v2765
        %v2767 = vpop.f32.mrf.mxu0
        %v2768 = vadd.f32 %v2679, %v2767
        %2769 = vmatmul.bf16.gmra.mxu0 %v2087
        %v2770 = vpop.f32.mrf.mxu0
        %v2771 = vadd.f32 %v2682, %v2770
        %v2772 = vpop.f32.mrf.mxu0
        %v2773 = vadd.f32 %v2684, %v2772
        %2774 = vmatmul.bf16.gmra.mxu0 %v2091
        %v2775 = vpop.f32.mrf.mxu0
        %v2776 = vadd.f32 %v2687, %v2775
        %v2777 = vpop.f32.mrf.mxu0
        %v2778 = vadd.f32 %v2689, %v2777
        %2779 = vmatmul.bf16.gmra.mxu0 %v2095
        %v2780 = vpop.f32.mrf.mxu0
        %v2781 = vadd.f32 %v2692, %v2780
        %v2782 = vpop.f32.mrf.mxu0
        %v2783 = vadd.f32 %v2694, %v2782
        %2784 = vmatmul.bf16.gmra.mxu0 %v2099
        %v2785 = vpop.f32.mrf.mxu0
        %v2786 = vadd.f32 %v2697, %v2785
        %v2787 = vpop.f32.mrf.mxu0
        %v2788 = vadd.f32 %v2699, %v2787
        %2789 = vmatmul.bf16.gmra.mxu0 %v2103
        %v2790 = vpop.f32.mrf.mxu0
        %v2791 = vadd.f32 %v2702, %v2790
        %v2792 = vpop.f32.mrf.mxu0
        %v2793 = vadd.f32 %v2704, %v2792
        %2794 = vmatmul.bf16.gmra.mxu0 %v2107
        %v2795 = vpop.f32.mrf.mxu0
        %v2796 = vadd.f32 %v2707, %v2795
        %v2797 = vpop.f32.mrf.mxu0
        %v2798 = vadd.f32 %v2709, %v2797
        %2799 = vmatmul.bf16.gmra.mxu0 %v2111
        %v2800 = vpop.f32.mrf.mxu0
        %v2801 = vadd.f32 %v2712, %v2800
        %v2802 = vpop.f32.mrf.mxu0
        %v2803 = vadd.f32 %v2714, %v2802
        %2804 = vmatmul.bf16.gmra.mxu0 %v2115
        %v2805 = vpop.f32.mrf.mxu0
        %v2806 = vadd.f32 %v2717, %v2805
        %v2807 = vpop.f32.mrf.mxu0
        %v2808 = vadd.f32 %v2719, %v2807
        %2809 = vmatmul.bf16.gmra.mxu0 %v2119
        %v2810 = vpop.f32.mrf.mxu0
        %v2811 = vadd.f32 %v2722, %v2810
        %v2812 = vpop.f32.mrf.mxu0
        %v2813 = vadd.f32 %v2724, %v2812
        %2814 = vmatmul.bf16.gmra.mxu0 %v2123
        %v2815 = vpop.f32.mrf.mxu0
        %v2816 = vadd.f32 %v2727, %v2815
        %v2817 = vpop.f32.mrf.mxu0
        %v2818 = vadd.f32 %v2729, %v2817
        %2819 = vmatmul.bf16.gmra.mxu0 %v2127
        %v2820 = vpop.f32.mrf.mxu0
        %v2821 = vadd.f32 %v2732, %v2820
        %v2822 = vpop.f32.mrf.mxu0
        %v2823 = vadd.f32 %v2734, %v2822
        %2824 = vdwg.mxu0
        %2825 = vmatpush.bf16.msra.mxu0 0
        %2826 = vmatpush.bf16.msra.mxu0 0
        %2827 = vmatpush.bf16.msra.mxu0 0
        %2828 = vmatpush.bf16.msra.mxu0 0
        %2829 = vmatpush.bf16.msra.mxu0 %v2384
        %2830 = vmatpush.bf16.msra.mxu0 %v2383
        %2831 = vmatpush.bf16.msra.mxu0 %v2382
        %2832 = vmatpush.bf16.msra.mxu0 %v2381
        %2833 = vmatmul.bf16.gmra.mxu0 %v2422
        %v2834 = vpop.f32.mrf.mxu0
        %v2835 = vadd.f32 %v2746, %v2834
        %v2836 = vpop.f32.mrf.mxu0
        %v2837 = vadd.f32 %v2748, %v2836
        %2838 = vmatmul.bf16.gmra.mxu0 %v2425
        %v2839 = vpop.f32.mrf.mxu0
        %v2840 = vadd.f32 %v2751, %v2839
        %v2841 = vpop.f32.mrf.mxu0
        %v2842 = vadd.f32 %v2753, %v2841
        %2843 = vmatmul.bf16.gmra.mxu0 %v2428
        %v2844 = vpop.f32.mrf.mxu0
        %v2845 = vadd.f32 %v2756, %v2844
        %v2846 = vpop.f32.mrf.mxu0
        %v2847 = vadd.f32 %v2758, %v2846
        %2848 = vmatmul.bf16.gmra.mxu0 %v2431
        %v2849 = vpop.f32.mrf.mxu0
        %v2850 = vadd.f32 %v2761, %v2849
        %v2851 = vpop.f32.mrf.mxu0
        %v2852 = vadd.f32 %v2763, %v2851
        %2853 = vmatmul.bf16.gmra.mxu0 %v2434
        %v2854 = vpop.f32.mrf.mxu0
        %v2855 = vadd.f32 %v2766, %v2854
        %v2856 = vpop.f32.mrf.mxu0
        %v2857 = vadd.f32 %v2768, %v2856
        %2858 = vmatmul.bf16.gmra.mxu0 %v2437
        %v2859 = vpop.f32.mrf.mxu0
        %v2860 = vadd.f32 %v2771, %v2859
        %v2861 = vpop.f32.mrf.mxu0
        %v2862 = vadd.f32 %v2773, %v2861
        %2863 = vmatmul.bf16.gmra.mxu0 %v2440
        %v2864 = vpop.f32.mrf.mxu0
        %v2865 = vadd.f32 %v2776, %v2864
        %v2866 = vpop.f32.mrf.mxu0
        %v2867 = vadd.f32 %v2778, %v2866
        %2868 = vmatmul.bf16.gmra.mxu0 %v2443
        %v2869 = vpop.f32.mrf.mxu0
        %v2870 = vadd.f32 %v2781, %v2869
        %v2871 = vpop.f32.mrf.mxu0
        %v2872 = vadd.f32 %v2783, %v2871
        %2873 = vmatmul.bf16.gmra.mxu0 %v2446
        %v2874 = vpop.f32.mrf.mxu0
        %v2875 = vadd.f32 %v2786, %v2874
        %v2876 = vpop.f32.mrf.mxu0
        %v2877 = vadd.f32 %v2788, %v2876
        %2878 = vmatmul.bf16.gmra.mxu0 %v2449
        %v2879 = vpop.f32.mrf.mxu0
        %v2880 = vadd.f32 %v2791, %v2879
        %v2881 = vpop.f32.mrf.mxu0
        %v2882 = vadd.f32 %v2793, %v2881
        %2883 = vmatmul.bf16.gmra.mxu0 %v2452
        %v2884 = vpop.f32.mrf.mxu0
        %v2885 = vadd.f32 %v2796, %v2884
        %v2886 = vpop.f32.mrf.mxu0
        %v2887 = vadd.f32 %v2798, %v2886
        %2888 = vmatmul.bf16.gmra.mxu0 %v2455
        %v2889 = vpop.f32.mrf.mxu0
        %v2890 = vadd.f32 %v2801, %v2889
        %v2891 = vpop.f32.mrf.mxu0
        %v2892 = vadd.f32 %v2803, %v2891
        %2893 = vmatmul.bf16.gmra.mxu0 %v2458
        %v2894 = vpop.f32.mrf.mxu0
        %v2895 = vadd.f32 %v2806, %v2894
        %v2896 = vpop.f32.mrf.mxu0
        %v2897 = vadd.f32 %v2808, %v2896
        %2898 = vmatmul.bf16.gmra.mxu0 %v2461
        %v2899 = vpop.f32.mrf.mxu0
        %v2900 = vadd.f32 %v2811, %v2899
        %v2901 = vpop.f32.mrf.mxu0
        %v2902 = vadd.f32 %v2813, %v2901
        %2903 = vmatmul.bf16.gmra.mxu0 %v2464
        %v2904 = vpop.f32.mrf.mxu0
        %v2905 = vadd.f32 %v2816, %v2904
        %v2906 = vpop.f32.mrf.mxu0
        %v2907 = vadd.f32 %v2818, %v2906
        %2908 = vmatmul.bf16.gmra.mxu0 %v2467
        %v2909 = vpop.f32.mrf.mxu0
        %v2910 = vadd.f32 %v2821, %v2909
        %v2911 = vpop.f32.mrf.mxu0
        %v2912 = vadd.f32 %v2823, %v2911
        %2913 = vdwg.mxu0
        %v2914 = vmax.f32 %v2835, 0.0
        %v2915 = vmax.f32 %v2837, 0.0
        %v2916 = vmax.f32 %v2840, 0.0
        %v2917 = vmax.f32 %v2842, 0.0
        %v2918 = vmax.f32 %v2845, 0.0
        %v2919 = vmax.f32 %v2847, 0.0
        %v2920 = vmax.f32 %v2850, 0.0
        %v2921 = vmax.f32 %v2852, 0.0
        %v2922 = vmax.f32 %v2855, 0.0
        %v2923 = vmax.f32 %v2857, 0.0
        %v2924 = vmax.f32 %v2860, 0.0
        %v2925 = vmax.f32 %v2862, 0.0
        %v2926 = vmax.f32 %v2865, 0.0
        %v2927 = vmax.f32 %v2867, 0.0
        %v2928 = vmax.f32 %v2870, 0.0
        %v2929 = vmax.f32 %v2872, 0.0
        %v2930 = vmax.f32 %v2875, 0.0
        %v2931 = vmax.f32 %v2877, 0.0
        %v2932 = vmax.f32 %v2880, 0.0
        %v2933 = vmax.f32 %v2882, 0.0
        %v2934 = vmax.f32 %v2885, 0.0
        %v2935 = vmax.f32 %v2887, 0.0
        %v2936 = vmax.f32 %v2890, 0.0
        %v2937 = vmax.f32 %v2892, 0.0
        %v2938 = vmax.f32 %v2895, 0.0
        %v2939 = vmax.f32 %v2897, 0.0
        %v2940 = vmax.f32 %v2900, 0.0
        %v2941 = vmax.f32 %v2902, 0.0
        %v2942 = vmax.f32 %v2905, 0.0
        %v2943 = vmax.f32 %v2907, 0.0
        %v2944 = vmax.f32 %v2910, 0.0
        %v2945 = vmax.f32 %v2912, 0.0
        %2946 = vst.msk [vmem:[%s351 + $0x2] sm:$0xff] %vm294, %v2914
        %2947 = vst.msk [vmem:[%s351 + $0xa] sm:$0xff] %vm294, %v2915
        %2948 = vst.msk [vmem:[%s351 + $0x1a] sm:$0xff] %vm294, %v2916
        %2949 = vst.msk [vmem:[%s351 + $0x22] sm:$0xff] %vm294, %v2917
        %2950 = vst.msk [vmem:[%s351 + $0x32] sm:$0xff] %vm294, %v2918
        %2951 = vst.msk [vmem:[%s351 + $0x3a] sm:$0xff] %vm294, %v2919
        %2952 = vst.msk [vmem:[%s351 + $0x4a] sm:$0xff] %vm294, %v2920
        %2953 = vst.msk [vmem:[%s351 + $0x52] sm:$0xff] %vm294, %v2921
        %2954 = vst.msk [vmem:[%s351 + $0x62] sm:$0xff] %vm294, %v2922
        %2955 = vst.msk [vmem:[%s351 + $0x6a] sm:$0xff] %vm294, %v2923
        %2956 = vst.msk [vmem:[%s351 + $0x7a] sm:$0xff] %vm294, %v2924
        %2957 = vst.msk [vmem:[%s351 + $0x82] sm:$0xff] %vm294, %v2925
        %2958 = vst.msk [vmem:[%s351 + $0x92] sm:$0xff] %vm294, %v2926
        %2959 = vst.msk [vmem:[%s351 + $0x9a] sm:$0xff] %vm294, %v2927
        %2960 = vst.msk [vmem:[%s351 + $0xaa] sm:$0xff] %vm294, %v2928
        %2961 = vst.msk [vmem:[%s351 + $0xb2] sm:$0xff] %vm294, %v2929
        %2962 = vst.msk [vmem:[%s351 + $0xc2] sm:$0xff] %vm294, %v2930
        %2963 = vst.msk [vmem:[%s351 + $0xca] sm:$0xff] %vm294, %v2931
        %2964 = vst.msk [vmem:[%s351 + $0xda] sm:$0xff] %vm294, %v2932
        %2965 = vst.msk [vmem:[%s351 + $0xe2] sm:$0xff] %vm294, %v2933
        %2966 = vst.msk [vmem:[%s351 + $0xf2] sm:$0xff] %vm294, %v2934
        %2967 = vst.msk [vmem:[%s351 + $0xfa] sm:$0xff] %vm294, %v2935
        %2968 = vst.msk [vmem:[%s351 + $0x10a] sm:$0xff] %vm294, %v2936
        %2969 = vst.msk [vmem:[%s351 + $0x112] sm:$0xff] %vm294, %v2937
        %2970 = vst.msk [vmem:[%s351 + $0x122] sm:$0xff] %vm294, %v2938
        %2971 = vst.msk [vmem:[%s351 + $0x12a] sm:$0xff] %vm294, %v2939
        %2972 = vst.msk [vmem:[%s351 + $0x13a] sm:$0xff] %vm294, %v2940
        %2973 = vst.msk [vmem:[%s351 + $0x142] sm:$0xff] %vm294, %v2941
        %2974 = vst.msk [vmem:[%s351 + $0x152] sm:$0xff] %vm294, %v2942
        %2975 = vst.msk [vmem:[%s351 + $0x15a] sm:$0xff] %vm294, %v2943
        %2976 = vst.msk [vmem:[%s351 + $0x16a] sm:$0xff] %vm294, %v2944
        %2977 = vst.msk [vmem:[%s351 + $0x172] sm:$0xff] %vm294, %v2945
        %v2978 = vld [vmem:[#allocation3] sm:$0xff]
        %v2979 = vld [vmem:[#allocation3 + $0x8] sm:$0xff]
        %v2980 = vld [vmem:[#allocation3 + $0x18] sm:$0xff]
        %v2981 = vld [vmem:[#allocation3 + $0x20] sm:$0xff]
        %v2982 = vld [vmem:[#allocation3 + $0x30] sm:$0xff]
        %v2983 = vld [vmem:[#allocation3 + $0x38] sm:$0xff]
        %v2984 = vld [vmem:[#allocation3 + $0x48] sm:$0xff]
        %v2985 = vld [vmem:[#allocation3 + $0x50] sm:$0xff]
        %v2986 = vld [vmem:[#allocation3 + $0x60] sm:$0xff]
        %v2987 = vld [vmem:[#allocation3 + $0x68] sm:$0xff]
        %v2988 = vld [vmem:[#allocation3 + $0x78] sm:$0xff]
        %v2989 = vld [vmem:[#allocation3 + $0x80] sm:$0xff]
        %v2990 = vld [vmem:[#allocation3 + $0x90] sm:$0xff]
        %v2991 = vld [vmem:[#allocation3 + $0x98] sm:$0xff]
        %v2992 = vld [vmem:[#allocation3 + $0xa8] sm:$0xff]
        %v2993 = vld [vmem:[#allocation3 + $0xb0] sm:$0xff]
        %v2994 = vld [vmem:[#allocation3 + $0xc0] sm:$0xff]
        %v2995 = vld [vmem:[#allocation3 + $0xc8] sm:$0xff]
        %v2996 = vld [vmem:[#allocation3 + $0xd8] sm:$0xff]
        %v2997 = vld [vmem:[#allocation3 + $0xe0] sm:$0xff]
        %v2998 = vld [vmem:[#allocation3 + $0xf0] sm:$0xff]
        %v2999 = vld [vmem:[#allocation3 + $0xf8] sm:$0xff]
        %v3000 = vld [vmem:[#allocation3 + $0x108] sm:$0xff]
        %v3001 = vld [vmem:[#allocation3 + $0x110] sm:$0xff]
        %v3002 = vld [vmem:[#allocation3 + $0x120] sm:$0xff]
        %v3003 = vld [vmem:[#allocation3 + $0x128] sm:$0xff]
        %v3004 = vld [vmem:[#allocation3 + $0x138] sm:$0xff]
        %v3005 = vld [vmem:[#allocation3 + $0x140] sm:$0xff]
        %v3006 = vld [vmem:[#allocation3 + $0x150] sm:$0xff]
        %v3007 = vld [vmem:[#allocation3 + $0x158] sm:$0xff]
        %v3008 = vld [vmem:[#allocation3 + $0x168] sm:$0xff]
        %v3009 = vld [vmem:[#allocation3 + $0x170] sm:$0xff]
        %v3010 = vpack.c.bf16 %v2978, %v2978
        %v3011 = vpack.c.bf16 %v2979, %v2979
        %v3012 = vpack.c.bf16 %v2980, %v2980
        %v3013 = vpack.c.bf16 %v2981, %v2981
        %v3014 = vpack.c.bf16 %v2982, %v2982
        %v3015 = vpack.c.bf16 %v2983, %v2983
        %v3016 = vpack.c.bf16 %v2984, %v2984
        %v3017 = vpack.c.bf16 %v2985, %v2985
        %v3018 = vpack.c.bf16 %v2986, %v2986
        %v3019 = vpack.c.bf16 %v2987, %v2987
        %v3020 = vpack.c.bf16 %v2988, %v2988
        %v3021 = vpack.c.bf16 %v2989, %v2989
        %v3022 = vpack.c.bf16 %v2990, %v2990
        %v3023 = vpack.c.bf16 %v2991, %v2991
        %v3024 = vpack.c.bf16 %v2992, %v2992
        %v3025 = vpack.c.bf16 %v2993, %v2993
        %v3026 = vpack.c.bf16 %v2994, %v2994
        %v3027 = vpack.c.bf16 %v2995, %v2995
        %v3028 = vpack.c.bf16 %v2996, %v2996
        %v3029 = vpack.c.bf16 %v2997, %v2997
        %v3030 = vpack.c.bf16 %v2998, %v2998
        %v3031 = vpack.c.bf16 %v2999, %v2999
        %v3032 = vpack.c.bf16 %v3000, %v3000
        %v3033 = vpack.c.bf16 %v3001, %v3001
        %v3034 = vpack.c.bf16 %v3002, %v3002
        %v3035 = vpack.c.bf16 %v3003, %v3003
        %v3036 = vpack.c.bf16 %v3004, %v3004
        %v3037 = vpack.c.bf16 %v3005, %v3005
        %v3038 = vpack.c.bf16 %v3006, %v3006
        %v3039 = vpack.c.bf16 %v3007, %v3007
        %v3040 = vpack.c.bf16 %v3008, %v3008
        %v3041 = vpack.c.bf16 %v3009, %v3009
        %v3042 = vld [vmem:[#allocation3 + $0x2] sm:$0xff]
        %v3043 = vld [vmem:[#allocation3 + $0xa] sm:$0xff]
        %v3044 = vld [vmem:[#allocation3 + $0x1a] sm:$0xff]
        %v3045 = vld [vmem:[#allocation3 + $0x22] sm:$0xff]
        %v3046 = vld [vmem:[#allocation3 + $0x32] sm:$0xff]
        %v3047 = vld [vmem:[#allocation3 + $0x3a] sm:$0xff]
        %v3048 = vld [vmem:[#allocation3 + $0x4a] sm:$0xff]
        %v3049 = vld [vmem:[#allocation3 + $0x52] sm:$0xff]
        %v3050 = vld [vmem:[#allocation3 + $0x62] sm:$0xff]
        %v3051 = vld [vmem:[#allocation3 + $0x6a] sm:$0xff]
        %v3052 = vld [vmem:[#allocation3 + $0x7a] sm:$0xff]
        %v3053 = vld [vmem:[#allocation3 + $0x82] sm:$0xff]
        %v3054 = vld [vmem:[#allocation3 + $0x92] sm:$0xff]
        %v3055 = vld [vmem:[#allocation3 + $0x9a] sm:$0xff]
        %v3056 = vld [vmem:[#allocation3 + $0xaa] sm:$0xff]
        %v3057 = vld [vmem:[#allocation3 + $0xb2] sm:$0xff]
        %v3058 = vld [vmem:[#allocation3 + $0xc2] sm:$0xff]
        %v3059 = vld [vmem:[#allocation3 + $0xca] sm:$0xff]
        %v3060 = vld [vmem:[#allocation3 + $0xda] sm:$0xff]
        %v3061 = vld [vmem:[#allocation3 + $0xe2] sm:$0xff]
        %v3062 = vld [vmem:[#allocation3 + $0xf2] sm:$0xff]
        %v3063 = vld [vmem:[#allocation3 + $0xfa] sm:$0xff]
        %v3064 = vld [vmem:[#allocation3 + $0x10a] sm:$0xff]
        %v3065 = vld [vmem:[#allocation3 + $0x112] sm:$0xff]
        %v3066 = vld [vmem:[#allocation3 + $0x122] sm:$0xff]
        %v3067 = vld [vmem:[#allocation3 + $0x12a] sm:$0xff]
        %v3068 = vld [vmem:[#allocation3 + $0x13a] sm:$0xff]
        %v3069 = vld [vmem:[#allocation3 + $0x142] sm:$0xff]
        %v3070 = vld [vmem:[#allocation3 + $0x152] sm:$0xff]
        %v3071 = vld [vmem:[#allocation3 + $0x15a] sm:$0xff]
        %v3072 = vld [vmem:[#allocation3 + $0x16a] sm:$0xff]
        %v3073 = vld [vmem:[#allocation3 + $0x172] sm:$0xff]
        %v3074 = vpack.c.bf16 %v3042, %v3042
        %v3075 = vpack.c.bf16 %v3043, %v3043
        %v3076 = vpack.c.bf16 %v3044, %v3044
        %v3077 = vpack.c.bf16 %v3045, %v3045
        %v3078 = vpack.c.bf16 %v3046, %v3046
        %v3079 = vpack.c.bf16 %v3047, %v3047
        %v3080 = vpack.c.bf16 %v3048, %v3048
        %v3081 = vpack.c.bf16 %v3049, %v3049
        %v3082 = vpack.c.bf16 %v3050, %v3050
        %v3083 = vpack.c.bf16 %v3051, %v3051
        %v3084 = vpack.c.bf16 %v3052, %v3052
        %v3085 = vpack.c.bf16 %v3053, %v3053
        %v3086 = vpack.c.bf16 %v3054, %v3054
        %v3087 = vpack.c.bf16 %v3055, %v3055
        %v3088 = vpack.c.bf16 %v3056, %v3056
        %v3089 = vpack.c.bf16 %v3057, %v3057
        %v3090 = vpack.c.bf16 %v3058, %v3058
        %v3091 = vpack.c.bf16 %v3059, %v3059
        %v3092 = vpack.c.bf16 %v3060, %v3060
        %v3093 = vpack.c.bf16 %v3061, %v3061
        %v3094 = vpack.c.bf16 %v3062, %v3062
        %v3095 = vpack.c.bf16 %v3063, %v3063
        %v3096 = vpack.c.bf16 %v3064, %v3064
        %v3097 = vpack.c.bf16 %v3065, %v3065
        %v3098 = vpack.c.bf16 %v3066, %v3066
        %v3099 = vpack.c.bf16 %v3067, %v3067
        %v3100 = vpack.c.bf16 %v3068, %v3068
        %v3101 = vpack.c.bf16 %v3069, %v3069
        %v3102 = vpack.c.bf16 %v3070, %v3070
        %v3103 = vpack.c.bf16 %v3071, %v3071
        %v3104 = vpack.c.bf16 %v3072, %v3072
        %v3105 = vpack.c.bf16 %v3073, %v3073
        %v3106 = vld [vmem:[#allocation3 + $0x4] sm:$0xff]
        %v3107 = vld [vmem:[#allocation3 + $0xc] sm:$0xff]
        %v3108 = vld [vmem:[#allocation3 + $0x1c] sm:$0xff]
        %v3109 = vld [vmem:[#allocation3 + $0x24] sm:$0xff]
        %v3110 = vld [vmem:[#allocation3 + $0x34] sm:$0xff]
        %v3111 = vld [vmem:[#allocation3 + $0x3c] sm:$0xff]
        %v3112 = vld [vmem:[#allocation3 + $0x4c] sm:$0xff]
        %v3113 = vld [vmem:[#allocation3 + $0x54] sm:$0xff]
        %v3114 = vld [vmem:[#allocation3 + $0x64] sm:$0xff]
        %v3115 = vld [vmem:[#allocation3 + $0x6c] sm:$0xff]
        %v3116 = vld [vmem:[#allocation3 + $0x7c] sm:$0xff]
        %v3117 = vld [vmem:[#allocation3 + $0x84] sm:$0xff]
        %v3118 = vld [vmem:[#allocation3 + $0x94] sm:$0xff]
        %v3119 = vld [vmem:[#allocation3 + $0x9c] sm:$0xff]
        %v3120 = vld [vmem:[#allocation3 + $0xac] sm:$0xff]
        %v3121 = vld [vmem:[#allocation3 + $0xb4] sm:$0xff]
        %v3122 = vld [vmem:[#allocation3 + $0xc4] sm:$0xff]
        %v3123 = vld [vmem:[#allocation3 + $0xcc] sm:$0xff]
        %v3124 = vld [vmem:[#allocation3 + $0xdc] sm:$0xff]
        %v3125 = vld [vmem:[#allocation3 + $0xe4] sm:$0xff]
        %v3126 = vld [vmem:[#allocation3 + $0xf4] sm:$0xff]
        %v3127 = vld [vmem:[#allocation3 + $0xfc] sm:$0xff]
        %v3128 = vld [vmem:[#allocation3 + $0x10c] sm:$0xff]
        %v3129 = vld [vmem:[#allocation3 + $0x114] sm:$0xff]
        %v3130 = vld [vmem:[#allocation3 + $0x124] sm:$0xff]
        %v3131 = vld [vmem:[#allocation3 + $0x12c] sm:$0xff]
        %v3132 = vld [vmem:[#allocation3 + $0x13c] sm:$0xff]
        %v3133 = vld [vmem:[#allocation3 + $0x144] sm:$0xff]
        %v3134 = vld [vmem:[#allocation3 + $0x154] sm:$0xff]
        %v3135 = vld [vmem:[#allocation3 + $0x15c] sm:$0xff]
        %v3136 = vld [vmem:[#allocation3 + $0x16c] sm:$0xff]
        %v3137 = vld [vmem:[#allocation3 + $0x174] sm:$0xff]
        %v3138 = vpack.c.bf16 %v3106, %v3106
        %v3139 = vpack.c.bf16 %v3107, %v3107
        %v3140 = vpack.c.bf16 %v3108, %v3108
        %v3141 = vpack.c.bf16 %v3109, %v3109
        %v3142 = vpack.c.bf16 %v3110, %v3110
        %v3143 = vpack.c.bf16 %v3111, %v3111
        %v3144 = vpack.c.bf16 %v3112, %v3112
        %v3145 = vpack.c.bf16 %v3113, %v3113
        %v3146 = vpack.c.bf16 %v3114, %v3114
        %v3147 = vpack.c.bf16 %v3115, %v3115
        %v3148 = vpack.c.bf16 %v3116, %v3116
        %v3149 = vpack.c.bf16 %v3117, %v3117
        %v3150 = vpack.c.bf16 %v3118, %v3118
        %v3151 = vpack.c.bf16 %v3119, %v3119
        %v3152 = vpack.c.bf16 %v3120, %v3120
        %v3153 = vpack.c.bf16 %v3121, %v3121
        %v3154 = vpack.c.bf16 %v3122, %v3122
        %v3155 = vpack.c.bf16 %v3123, %v3123
        %v3156 = vpack.c.bf16 %v3124, %v3124
        %v3157 = vpack.c.bf16 %v3125, %v3125
        %v3158 = vpack.c.bf16 %v3126, %v3126
        %v3159 = vpack.c.bf16 %v3127, %v3127
        %v3160 = vpack.c.bf16 %v3128, %v3128
        %v3161 = vpack.c.bf16 %v3129, %v3129
        %v3162 = vpack.c.bf16 %v3130, %v3130
        %v3163 = vpack.c.bf16 %v3131, %v3131
        %v3164 = vpack.c.bf16 %v3132, %v3132
        %v3165 = vpack.c.bf16 %v3133, %v3133
        %v3166 = vpack.c.bf16 %v3134, %v3134
        %v3167 = vpack.c.bf16 %v3135, %v3135
        %v3168 = vpack.c.bf16 %v3136, %v3136
        %v3169 = vpack.c.bf16 %v3137, %v3137
        %v3170 = vld [vmem:[%s351] sm:$0xff]
        %v3171 = vld [vmem:[%s351 + $0x8] sm:$0xff]
        %v3172 = vld [vmem:[%s351 + $0x18] sm:$0xff]
        %v3173 = vld [vmem:[%s351 + $0x20] sm:$0xff]
        %v3174 = vld [vmem:[%s351 + $0x30] sm:$0xff]
        %v3175 = vld [vmem:[%s351 + $0x38] sm:$0xff]
        %v3176 = vld [vmem:[%s351 + $0x48] sm:$0xff]
        %v3177 = vld [vmem:[%s351 + $0x50] sm:$0xff]
        %v3178 = vld [vmem:[%s351 + $0x60] sm:$0xff]
        %v3179 = vld [vmem:[%s351 + $0x68] sm:$0xff]
        %v3180 = vld [vmem:[%s351 + $0x78] sm:$0xff]
        %v3181 = vld [vmem:[%s351 + $0x80] sm:$0xff]
        %v3182 = vld [vmem:[%s351 + $0x90] sm:$0xff]
        %v3183 = vld [vmem:[%s351 + $0x98] sm:$0xff]
        %v3184 = vld [vmem:[%s351 + $0xa8] sm:$0xff]
        %v3185 = vld [vmem:[%s351 + $0xb0] sm:$0xff]
        %v3186 = vld [vmem:[%s351 + $0xc0] sm:$0xff]
        %v3187 = vld [vmem:[%s351 + $0xc8] sm:$0xff]
        %v3188 = vld [vmem:[%s351 + $0xd8] sm:$0xff]
        %v3189 = vld [vmem:[%s351 + $0xe0] sm:$0xff]
        %v3190 = vld [vmem:[%s351 + $0xf0] sm:$0xff]
        %v3191 = vld [vmem:[%s351 + $0xf8] sm:$0xff]
        %v3192 = vld [vmem:[%s351 + $0x108] sm:$0xff]
        %v3193 = vld [vmem:[%s351 + $0x110] sm:$0xff]
        %v3194 = vld [vmem:[%s351 + $0x120] sm:$0xff]
        %v3195 = vld [vmem:[%s351 + $0x128] sm:$0xff]
        %v3196 = vld [vmem:[%s351 + $0x138] sm:$0xff]
        %v3197 = vld [vmem:[%s351 + $0x140] sm:$0xff]
        %v3198 = vld [vmem:[%s351 + $0x150] sm:$0xff]
        %v3199 = vld [vmem:[%s351 + $0x158] sm:$0xff]
        %v3200 = vld [vmem:[%s351 + $0x168] sm:$0xff]
        %v3201 = vld [vmem:[%s351 + $0x170] sm:$0xff]
        %v3202 = vpack.c.bf16 %v3170, %v3170
        %v3203 = vpack.c.bf16 %v3171, %v3171
        %v3204 = vpack.c.bf16 %v3172, %v3172
        %v3205 = vpack.c.bf16 %v3173, %v3173
        %v3206 = vpack.c.bf16 %v3174, %v3174
        %v3207 = vpack.c.bf16 %v3175, %v3175
        %v3208 = vpack.c.bf16 %v3176, %v3176
        %v3209 = vpack.c.bf16 %v3177, %v3177
        %v3210 = vpack.c.bf16 %v3178, %v3178
        %v3211 = vpack.c.bf16 %v3179, %v3179
        %v3212 = vpack.c.bf16 %v3180, %v3180
        %v3213 = vpack.c.bf16 %v3181, %v3181
        %v3214 = vpack.c.bf16 %v3182, %v3182
        %v3215 = vpack.c.bf16 %v3183, %v3183
        %v3216 = vpack.c.bf16 %v3184, %v3184
        %v3217 = vpack.c.bf16 %v3185, %v3185
        %v3218 = vpack.c.bf16 %v3186, %v3186
        %v3219 = vpack.c.bf16 %v3187, %v3187
        %v3220 = vpack.c.bf16 %v3188, %v3188
        %v3221 = vpack.c.bf16 %v3189, %v3189
        %v3222 = vpack.c.bf16 %v3190, %v3190
        %v3223 = vpack.c.bf16 %v3191, %v3191
        %v3224 = vpack.c.bf16 %v3192, %v3192
        %v3225 = vpack.c.bf16 %v3193, %v3193
        %v3226 = vpack.c.bf16 %v3194, %v3194
        %v3227 = vpack.c.bf16 %v3195, %v3195
        %v3228 = vpack.c.bf16 %v3196, %v3196
        %v3229 = vpack.c.bf16 %v3197, %v3197
        %v3230 = vpack.c.bf16 %v3198, %v3198
        %v3231 = vpack.c.bf16 %v3199, %v3199
        %v3232 = vpack.c.bf16 %v3200, %v3200
        %v3233 = vpack.c.bf16 %v3201, %v3201
        %v3234 = vld [vmem:[%s351 + $0x2] sm:$0xff]
        %v3235 = vld [vmem:[%s351 + $0xa] sm:$0xff]
        %v3236 = vld [vmem:[%s351 + $0x1a] sm:$0xff]
        %v3237 = vld [vmem:[%s351 + $0x22] sm:$0xff]
        %v3238 = vld [vmem:[%s351 + $0x32] sm:$0xff]
        %v3239 = vld [vmem:[%s351 + $0x3a] sm:$0xff]
        %v3240 = vld [vmem:[%s351 + $0x4a] sm:$0xff]
        %v3241 = vld [vmem:[%s351 + $0x52] sm:$0xff]
        %v3242 = vld [vmem:[%s351 + $0x62] sm:$0xff]
        %v3243 = vld [vmem:[%s351 + $0x6a] sm:$0xff]
        %v3244 = vld [vmem:[%s351 + $0x7a] sm:$0xff]
        %v3245 = vld [vmem:[%s351 + $0x82] sm:$0xff]
        %v3246 = vld [vmem:[%s351 + $0x92] sm:$0xff]
        %v3247 = vld [vmem:[%s351 + $0x9a] sm:$0xff]
        %v3248 = vld [vmem:[%s351 + $0xaa] sm:$0xff]
        %v3249 = vld [vmem:[%s351 + $0xb2] sm:$0xff]
        %v3250 = vld [vmem:[%s351 + $0xc2] sm:$0xff]
        %v3251 = vld [vmem:[%s351 + $0xca] sm:$0xff]
        %v3252 = vld [vmem:[%s351 + $0xda] sm:$0xff]
        %v3253 = vld [vmem:[%s351 + $0xe2] sm:$0xff]
        %v3254 = vld [vmem:[%s351 + $0xf2] sm:$0xff]
        %v3255 = vld [vmem:[%s351 + $0xfa] sm:$0xff]
        %v3256 = vld [vmem:[%s351 + $0x10a] sm:$0xff]
        %v3257 = vld [vmem:[%s351 + $0x112] sm:$0xff]
        %v3258 = vld [vmem:[%s351 + $0x122] sm:$0xff]
        %v3259 = vld [vmem:[%s351 + $0x12a] sm:$0xff]
        %v3260 = vld [vmem:[%s351 + $0x13a] sm:$0xff]
        %v3261 = vld [vmem:[%s351 + $0x142] sm:$0xff]
        %v3262 = vld [vmem:[%s351 + $0x152] sm:$0xff]
        %v3263 = vld [vmem:[%s351 + $0x15a] sm:$0xff]
        %v3264 = vld [vmem:[%s351 + $0x16a] sm:$0xff]
        %v3265 = vld [vmem:[%s351 + $0x172] sm:$0xff]
        %v3266 = vpack.c.bf16 %v3234, %v3234
        %v3267 = vpack.c.bf16 %v3235, %v3235
        %v3268 = vpack.c.bf16 %v3236, %v3236
        %v3269 = vpack.c.bf16 %v3237, %v3237
        %v3270 = vpack.c.bf16 %v3238, %v3238
        %v3271 = vpack.c.bf16 %v3239, %v3239
        %v3272 = vpack.c.bf16 %v3240, %v3240
        %v3273 = vpack.c.bf16 %v3241, %v3241
        %v3274 = vpack.c.bf16 %v3242, %v3242
        %v3275 = vpack.c.bf16 %v3243, %v3243
        %v3276 = vpack.c.bf16 %v3244, %v3244
        %v3277 = vpack.c.bf16 %v3245, %v3245
        %v3278 = vpack.c.bf16 %v3246, %v3246
        %v3279 = vpack.c.bf16 %v3247, %v3247
        %v3280 = vpack.c.bf16 %v3248, %v3248
        %v3281 = vpack.c.bf16 %v3249, %v3249
        %v3282 = vpack.c.bf16 %v3250, %v3250
        %v3283 = vpack.c.bf16 %v3251, %v3251
        %v3284 = vpack.c.bf16 %v3252, %v3252
        %v3285 = vpack.c.bf16 %v3253, %v3253
        %v3286 = vpack.c.bf16 %v3254, %v3254
        %v3287 = vpack.c.bf16 %v3255, %v3255
        %v3288 = vpack.c.bf16 %v3256, %v3256
        %v3289 = vpack.c.bf16 %v3257, %v3257
        %v3290 = vpack.c.bf16 %v3258, %v3258
        %v3291 = vpack.c.bf16 %v3259, %v3259
        %v3292 = vpack.c.bf16 %v3260, %v3260
        %v3293 = vpack.c.bf16 %v3261, %v3261
        %v3294 = vpack.c.bf16 %v3262, %v3262
        %v3295 = vpack.c.bf16 %v3263, %v3263
        %v3296 = vpack.c.bf16 %v3264, %v3264
        %v3297 = vpack.c.bf16 %v3265, %v3265
        %v3298 = vld [vmem:[%s351 + $0x4] sm:$0xff]
        %v3299 = vld [vmem:[%s351 + $0xc] sm:$0xff]
        %v3300 = vld [vmem:[%s351 + $0x1c] sm:$0xff]
        %v3301 = vld [vmem:[%s351 + $0x24] sm:$0xff]
        %v3302 = vld [vmem:[%s351 + $0x34] sm:$0xff]
        %v3303 = vld [vmem:[%s351 + $0x3c] sm:$0xff]
        %v3304 = vld [vmem:[%s351 + $0x4c] sm:$0xff]
        %v3305 = vld [vmem:[%s351 + $0x54] sm:$0xff]
        %v3306 = vld [vmem:[%s351 + $0x64] sm:$0xff]
        %v3307 = vld [vmem:[%s351 + $0x6c] sm:$0xff]
        %v3308 = vld [vmem:[%s351 + $0x7c] sm:$0xff]
        %v3309 = vld [vmem:[%s351 + $0x84] sm:$0xff]
        %v3310 = vld [vmem:[%s351 + $0x94] sm:$0xff]
        %v3311 = vld [vmem:[%s351 + $0x9c] sm:$0xff]
        %v3312 = vld [vmem:[%s351 + $0xac] sm:$0xff]
        %v3313 = vld [vmem:[%s351 + $0xb4] sm:$0xff]
        %v3314 = vld [vmem:[%s351 + $0xc4] sm:$0xff]
        %v3315 = vld [vmem:[%s351 + $0xcc] sm:$0xff]
        %v3316 = vld [vmem:[%s351 + $0xdc] sm:$0xff]
        %v3317 = vld [vmem:[%s351 + $0xe4] sm:$0xff]
        %v3318 = vld [vmem:[%s351 + $0xf4] sm:$0xff]
        %v3319 = vld [vmem:[%s351 + $0xfc] sm:$0xff]
        %v3320 = vld [vmem:[%s351 + $0x10c] sm:$0xff]
        %v3321 = vld [vmem:[%s351 + $0x114] sm:$0xff]
        %v3322 = vld [vmem:[%s351 + $0x124] sm:$0xff]
        %v3323 = vld [vmem:[%s351 + $0x12c] sm:$0xff]
        %v3324 = vld [vmem:[%s351 + $0x13c] sm:$0xff]
        %v3325 = vld [vmem:[%s351 + $0x144] sm:$0xff]
        %v3326 = vld [vmem:[%s351 + $0x154] sm:$0xff]
        %v3327 = vld [vmem:[%s351 + $0x15c] sm:$0xff]
        %v3328 = vld [vmem:[%s351 + $0x16c] sm:$0xff]
        %v3329 = vld [vmem:[%s351 + $0x174] sm:$0xff]
        %v3330 = vpack.c.bf16 %v3298, %v3298
        %v3331 = vpack.c.bf16 %v3299, %v3299
        %v3332 = vpack.c.bf16 %v3300, %v3300
        %v3333 = vpack.c.bf16 %v3301, %v3301
        %v3334 = vpack.c.bf16 %v3302, %v3302
        %v3335 = vpack.c.bf16 %v3303, %v3303
        %v3336 = vpack.c.bf16 %v3304, %v3304
        %v3337 = vpack.c.bf16 %v3305, %v3305
        %v3338 = vpack.c.bf16 %v3306, %v3306
        %v3339 = vpack.c.bf16 %v3307, %v3307
        %v3340 = vpack.c.bf16 %v3308, %v3308
        %v3341 = vpack.c.bf16 %v3309, %v3309
        %v3342 = vpack.c.bf16 %v3310, %v3310
        %v3343 = vpack.c.bf16 %v3311, %v3311
        %v3344 = vpack.c.bf16 %v3312, %v3312
        %v3345 = vpack.c.bf16 %v3313, %v3313
        %v3346 = vpack.c.bf16 %v3314, %v3314
        %v3347 = vpack.c.bf16 %v3315, %v3315
        %v3348 = vpack.c.bf16 %v3316, %v3316
        %v3349 = vpack.c.bf16 %v3317, %v3317
        %v3350 = vpack.c.bf16 %v3318, %v3318
        %v3351 = vpack.c.bf16 %v3319, %v3319
        %v3352 = vpack.c.bf16 %v3320, %v3320
        %v3353 = vpack.c.bf16 %v3321, %v3321
        %v3354 = vpack.c.bf16 %v3322, %v3322
        %v3355 = vpack.c.bf16 %v3323, %v3323
        %v3356 = vpack.c.bf16 %v3324, %v3324
        %v3357 = vpack.c.bf16 %v3325, %v3325
        %v3358 = vpack.c.bf16 %v3326, %v3326
        %v3359 = vpack.c.bf16 %v3327, %v3327
        %v3360 = vpack.c.bf16 %v3328, %v3328
        %v3361 = vpack.c.bf16 %v3329, %v3329
        %s3362 = scalar_lea.vmem [#allocation3], 96
        %v3363 = vld [vmem:[%s3362] sm:$0xff]
        %v3364 = vld [vmem:[%s3362 + $0x8] sm:$0xff]
        %v3365 = vld [vmem:[%s3362 + $0x18] sm:$0xff]
        %v3366 = vld [vmem:[%s3362 + $0x20] sm:$0xff]
        %v3367 = vld [vmem:[%s3362 + $0x30] sm:$0xff]
        %v3368 = vld [vmem:[%s3362 + $0x38] sm:$0xff]
        %v3369 = vld [vmem:[%s3362 + $0x48] sm:$0xff]
        %v3370 = vld [vmem:[%s3362 + $0x50] sm:$0xff]
        %v3371 = vld [vmem:[%s3362 + $0x60] sm:$0xff]
        %v3372 = vld [vmem:[%s3362 + $0x68] sm:$0xff]
        %v3373 = vld [vmem:[%s3362 + $0x78] sm:$0xff]
        %v3374 = vld [vmem:[%s3362 + $0x80] sm:$0xff]
        %v3375 = vld [vmem:[%s3362 + $0x90] sm:$0xff]
        %v3376 = vld [vmem:[%s3362 + $0x98] sm:$0xff]
        %v3377 = vld [vmem:[%s3362 + $0xa8] sm:$0xff]
        %v3378 = vld [vmem:[%s3362 + $0xb0] sm:$0xff]
        %v3379 = vld [vmem:[%s3362 + $0xc0] sm:$0xff]
        %v3380 = vld [vmem:[%s3362 + $0xc8] sm:$0xff]
        %v3381 = vld [vmem:[%s3362 + $0xd8] sm:$0xff]
        %v3382 = vld [vmem:[%s3362 + $0xe0] sm:$0xff]
        %v3383 = vld [vmem:[%s3362 + $0xf0] sm:$0xff]
        %v3384 = vld [vmem:[%s3362 + $0xf8] sm:$0xff]
        %v3385 = vld [vmem:[%s3362 + $0x108] sm:$0xff]
        %v3386 = vld [vmem:[%s3362 + $0x110] sm:$0xff]
        %v3387 = vld [vmem:[%s3362 + $0x120] sm:$0xff]
        %v3388 = vld [vmem:[%s3362 + $0x128] sm:$0xff]
        %v3389 = vld [vmem:[%s3362 + $0x138] sm:$0xff]
        %v3390 = vld [vmem:[%s3362 + $0x140] sm:$0xff]
        %v3391 = vld [vmem:[%s3362 + $0x150] sm:$0xff]
        %v3392 = vld [vmem:[%s3362 + $0x158] sm:$0xff]
        %v3393 = vld [vmem:[%s3362 + $0x168] sm:$0xff]
        %v3394 = vld [vmem:[%s3362 + $0x170] sm:$0xff]
        %v3395 = vpack.c.bf16 %v3363, %v3363
        %v3396 = vpack.c.bf16 %v3364, %v3364
        %v3397 = vpack.c.bf16 %v3365, %v3365
        %v3398 = vpack.c.bf16 %v3366, %v3366
        %v3399 = vpack.c.bf16 %v3367, %v3367
        %v3400 = vpack.c.bf16 %v3368, %v3368
        %v3401 = vpack.c.bf16 %v3369, %v3369
        %v3402 = vpack.c.bf16 %v3370, %v3370
        %v3403 = vpack.c.bf16 %v3371, %v3371
        %v3404 = vpack.c.bf16 %v3372, %v3372
        %v3405 = vpack.c.bf16 %v3373, %v3373
        %v3406 = vpack.c.bf16 %v3374, %v3374
        %v3407 = vpack.c.bf16 %v3375, %v3375
        %v3408 = vpack.c.bf16 %v3376, %v3376
        %v3409 = vpack.c.bf16 %v3377, %v3377
        %v3410 = vpack.c.bf16 %v3378, %v3378
        %v3411 = vpack.c.bf16 %v3379, %v3379
        %v3412 = vpack.c.bf16 %v3380, %v3380
        %v3413 = vpack.c.bf16 %v3381, %v3381
        %v3414 = vpack.c.bf16 %v3382, %v3382
        %v3415 = vpack.c.bf16 %v3383, %v3383
        %v3416 = vpack.c.bf16 %v3384, %v3384
        %v3417 = vpack.c.bf16 %v3385, %v3385
        %v3418 = vpack.c.bf16 %v3386, %v3386
        %v3419 = vpack.c.bf16 %v3387, %v3387
        %v3420 = vpack.c.bf16 %v3388, %v3388
        %v3421 = vpack.c.bf16 %v3389, %v3389
        %v3422 = vpack.c.bf16 %v3390, %v3390
        %v3423 = vpack.c.bf16 %v3391, %v3391
        %v3424 = vpack.c.bf16 %v3392, %v3392
        %v3425 = vpack.c.bf16 %v3393, %v3393
        %v3426 = vpack.c.bf16 %v3394, %v3394
        %v3427 = vld [vmem:[%s3362 + $0x2] sm:$0xff]
        %v3428 = vld [vmem:[%s3362 + $0xa] sm:$0xff]
        %v3429 = vld [vmem:[%s3362 + $0x1a] sm:$0xff]
        %v3430 = vld [vmem:[%s3362 + $0x22] sm:$0xff]
        %v3431 = vld [vmem:[%s3362 + $0x32] sm:$0xff]
        %v3432 = vld [vmem:[%s3362 + $0x3a] sm:$0xff]
        %v3433 = vld [vmem:[%s3362 + $0x4a] sm:$0xff]
        %v3434 = vld [vmem:[%s3362 + $0x52] sm:$0xff]
        %v3435 = vld [vmem:[%s3362 + $0x62] sm:$0xff]
        %v3436 = vld [vmem:[%s3362 + $0x6a] sm:$0xff]
        %v3437 = vld [vmem:[%s3362 + $0x7a] sm:$0xff]
        %v3438 = vld [vmem:[%s3362 + $0x82] sm:$0xff]
        %v3439 = vld [vmem:[%s3362 + $0x92] sm:$0xff]
        %v3440 = vld [vmem:[%s3362 + $0x9a] sm:$0xff]
        %v3441 = vld [vmem:[%s3362 + $0xaa] sm:$0xff]
        %v3442 = vld [vmem:[%s3362 + $0xb2] sm:$0xff]
        %v3443 = vld [vmem:[%s3362 + $0xc2] sm:$0xff]
        %v3444 = vld [vmem:[%s3362 + $0xca] sm:$0xff]
        %v3445 = vld [vmem:[%s3362 + $0xda] sm:$0xff]
        %v3446 = vld [vmem:[%s3362 + $0xe2] sm:$0xff]
        %v3447 = vld [vmem:[%s3362 + $0xf2] sm:$0xff]
        %v3448 = vld [vmem:[%s3362 + $0xfa] sm:$0xff]
        %v3449 = vld [vmem:[%s3362 + $0x10a] sm:$0xff]
        %v3450 = vld [vmem:[%s3362 + $0x112] sm:$0xff]
        %v3451 = vld [vmem:[%s3362 + $0x122] sm:$0xff]
        %v3452 = vld [vmem:[%s3362 + $0x12a] sm:$0xff]
        %v3453 = vld [vmem:[%s3362 + $0x13a] sm:$0xff]
        %v3454 = vld [vmem:[%s3362 + $0x142] sm:$0xff]
        %v3455 = vld [vmem:[%s3362 + $0x152] sm:$0xff]
        %v3456 = vld [vmem:[%s3362 + $0x15a] sm:$0xff]
        %v3457 = vld [vmem:[%s3362 + $0x16a] sm:$0xff]
        %v3458 = vld [vmem:[%s3362 + $0x172] sm:$0xff]
        %v3459 = vpack.c.bf16 %v3427, %v3427
        %v3460 = vpack.c.bf16 %v3428, %v3428
        %v3461 = vpack.c.bf16 %v3429, %v3429
        %v3462 = vpack.c.bf16 %v3430, %v3430
        %v3463 = vpack.c.bf16 %v3431, %v3431
        %v3464 = vpack.c.bf16 %v3432, %v3432
        %v3465 = vpack.c.bf16 %v3433, %v3433
        %v3466 = vpack.c.bf16 %v3434, %v3434
        %v3467 = vpack.c.bf16 %v3435, %v3435
        %v3468 = vpack.c.bf16 %v3436, %v3436
        %v3469 = vpack.c.bf16 %v3437, %v3437
        %v3470 = vpack.c.bf16 %v3438, %v3438
        %v3471 = vpack.c.bf16 %v3439, %v3439
        %v3472 = vpack.c.bf16 %v3440, %v3440
        %v3473 = vpack.c.bf16 %v3441, %v3441
        %v3474 = vpack.c.bf16 %v3442, %v3442
        %v3475 = vpack.c.bf16 %v3443, %v3443
        %v3476 = vpack.c.bf16 %v3444, %v3444
        %v3477 = vpack.c.bf16 %v3445, %v3445
        %v3478 = vpack.c.bf16 %v3446, %v3446
        %v3479 = vpack.c.bf16 %v3447, %v3447
        %v3480 = vpack.c.bf16 %v3448, %v3448
        %v3481 = vpack.c.bf16 %v3449, %v3449
        %v3482 = vpack.c.bf16 %v3450, %v3450
        %v3483 = vpack.c.bf16 %v3451, %v3451
        %v3484 = vpack.c.bf16 %v3452, %v3452
        %v3485 = vpack.c.bf16 %v3453, %v3453
        %v3486 = vpack.c.bf16 %v3454, %v3454
        %v3487 = vpack.c.bf16 %v3455, %v3455
        %v3488 = vpack.c.bf16 %v3456, %v3456
        %v3489 = vpack.c.bf16 %v3457, %v3457
        %v3490 = vpack.c.bf16 %v3458, %v3458
        %v3491 = vld [vmem:[%s3362 + $0x4] sm:$0xff]
        %v3492 = vld [vmem:[%s3362 + $0xc] sm:$0xff]
        %v3493 = vld [vmem:[%s3362 + $0x1c] sm:$0xff]
        %v3494 = vld [vmem:[%s3362 + $0x24] sm:$0xff]
        %v3495 = vld [vmem:[%s3362 + $0x34] sm:$0xff]
        %v3496 = vld [vmem:[%s3362 + $0x3c] sm:$0xff]
        %v3497 = vld [vmem:[%s3362 + $0x4c] sm:$0xff]
        %v3498 = vld [vmem:[%s3362 + $0x54] sm:$0xff]
        %v3499 = vld [vmem:[%s3362 + $0x64] sm:$0xff]
        %v3500 = vld [vmem:[%s3362 + $0x6c] sm:$0xff]
        %v3501 = vld [vmem:[%s3362 + $0x7c] sm:$0xff]
        %v3502 = vld [vmem:[%s3362 + $0x84] sm:$0xff]
        %v3503 = vld [vmem:[%s3362 + $0x94] sm:$0xff]
        %v3504 = vld [vmem:[%s3362 + $0x9c] sm:$0xff]
        %v3505 = vld [vmem:[%s3362 + $0xac] sm:$0xff]
        %v3506 = vld [vmem:[%s3362 + $0xb4] sm:$0xff]
        %v3507 = vld [vmem:[%s3362 + $0xc4] sm:$0xff]
        %v3508 = vld [vmem:[%s3362 + $0xcc] sm:$0xff]
        %v3509 = vld [vmem:[%s3362 + $0xdc] sm:$0xff]
        %v3510 = vld [vmem:[%s3362 + $0xe4] sm:$0xff]
        %v3511 = vld [vmem:[%s3362 + $0xf4] sm:$0xff]
        %v3512 = vld [vmem:[%s3362 + $0xfc] sm:$0xff]
        %v3513 = vld [vmem:[%s3362 + $0x10c] sm:$0xff]
        %v3514 = vld [vmem:[%s3362 + $0x114] sm:$0xff]
        %v3515 = vld [vmem:[%s3362 + $0x124] sm:$0xff]
        %v3516 = vld [vmem:[%s3362 + $0x12c] sm:$0xff]
        %v3517 = vld [vmem:[%s3362 + $0x13c] sm:$0xff]
        %v3518 = vld [vmem:[%s3362 + $0x144] sm:$0xff]
        %v3519 = vld [vmem:[%s3362 + $0x154] sm:$0xff]
        %v3520 = vld [vmem:[%s3362 + $0x15c] sm:$0xff]
        %v3521 = vld [vmem:[%s3362 + $0x16c] sm:$0xff]
        %v3522 = vld [vmem:[%s3362 + $0x174] sm:$0xff]
        %v3523 = vpack.c.bf16 %v3491, %v3491
        %v3524 = vpack.c.bf16 %v3492, %v3492
        %v3525 = vpack.c.bf16 %v3493, %v3493
        %v3526 = vpack.c.bf16 %v3494, %v3494
        %v3527 = vpack.c.bf16 %v3495, %v3495
        %v3528 = vpack.c.bf16 %v3496, %v3496
        %v3529 = vpack.c.bf16 %v3497, %v3497
        %v3530 = vpack.c.bf16 %v3498, %v3498
        %v3531 = vpack.c.bf16 %v3499, %v3499
        %v3532 = vpack.c.bf16 %v3500, %v3500
        %v3533 = vpack.c.bf16 %v3501, %v3501
        %v3534 = vpack.c.bf16 %v3502, %v3502
        %v3535 = vpack.c.bf16 %v3503, %v3503
        %v3536 = vpack.c.bf16 %v3504, %v3504
        %v3537 = vpack.c.bf16 %v3505, %v3505
        %v3538 = vpack.c.bf16 %v3506, %v3506
        %v3539 = vpack.c.bf16 %v3507, %v3507
        %v3540 = vpack.c.bf16 %v3508, %v3508
        %v3541 = vpack.c.bf16 %v3509, %v3509
        %v3542 = vpack.c.bf16 %v3510, %v3510
        %v3543 = vpack.c.bf16 %v3511, %v3511
        %v3544 = vpack.c.bf16 %v3512, %v3512
        %v3545 = vpack.c.bf16 %v3513, %v3513
        %v3546 = vpack.c.bf16 %v3514, %v3514
        %v3547 = vpack.c.bf16 %v3515, %v3515
        %v3548 = vpack.c.bf16 %v3516, %v3516
        %v3549 = vpack.c.bf16 %v3517, %v3517
        %v3550 = vpack.c.bf16 %v3518, %v3518
        %v3551 = vpack.c.bf16 %v3519, %v3519
        %v3552 = vpack.c.bf16 %v3520, %v3520
        %v3553 = vpack.c.bf16 %v3521, %v3521
        %v3554 = vpack.c.bf16 %v3522, %v3522
        %v3587 = vunpack.c.l.b16 %v3010
        %v3588 = vunpack.c.l.b16 %v3011
        %v3589 = vunpack.c.l.b16 %v3012
        %v3590 = vunpack.c.l.b16 %v3013
        %v3591 = vunpack.c.l.b16 %v3014
        %v3592 = vunpack.c.l.b16 %v3015
        %v3593 = vunpack.c.l.b16 %v3016
        %v3594 = vunpack.c.l.b16 %v3017
        %v3595 = vunpack.c.l.b16 %v3018
        %v3596 = vunpack.c.l.b16 %v3019
        %v3597 = vunpack.c.l.b16 %v3020
        %v3598 = vunpack.c.l.b16 %v3021
        %v3599 = vunpack.c.l.b16 %v3022
        %v3600 = vunpack.c.l.b16 %v3023
        %v3601 = vunpack.c.l.b16 %v3024
        %v3602 = vunpack.c.l.b16 %v3025
        %v3603 = vunpack.c.l.b16 %v3026
        %v3604 = vunpack.c.l.b16 %v3027
        %v3605 = vunpack.c.l.b16 %v3028
        %v3606 = vunpack.c.l.b16 %v3029
        %v3607 = vunpack.c.l.b16 %v3030
        %v3608 = vunpack.c.l.b16 %v3031
        %v3609 = vunpack.c.l.b16 %v3032
        %v3610 = vunpack.c.l.b16 %v3033
        %v3611 = vunpack.c.l.b16 %v3034
        %v3612 = vunpack.c.l.b16 %v3035
        %v3613 = vunpack.c.l.b16 %v3036
        %v3614 = vunpack.c.l.b16 %v3037
        %v3615 = vunpack.c.l.b16 %v3038
        %v3616 = vunpack.c.l.b16 %v3039
        %v3617 = vunpack.c.l.b16 %v3040
        %v3618 = vunpack.c.l.b16 %v3041
        %v3619 = vpack.c.b16 %v3588, %v3587
        %v3620 = vpack.c.b16 %v3590, %v3589
        %v3621 = vpack.c.b16 %v3592, %v3591
        %v3622 = vpack.c.b16 %v3594, %v3593
        %v3623 = vpack.c.b16 %v3596, %v3595
        %v3624 = vpack.c.b16 %v3598, %v3597
        %v3625 = vpack.c.b16 %v3600, %v3599
        %v3626 = vpack.c.b16 %v3602, %v3601
        %v3627 = vpack.c.b16 %v3604, %v3603
        %v3628 = vpack.c.b16 %v3606, %v3605
        %v3629 = vpack.c.b16 %v3608, %v3607
        %v3630 = vpack.c.b16 %v3610, %v3609
        %v3631 = vpack.c.b16 %v3612, %v3611
        %v3632 = vpack.c.b16 %v3614, %v3613
        %v3633 = vpack.c.b16 %v3616, %v3615
        %v3634 = vpack.c.b16 %v3618, %v3617
        %v3667 = vunpack.c.l.b16 %v3074
        %v3668 = vunpack.c.l.b16 %v3075
        %v3669 = vunpack.c.l.b16 %v3076
        %v3670 = vunpack.c.l.b16 %v3077
        %v3671 = vunpack.c.l.b16 %v3078
        %v3672 = vunpack.c.l.b16 %v3079
        %v3673 = vunpack.c.l.b16 %v3080
        %v3674 = vunpack.c.l.b16 %v3081
        %v3675 = vunpack.c.l.b16 %v3082
        %v3676 = vunpack.c.l.b16 %v3083
        %v3677 = vunpack.c.l.b16 %v3084
        %v3678 = vunpack.c.l.b16 %v3085
        %v3679 = vunpack.c.l.b16 %v3086
        %v3680 = vunpack.c.l.b16 %v3087
        %v3681 = vunpack.c.l.b16 %v3088
        %v3682 = vunpack.c.l.b16 %v3089
        %v3683 = vunpack.c.l.b16 %v3090
        %v3684 = vunpack.c.l.b16 %v3091
        %v3685 = vunpack.c.l.b16 %v3092
        %v3686 = vunpack.c.l.b16 %v3093
        %v3687 = vunpack.c.l.b16 %v3094
        %v3688 = vunpack.c.l.b16 %v3095
        %v3689 = vunpack.c.l.b16 %v3096
        %v3690 = vunpack.c.l.b16 %v3097
        %v3691 = vunpack.c.l.b16 %v3098
        %v3692 = vunpack.c.l.b16 %v3099
        %v3693 = vunpack.c.l.b16 %v3100
        %v3694 = vunpack.c.l.b16 %v3101
        %v3695 = vunpack.c.l.b16 %v3102
        %v3696 = vunpack.c.l.b16 %v3103
        %v3697 = vunpack.c.l.b16 %v3104
        %v3698 = vunpack.c.l.b16 %v3105
        %v3699 = vpack.c.b16 %v3668, %v3667
        %v3700 = vpack.c.b16 %v3670, %v3669
        %v3701 = vpack.c.b16 %v3672, %v3671
        %v3702 = vpack.c.b16 %v3674, %v3673
        %v3703 = vpack.c.b16 %v3676, %v3675
        %v3704 = vpack.c.b16 %v3678, %v3677
        %v3705 = vpack.c.b16 %v3680, %v3679
        %v3706 = vpack.c.b16 %v3682, %v3681
        %v3707 = vpack.c.b16 %v3684, %v3683
        %v3708 = vpack.c.b16 %v3686, %v3685
        %v3709 = vpack.c.b16 %v3688, %v3687
        %v3710 = vpack.c.b16 %v3690, %v3689
        %v3711 = vpack.c.b16 %v3692, %v3691
        %v3712 = vpack.c.b16 %v3694, %v3693
        %v3713 = vpack.c.b16 %v3696, %v3695
        %v3714 = vpack.c.b16 %v3698, %v3697
        %3715 = vrot.lane.b32.xlu0 %v3699, 64
        %v3716 = vpop.permute.xlu0 %3715
        %3717 = vrot.lane.b32.xlu0 %v3700, 64
        %v3718 = vpop.permute.xlu0 %3717
        %3719 = vrot.lane.b32.xlu0 %v3701, 64
        %v3720 = vpop.permute.xlu0 %3719
        %3721 = vrot.lane.b32.xlu0 %v3702, 64
        %v3722 = vpop.permute.xlu0 %3721
        %3723 = vrot.lane.b32.xlu0 %v3703, 64
        %v3724 = vpop.permute.xlu0 %3723
        %3725 = vrot.lane.b32.xlu0 %v3704, 64
        %v3726 = vpop.permute.xlu0 %3725
        %3727 = vrot.lane.b32.xlu0 %v3705, 64
        %v3728 = vpop.permute.xlu0 %3727
        %3729 = vrot.lane.b32.xlu0 %v3706, 64
        %v3730 = vpop.permute.xlu0 %3729
        %3731 = vrot.lane.b32.xlu0 %v3707, 64
        %v3732 = vpop.permute.xlu0 %3731
        %3733 = vrot.lane.b32.xlu0 %v3708, 64
        %v3734 = vpop.permute.xlu0 %3733
        %3735 = vrot.lane.b32.xlu0 %v3709, 64
        %v3736 = vpop.permute.xlu0 %3735
        %3737 = vrot.lane.b32.xlu0 %v3710, 64
        %v3738 = vpop.permute.xlu0 %3737
        %3739 = vrot.lane.b32.xlu0 %v3711, 64
        %v3740 = vpop.permute.xlu0 %3739
        %3741 = vrot.lane.b32.xlu0 %v3712, 64
        %v3742 = vpop.permute.xlu0 %3741
        %3743 = vrot.lane.b32.xlu0 %v3713, 64
        %v3744 = vpop.permute.xlu0 %3743
        %3745 = vrot.lane.b32.xlu0 %v3714, 64
        %v3746 = vpop.permute.xlu0 %3745
        %v3779 = vunpack.c.l.b16 %v3138
        %v3780 = vunpack.c.l.b16 %v3139
        %v3781 = vunpack.c.l.b16 %v3140
        %v3782 = vunpack.c.l.b16 %v3141
        %v3783 = vunpack.c.l.b16 %v3142
        %v3784 = vunpack.c.l.b16 %v3143
        %v3785 = vunpack.c.l.b16 %v3144
        %v3786 = vunpack.c.l.b16 %v3145
        %v3787 = vunpack.c.l.b16 %v3146
        %v3788 = vunpack.c.l.b16 %v3147
        %v3789 = vunpack.c.l.b16 %v3148
        %v3790 = vunpack.c.l.b16 %v3149
        %v3791 = vunpack.c.l.b16 %v3150
        %v3792 = vunpack.c.l.b16 %v3151
        %v3793 = vunpack.c.l.b16 %v3152
        %v3794 = vunpack.c.l.b16 %v3153
        %v3795 = vunpack.c.l.b16 %v3154
        %v3796 = vunpack.c.l.b16 %v3155
        %v3797 = vunpack.c.l.b16 %v3156
        %v3798 = vunpack.c.l.b16 %v3157
        %v3799 = vunpack.c.l.b16 %v3158
        %v3800 = vunpack.c.l.b16 %v3159
        %v3801 = vunpack.c.l.b16 %v3160
        %v3802 = vunpack.c.l.b16 %v3161
        %v3803 = vunpack.c.l.b16 %v3162
        %v3804 = vunpack.c.l.b16 %v3163
        %v3805 = vunpack.c.l.b16 %v3164
        %v3806 = vunpack.c.l.b16 %v3165
        %v3807 = vunpack.c.l.b16 %v3166
        %v3808 = vunpack.c.l.b16 %v3167
        %v3809 = vunpack.c.l.b16 %v3168
        %v3810 = vunpack.c.l.b16 %v3169
        %v3811 = vpack.c.b16 %v3780, %v3779
        %v3812 = vpack.c.b16 %v3782, %v3781
        %v3813 = vpack.c.b16 %v3784, %v3783
        %v3814 = vpack.c.b16 %v3786, %v3785
        %v3815 = vpack.c.b16 %v3788, %v3787
        %v3816 = vpack.c.b16 %v3790, %v3789
        %v3817 = vpack.c.b16 %v3792, %v3791
        %v3818 = vpack.c.b16 %v3794, %v3793
        %v3819 = vpack.c.b16 %v3796, %v3795
        %v3820 = vpack.c.b16 %v3798, %v3797
        %v3821 = vpack.c.b16 %v3800, %v3799
        %v3822 = vpack.c.b16 %v3802, %v3801
        %v3823 = vpack.c.b16 %v3804, %v3803
        %v3824 = vpack.c.b16 %v3806, %v3805
        %v3825 = vpack.c.b16 %v3808, %v3807
        %v3826 = vpack.c.b16 %v3810, %v3809
        %v3859 = vunpack.c.l.b16 %v3202
        %v3860 = vunpack.c.l.b16 %v3203
        %v3861 = vunpack.c.l.b16 %v3204
        %v3862 = vunpack.c.l.b16 %v3205
        %v3863 = vunpack.c.l.b16 %v3206
        %v3864 = vunpack.c.l.b16 %v3207
        %v3865 = vunpack.c.l.b16 %v3208
        %v3866 = vunpack.c.l.b16 %v3209
        %v3867 = vunpack.c.l.b16 %v3210
        %v3868 = vunpack.c.l.b16 %v3211
        %v3869 = vunpack.c.l.b16 %v3212
        %v3870 = vunpack.c.l.b16 %v3213
        %v3871 = vunpack.c.l.b16 %v3214
        %v3872 = vunpack.c.l.b16 %v3215
        %v3873 = vunpack.c.l.b16 %v3216
        %v3874 = vunpack.c.l.b16 %v3217
        %v3875 = vunpack.c.l.b16 %v3218
        %v3876 = vunpack.c.l.b16 %v3219
        %v3877 = vunpack.c.l.b16 %v3220
        %v3878 = vunpack.c.l.b16 %v3221
        %v3879 = vunpack.c.l.b16 %v3222
        %v3880 = vunpack.c.l.b16 %v3223
        %v3881 = vunpack.c.l.b16 %v3224
        %v3882 = vunpack.c.l.b16 %v3225
        %v3883 = vunpack.c.l.b16 %v3226
        %v3884 = vunpack.c.l.b16 %v3227
        %v3885 = vunpack.c.l.b16 %v3228
        %v3886 = vunpack.c.l.b16 %v3229
        %v3887 = vunpack.c.l.b16 %v3230
        %v3888 = vunpack.c.l.b16 %v3231
        %v3889 = vunpack.c.l.b16 %v3232
        %v3890 = vunpack.c.l.b16 %v3233
        %v3891 = vpack.c.b16 %v3860, %v3859
        %v3892 = vpack.c.b16 %v3862, %v3861
        %v3893 = vpack.c.b16 %v3864, %v3863
        %v3894 = vpack.c.b16 %v3866, %v3865
        %v3895 = vpack.c.b16 %v3868, %v3867
        %v3896 = vpack.c.b16 %v3870, %v3869
        %v3897 = vpack.c.b16 %v3872, %v3871
        %v3898 = vpack.c.b16 %v3874, %v3873
        %v3899 = vpack.c.b16 %v3876, %v3875
        %v3900 = vpack.c.b16 %v3878, %v3877
        %v3901 = vpack.c.b16 %v3880, %v3879
        %v3902 = vpack.c.b16 %v3882, %v3881
        %v3903 = vpack.c.b16 %v3884, %v3883
        %v3904 = vpack.c.b16 %v3886, %v3885
        %v3905 = vpack.c.b16 %v3888, %v3887
        %v3906 = vpack.c.b16 %v3890, %v3889
        %3907 = vrot.lane.b32.xlu0 %v3891, 64
        %v3908 = vpop.permute.xlu0 %3907
        %3909 = vrot.lane.b32.xlu0 %v3892, 64
        %v3910 = vpop.permute.xlu0 %3909
        %3911 = vrot.lane.b32.xlu0 %v3893, 64
        %v3912 = vpop.permute.xlu0 %3911
        %3913 = vrot.lane.b32.xlu0 %v3894, 64
        %v3914 = vpop.permute.xlu0 %3913
        %3915 = vrot.lane.b32.xlu0 %v3895, 64
        %v3916 = vpop.permute.xlu0 %3915
        %3917 = vrot.lane.b32.xlu0 %v3896, 64
        %v3918 = vpop.permute.xlu0 %3917
        %3919 = vrot.lane.b32.xlu0 %v3897, 64
        %v3920 = vpop.permute.xlu0 %3919
        %3921 = vrot.lane.b32.xlu0 %v3898, 64
        %v3922 = vpop.permute.xlu0 %3921
        %3923 = vrot.lane.b32.xlu0 %v3899, 64
        %v3924 = vpop.permute.xlu0 %3923
        %3925 = vrot.lane.b32.xlu0 %v3900, 64
        %v3926 = vpop.permute.xlu0 %3925
        %3927 = vrot.lane.b32.xlu0 %v3901, 64
        %v3928 = vpop.permute.xlu0 %3927
        %3929 = vrot.lane.b32.xlu0 %v3902, 64
        %v3930 = vpop.permute.xlu0 %3929
        %3931 = vrot.lane.b32.xlu0 %v3903, 64
        %v3932 = vpop.permute.xlu0 %3931
        %3933 = vrot.lane.b32.xlu0 %v3904, 64
        %v3934 = vpop.permute.xlu0 %3933
        %3935 = vrot.lane.b32.xlu0 %v3905, 64
        %v3936 = vpop.permute.xlu0 %3935
        %3937 = vrot.lane.b32.xlu0 %v3906, 64
        %v3938 = vpop.permute.xlu0 %3937
        %v3971 = vunpack.c.l.b16 %v3266
        %v3972 = vunpack.c.l.b16 %v3267
        %v3973 = vunpack.c.l.b16 %v3268
        %v3974 = vunpack.c.l.b16 %v3269
        %v3975 = vunpack.c.l.b16 %v3270
        %v3976 = vunpack.c.l.b16 %v3271
        %v3977 = vunpack.c.l.b16 %v3272
        %v3978 = vunpack.c.l.b16 %v3273
        %v3979 = vunpack.c.l.b16 %v3274
        %v3980 = vunpack.c.l.b16 %v3275
        %v3981 = vunpack.c.l.b16 %v3276
        %v3982 = vunpack.c.l.b16 %v3277
        %v3983 = vunpack.c.l.b16 %v3278
        %v3984 = vunpack.c.l.b16 %v3279
        %v3985 = vunpack.c.l.b16 %v3280
        %v3986 = vunpack.c.l.b16 %v3281
        %v3987 = vunpack.c.l.b16 %v3282
        %v3988 = vunpack.c.l.b16 %v3283
        %v3989 = vunpack.c.l.b16 %v3284
        %v3990 = vunpack.c.l.b16 %v3285
        %v3991 = vunpack.c.l.b16 %v3286
        %v3992 = vunpack.c.l.b16 %v3287
        %v3993 = vunpack.c.l.b16 %v3288
        %v3994 = vunpack.c.l.b16 %v3289
        %v3995 = vunpack.c.l.b16 %v3290
        %v3996 = vunpack.c.l.b16 %v3291
        %v3997 = vunpack.c.l.b16 %v3292
        %v3998 = vunpack.c.l.b16 %v3293
        %v3999 = vunpack.c.l.b16 %v3294
        %v4000 = vunpack.c.l.b16 %v3295
        %v4001 = vunpack.c.l.b16 %v3296
        %v4002 = vunpack.c.l.b16 %v3297
        %v4003 = vpack.c.b16 %v3972, %v3971
        %v4004 = vpack.c.b16 %v3974, %v3973
        %v4005 = vpack.c.b16 %v3976, %v3975
        %v4006 = vpack.c.b16 %v3978, %v3977
        %v4007 = vpack.c.b16 %v3980, %v3979
        %v4008 = vpack.c.b16 %v3982, %v3981
        %v4009 = vpack.c.b16 %v3984, %v3983
        %v4010 = vpack.c.b16 %v3986, %v3985
        %v4011 = vpack.c.b16 %v3988, %v3987
        %v4012 = vpack.c.b16 %v3990, %v3989
        %v4013 = vpack.c.b16 %v3992, %v3991
        %v4014 = vpack.c.b16 %v3994, %v3993
        %v4015 = vpack.c.b16 %v3996, %v3995
        %v4016 = vpack.c.b16 %v3998, %v3997
        %v4017 = vpack.c.b16 %v4000, %v3999
        %v4018 = vpack.c.b16 %v4002, %v4001
        %v4051 = vunpack.c.l.b16 %v3330
        %v4052 = vunpack.c.l.b16 %v3331
        %v4053 = vunpack.c.l.b16 %v3332
        %v4054 = vunpack.c.l.b16 %v3333
        %v4055 = vunpack.c.l.b16 %v3334
        %v4056 = vunpack.c.l.b16 %v3335
        %v4057 = vunpack.c.l.b16 %v3336
        %v4058 = vunpack.c.l.b16 %v3337
        %v4059 = vunpack.c.l.b16 %v3338
        %v4060 = vunpack.c.l.b16 %v3339
        %v4061 = vunpack.c.l.b16 %v3340
        %v4062 = vunpack.c.l.b16 %v3341
        %v4063 = vunpack.c.l.b16 %v3342
        %v4064 = vunpack.c.l.b16 %v3343
        %v4065 = vunpack.c.l.b16 %v3344
        %v4066 = vunpack.c.l.b16 %v3345
        %v4067 = vunpack.c.l.b16 %v3346
        %v4068 = vunpack.c.l.b16 %v3347
        %v4069 = vunpack.c.l.b16 %v3348
        %v4070 = vunpack.c.l.b16 %v3349
        %v4071 = vunpack.c.l.b16 %v3350
        %v4072 = vunpack.c.l.b16 %v3351
        %v4073 = vunpack.c.l.b16 %v3352
        %v4074 = vunpack.c.l.b16 %v3353
        %v4075 = vunpack.c.l.b16 %v3354
        %v4076 = vunpack.c.l.b16 %v3355
        %v4077 = vunpack.c.l.b16 %v3356
        %v4078 = vunpack.c.l.b16 %v3357
        %v4079 = vunpack.c.l.b16 %v3358
        %v4080 = vunpack.c.l.b16 %v3359
        %v4081 = vunpack.c.l.b16 %v3360
        %v4082 = vunpack.c.l.b16 %v3361
        %v4083 = vpack.c.b16 %v4052, %v4051
        %v4084 = vpack.c.b16 %v4054, %v4053
        %v4085 = vpack.c.b16 %v4056, %v4055
        %v4086 = vpack.c.b16 %v4058, %v4057
        %v4087 = vpack.c.b16 %v4060, %v4059
        %v4088 = vpack.c.b16 %v4062, %v4061
        %v4089 = vpack.c.b16 %v4064, %v4063
        %v4090 = vpack.c.b16 %v4066, %v4065
        %v4091 = vpack.c.b16 %v4068, %v4067
        %v4092 = vpack.c.b16 %v4070, %v4069
        %v4093 = vpack.c.b16 %v4072, %v4071
        %v4094 = vpack.c.b16 %v4074, %v4073
        %v4095 = vpack.c.b16 %v4076, %v4075
        %v4096 = vpack.c.b16 %v4078, %v4077
        %v4097 = vpack.c.b16 %v4080, %v4079
        %v4098 = vpack.c.b16 %v4082, %v4081
        %4099 = vrot.lane.b32.xlu0 %v4083, 64
        %v4100 = vpop.permute.xlu0 %4099
        %4101 = vrot.lane.b32.xlu0 %v4084, 64
        %v4102 = vpop.permute.xlu0 %4101
        %4103 = vrot.lane.b32.xlu0 %v4085, 64
        %v4104 = vpop.permute.xlu0 %4103
        %4105 = vrot.lane.b32.xlu0 %v4086, 64
        %v4106 = vpop.permute.xlu0 %4105
        %4107 = vrot.lane.b32.xlu0 %v4087, 64
        %v4108 = vpop.permute.xlu0 %4107
        %4109 = vrot.lane.b32.xlu0 %v4088, 64
        %v4110 = vpop.permute.xlu0 %4109
        %4111 = vrot.lane.b32.xlu0 %v4089, 64
        %v4112 = vpop.permute.xlu0 %4111
        %4113 = vrot.lane.b32.xlu0 %v4090, 64
        %v4114 = vpop.permute.xlu0 %4113
        %4115 = vrot.lane.b32.xlu0 %v4091, 64
        %v4116 = vpop.permute.xlu0 %4115
        %4117 = vrot.lane.b32.xlu0 %v4092, 64
        %v4118 = vpop.permute.xlu0 %4117
        %4119 = vrot.lane.b32.xlu0 %v4093, 64
        %v4120 = vpop.permute.xlu0 %4119
        %4121 = vrot.lane.b32.xlu0 %v4094, 64
        %v4122 = vpop.permute.xlu0 %4121
        %4123 = vrot.lane.b32.xlu0 %v4095, 64
        %v4124 = vpop.permute.xlu0 %4123
        %4125 = vrot.lane.b32.xlu0 %v4096, 64
        %v4126 = vpop.permute.xlu0 %4125
        %4127 = vrot.lane.b32.xlu0 %v4097, 64
        %v4128 = vpop.permute.xlu0 %4127
        %4129 = vrot.lane.b32.xlu0 %v4098, 64
        %v4130 = vpop.permute.xlu0 %4129
        %v4163 = vunpack.c.l.b16 %v3395
        %v4164 = vunpack.c.l.b16 %v3396
        %v4165 = vunpack.c.l.b16 %v3397
        %v4166 = vunpack.c.l.b16 %v3398
        %v4167 = vunpack.c.l.b16 %v3399
        %v4168 = vunpack.c.l.b16 %v3400
        %v4169 = vunpack.c.l.b16 %v3401
        %v4170 = vunpack.c.l.b16 %v3402
        %v4171 = vunpack.c.l.b16 %v3403
        %v4172 = vunpack.c.l.b16 %v3404
        %v4173 = vunpack.c.l.b16 %v3405
        %v4174 = vunpack.c.l.b16 %v3406
        %v4175 = vunpack.c.l.b16 %v3407
        %v4176 = vunpack.c.l.b16 %v3408
        %v4177 = vunpack.c.l.b16 %v3409
        %v4178 = vunpack.c.l.b16 %v3410
        %v4179 = vunpack.c.l.b16 %v3411
        %v4180 = vunpack.c.l.b16 %v3412
        %v4181 = vunpack.c.l.b16 %v3413
        %v4182 = vunpack.c.l.b16 %v3414
        %v4183 = vunpack.c.l.b16 %v3415
        %v4184 = vunpack.c.l.b16 %v3416
        %v4185 = vunpack.c.l.b16 %v3417
        %v4186 = vunpack.c.l.b16 %v3418
        %v4187 = vunpack.c.l.b16 %v3419
        %v4188 = vunpack.c.l.b16 %v3420
        %v4189 = vunpack.c.l.b16 %v3421
        %v4190 = vunpack.c.l.b16 %v3422
        %v4191 = vunpack.c.l.b16 %v3423
        %v4192 = vunpack.c.l.b16 %v3424
        %v4193 = vunpack.c.l.b16 %v3425
        %v4194 = vunpack.c.l.b16 %v3426
        %v4195 = vpack.c.b16 %v4164, %v4163
        %v4196 = vpack.c.b16 %v4166, %v4165
        %v4197 = vpack.c.b16 %v4168, %v4167
        %v4198 = vpack.c.b16 %v4170, %v4169
        %v4199 = vpack.c.b16 %v4172, %v4171
        %v4200 = vpack.c.b16 %v4174, %v4173
        %v4201 = vpack.c.b16 %v4176, %v4175
        %v4202 = vpack.c.b16 %v4178, %v4177
        %v4203 = vpack.c.b16 %v4180, %v4179
        %v4204 = vpack.c.b16 %v4182, %v4181
        %v4205 = vpack.c.b16 %v4184, %v4183
        %v4206 = vpack.c.b16 %v4186, %v4185
        %v4207 = vpack.c.b16 %v4188, %v4187
        %v4208 = vpack.c.b16 %v4190, %v4189
        %v4209 = vpack.c.b16 %v4192, %v4191
        %v4210 = vpack.c.b16 %v4194, %v4193
        %v4243 = vunpack.c.l.b16 %v3459
        %v4244 = vunpack.c.l.b16 %v3460
        %v4245 = vunpack.c.l.b16 %v3461
        %v4246 = vunpack.c.l.b16 %v3462
        %v4247 = vunpack.c.l.b16 %v3463
        %v4248 = vunpack.c.l.b16 %v3464
        %v4249 = vunpack.c.l.b16 %v3465
        %v4250 = vunpack.c.l.b16 %v3466
        %v4251 = vunpack.c.l.b16 %v3467
        %v4252 = vunpack.c.l.b16 %v3468
        %v4253 = vunpack.c.l.b16 %v3469
        %v4254 = vunpack.c.l.b16 %v3470
        %v4255 = vunpack.c.l.b16 %v3471
        %v4256 = vunpack.c.l.b16 %v3472
        %v4257 = vunpack.c.l.b16 %v3473
        %v4258 = vunpack.c.l.b16 %v3474
        %v4259 = vunpack.c.l.b16 %v3475
        %v4260 = vunpack.c.l.b16 %v3476
        %v4261 = vunpack.c.l.b16 %v3477
        %v4262 = vunpack.c.l.b16 %v3478
        %v4263 = vunpack.c.l.b16 %v3479
        %v4264 = vunpack.c.l.b16 %v3480
        %v4265 = vunpack.c.l.b16 %v3481
        %v4266 = vunpack.c.l.b16 %v3482
        %v4267 = vunpack.c.l.b16 %v3483
        %v4268 = vunpack.c.l.b16 %v3484
        %v4269 = vunpack.c.l.b16 %v3485
        %v4270 = vunpack.c.l.b16 %v3486
        %v4271 = vunpack.c.l.b16 %v3487
        %v4272 = vunpack.c.l.b16 %v3488
        %v4273 = vunpack.c.l.b16 %v3489
        %v4274 = vunpack.c.l.b16 %v3490
        %v4275 = vpack.c.b16 %v4244, %v4243
        %v4276 = vpack.c.b16 %v4246, %v4245
        %v4277 = vpack.c.b16 %v4248, %v4247
        %v4278 = vpack.c.b16 %v4250, %v4249
        %v4279 = vpack.c.b16 %v4252, %v4251
        %v4280 = vpack.c.b16 %v4254, %v4253
        %v4281 = vpack.c.b16 %v4256, %v4255
        %v4282 = vpack.c.b16 %v4258, %v4257
        %v4283 = vpack.c.b16 %v4260, %v4259
        %v4284 = vpack.c.b16 %v4262, %v4261
        %v4285 = vpack.c.b16 %v4264, %v4263
        %v4286 = vpack.c.b16 %v4266, %v4265
        %v4287 = vpack.c.b16 %v4268, %v4267
        %v4288 = vpack.c.b16 %v4270, %v4269
        %v4289 = vpack.c.b16 %v4272, %v4271
        %v4290 = vpack.c.b16 %v4274, %v4273
        %4291 = vrot.lane.b32.xlu0 %v4275, 64
        %v4292 = vpop.permute.xlu0 %4291
        %4293 = vrot.lane.b32.xlu0 %v4276, 64
        %v4294 = vpop.permute.xlu0 %4293
        %4295 = vrot.lane.b32.xlu0 %v4277, 64
        %v4296 = vpop.permute.xlu0 %4295
        %4297 = vrot.lane.b32.xlu0 %v4278, 64
        %v4298 = vpop.permute.xlu0 %4297
        %4299 = vrot.lane.b32.xlu0 %v4279, 64
        %v4300 = vpop.permute.xlu0 %4299
        %4301 = vrot.lane.b32.xlu0 %v4280, 64
        %v4302 = vpop.permute.xlu0 %4301
        %4303 = vrot.lane.b32.xlu0 %v4281, 64
        %v4304 = vpop.permute.xlu0 %4303
        %4305 = vrot.lane.b32.xlu0 %v4282, 64
        %v4306 = vpop.permute.xlu0 %4305
        %4307 = vrot.lane.b32.xlu0 %v4283, 64
        %v4308 = vpop.permute.xlu0 %4307
        %4309 = vrot.lane.b32.xlu0 %v4284, 64
        %v4310 = vpop.permute.xlu0 %4309
        %4311 = vrot.lane.b32.xlu0 %v4285, 64
        %v4312 = vpop.permute.xlu0 %4311
        %4313 = vrot.lane.b32.xlu0 %v4286, 64
        %v4314 = vpop.permute.xlu0 %4313
        %4315 = vrot.lane.b32.xlu0 %v4287, 64
        %v4316 = vpop.permute.xlu0 %4315
        %4317 = vrot.lane.b32.xlu0 %v4288, 64
        %v4318 = vpop.permute.xlu0 %4317
        %4319 = vrot.lane.b32.xlu0 %v4289, 64
        %v4320 = vpop.permute.xlu0 %4319
        %4321 = vrot.lane.b32.xlu0 %v4290, 64
        %v4322 = vpop.permute.xlu0 %4321
        %v4355 = vunpack.c.l.b16 %v3523
        %v4356 = vunpack.c.l.b16 %v3524
        %v4357 = vunpack.c.l.b16 %v3525
        %v4358 = vunpack.c.l.b16 %v3526
        %v4359 = vunpack.c.l.b16 %v3527
        %v4360 = vunpack.c.l.b16 %v3528
        %v4361 = vunpack.c.l.b16 %v3529
        %v4362 = vunpack.c.l.b16 %v3530
        %v4363 = vunpack.c.l.b16 %v3531
        %v4364 = vunpack.c.l.b16 %v3532
        %v4365 = vunpack.c.l.b16 %v3533
        %v4366 = vunpack.c.l.b16 %v3534
        %v4367 = vunpack.c.l.b16 %v3535
        %v4368 = vunpack.c.l.b16 %v3536
        %v4369 = vunpack.c.l.b16 %v3537
        %v4370 = vunpack.c.l.b16 %v3538
        %v4371 = vunpack.c.l.b16 %v3539
        %v4372 = vunpack.c.l.b16 %v3540
        %v4373 = vunpack.c.l.b16 %v3541
        %v4374 = vunpack.c.l.b16 %v3542
        %v4375 = vunpack.c.l.b16 %v3543
        %v4376 = vunpack.c.l.b16 %v3544
        %v4377 = vunpack.c.l.b16 %v3545
        %v4378 = vunpack.c.l.b16 %v3546
        %v4379 = vunpack.c.l.b16 %v3547
        %v4380 = vunpack.c.l.b16 %v3548
        %v4381 = vunpack.c.l.b16 %v3549
        %v4382 = vunpack.c.l.b16 %v3550
        %v4383 = vunpack.c.l.b16 %v3551
        %v4384 = vunpack.c.l.b16 %v3552
        %v4385 = vunpack.c.l.b16 %v3553
        %v4386 = vunpack.c.l.b16 %v3554
        %v4387 = vpack.c.b16 %v4356, %v4355
        %v4388 = vpack.c.b16 %v4358, %v4357
        %v4389 = vpack.c.b16 %v4360, %v4359
        %v4390 = vpack.c.b16 %v4362, %v4361
        %v4391 = vpack.c.b16 %v4364, %v4363
        %v4392 = vpack.c.b16 %v4366, %v4365
        %v4393 = vpack.c.b16 %v4368, %v4367
        %v4394 = vpack.c.b16 %v4370, %v4369
        %v4395 = vpack.c.b16 %v4372, %v4371
        %v4396 = vpack.c.b16 %v4374, %v4373
        %v4397 = vpack.c.b16 %v4376, %v4375
        %v4398 = vpack.c.b16 %v4378, %v4377
        %v4399 = vpack.c.b16 %v4380, %v4379
        %v4400 = vpack.c.b16 %v4382, %v4381
        %v4401 = vpack.c.b16 %v4384, %v4383
        %v4402 = vpack.c.b16 %v4386, %v4385
        %v4405 = vsel %vm294, %v3619, %v3716
        %v4409 = vsel %vm294, %v3620, %v3718
        %v4413 = vsel %vm294, %v3621, %v3720
        %v4417 = vsel %vm294, %v3622, %v3722
        %v4421 = vsel %vm294, %v3623, %v3724
        %v4425 = vsel %vm294, %v3624, %v3726
        %v4429 = vsel %vm294, %v3625, %v3728
        %v4433 = vsel %vm294, %v3626, %v3730
        %v4437 = vsel %vm294, %v3627, %v3732
        %v4441 = vsel %vm294, %v3628, %v3734
        %v4445 = vsel %vm294, %v3629, %v3736
        %v4449 = vsel %vm294, %v3630, %v3738
        %v4453 = vsel %vm294, %v3631, %v3740
        %v4457 = vsel %vm294, %v3632, %v3742
        %v4461 = vsel %vm294, %v3633, %v3744
        %v4465 = vsel %vm294, %v3634, %v3746
        %v4469 = vsel %vm294, %v3811, %v3908
        %v4473 = vsel %vm294, %v3812, %v3910
        %v4477 = vsel %vm294, %v3813, %v3912
        %v4481 = vsel %vm294, %v3814, %v3914
        %v4485 = vsel %vm294, %v3815, %v3916
        %v4489 = vsel %vm294, %v3816, %v3918
        %v4493 = vsel %vm294, %v3817, %v3920
        %v4497 = vsel %vm294, %v3818, %v3922
        %v4501 = vsel %vm294, %v3819, %v3924
        %v4505 = vsel %vm294, %v3820, %v3926
        %v4509 = vsel %vm294, %v3821, %v3928
        %v4513 = vsel %vm294, %v3822, %v3930
        %v4517 = vsel %vm294, %v3823, %v3932
        %v4521 = vsel %vm294, %v3824, %v3934
        %v4525 = vsel %vm294, %v3825, %v3936
        %v4529 = vsel %vm294, %v3826, %v3938
        %v4533 = vsel %vm294, %v4003, %v4100
        %v4537 = vsel %vm294, %v4004, %v4102
        %v4541 = vsel %vm294, %v4005, %v4104
        %v4545 = vsel %vm294, %v4006, %v4106
        %v4549 = vsel %vm294, %v4007, %v4108
        %v4553 = vsel %vm294, %v4008, %v4110
        %v4557 = vsel %vm294, %v4009, %v4112
        %v4561 = vsel %vm294, %v4010, %v4114
        %v4565 = vsel %vm294, %v4011, %v4116
        %v4569 = vsel %vm294, %v4012, %v4118
        %v4573 = vsel %vm294, %v4013, %v4120
        %v4577 = vsel %vm294, %v4014, %v4122
        %v4581 = vsel %vm294, %v4015, %v4124
        %v4585 = vsel %vm294, %v4016, %v4126
        %v4589 = vsel %vm294, %v4017, %v4128
        %v4593 = vsel %vm294, %v4018, %v4130
        %v4597 = vsel %vm294, %v4195, %v4292
        %v4601 = vsel %vm294, %v4196, %v4294
        %v4605 = vsel %vm294, %v4197, %v4296
        %v4609 = vsel %vm294, %v4198, %v4298
        %v4613 = vsel %vm294, %v4199, %v4300
        %v4617 = vsel %vm294, %v4200, %v4302
        %v4621 = vsel %vm294, %v4201, %v4304
        %v4625 = vsel %vm294, %v4202, %v4306
        %v4629 = vsel %vm294, %v4203, %v4308
        %v4633 = vsel %vm294, %v4204, %v4310
        %v4637 = vsel %vm294, %v4205, %v4312
        %v4641 = vsel %vm294, %v4206, %v4314
        %v4645 = vsel %vm294, %v4207, %v4316
        %v4649 = vsel %vm294, %v4208, %v4318
        %v4653 = vsel %vm294, %v4209, %v4320
        %v4657 = vsel %vm294, %v4210, %v4322
        %v4659 = vld [vmem:[#allocation9] sm:$0xf]
        %v4660 = vld [vmem:[#allocation9 + $0x4] sm:$0xf]
        %v4661 = vld [vmem:[#allocation9 + $0x8] sm:$0xf]
        %v4662 = vld [vmem:[#allocation9 + $0xc] sm:$0xf]
        %v4663 = vld [vmem:[#allocation9 + $0x10] sm:$0xf]
        %v4664 = vld [vmem:[#allocation9 + $0x14] sm:$0xf]
        %v4665 = vld [vmem:[#allocation9 + $0x18] sm:$0xf]
        %v4666 = vld [vmem:[#allocation9 + $0x1c] sm:$0xf]
        %v4667 = vld [vmem:[#allocation9 + $0x20] sm:$0xf]
        %v4668 = vld [vmem:[#allocation9 + $0x24] sm:$0xf]
        %v4669 = vld [vmem:[#allocation9 + $0x28] sm:$0xf]
        %v4670 = vld [vmem:[#allocation9 + $0x2c] sm:$0xf]
        %v4671 = vld [vmem:[#allocation9 + $0x30] sm:$0xf]
        %v4672 = vld [vmem:[#allocation9 + $0x34] sm:$0xf]
        %v4673 = vld [vmem:[#allocation9 + $0x38] sm:$0xf]
        %v4674 = vld [vmem:[#allocation9 + $0x3c] sm:$0xf]
        %v4675 = vld [vmem:[#allocation9 + $0x40] sm:$0xf]
        %v4676 = vld [vmem:[#allocation9 + $0x44] sm:$0xf]
        %v4677 = vld [vmem:[#allocation9 + $0x48] sm:$0xf]
        %v4678 = vld [vmem:[#allocation9 + $0x4c] sm:$0xf]
        %v4679 = vld [vmem:[#allocation9 + $0x50] sm:$0xf]
        %v4680 = vld [vmem:[#allocation9 + $0x54] sm:$0xf]
        %v4681 = vld [vmem:[#allocation9 + $0x58] sm:$0xf]
        %v4682 = vld [vmem:[#allocation9 + $0x5c] sm:$0xf]
        %v4683 = vld [vmem:[#allocation9 + $0x60] sm:$0xf]
        %v4684 = vld [vmem:[#allocation9 + $0x64] sm:$0xf]
        %v4685 = vld [vmem:[#allocation9 + $0x68] sm:$0xf]
        %v4686 = vld [vmem:[#allocation9 + $0x6c] sm:$0xf]
        %v4687 = vld [vmem:[#allocation9 + $0x70] sm:$0xf]
        %v4688 = vld [vmem:[#allocation9 + $0x74] sm:$0xf]
        %v4689 = vld [vmem:[#allocation9 + $0x78] sm:$0xf]
        %v4690 = vld [vmem:[#allocation9 + $0x7c] sm:$0xf]
        %v4691 = vld [vmem:[#allocation9 + $0x80] sm:$0xf]
        %v4692 = vld [vmem:[#allocation9 + $0x84] sm:$0xf]
        %v4693 = vld [vmem:[#allocation9 + $0x88] sm:$0xf]
        %v4694 = vld [vmem:[#allocation9 + $0x8c] sm:$0xf]
        %v4695 = vld [vmem:[#allocation9 + $0x90] sm:$0xf]
        %v4696 = vld [vmem:[#allocation9 + $0x94] sm:$0xf]
        %v4697 = vld [vmem:[#allocation9 + $0x98] sm:$0xf]
        %v4698 = vld [vmem:[#allocation9 + $0x9c] sm:$0xf]
        %v4699 = vld [vmem:[#allocation9 + $0xa0] sm:$0xf]
        %v4700 = vld [vmem:[#allocation9 + $0xa4] sm:$0xf]
        %v4701 = vld [vmem:[#allocation9 + $0xa8] sm:$0xf]
        %v4702 = vld [vmem:[#allocation9 + $0xac] sm:$0xf]
        %v4703 = vld [vmem:[#allocation9 + $0xb0] sm:$0xf]
        %v4704 = vld [vmem:[#allocation9 + $0xb4] sm:$0xf]
        %v4705 = vld [vmem:[#allocation9 + $0xb8] sm:$0xf]
        %v4706 = vld [vmem:[#allocation9 + $0xbc] sm:$0xf]
        %v4707 = vld [vmem:[#allocation9 + $0xc0] sm:$0xf]
        %v4708 = vld [vmem:[#allocation9 + $0xc4] sm:$0xf]
        %v4709 = vld [vmem:[#allocation9 + $0xc8] sm:$0xf]
        %v4710 = vld [vmem:[#allocation9 + $0xcc] sm:$0xf]
        %v4711 = vld [vmem:[#allocation9 + $0xd0] sm:$0xf]
        %v4712 = vld [vmem:[#allocation9 + $0xd4] sm:$0xf]
        %v4713 = vld [vmem:[#allocation9 + $0xd8] sm:$0xf]
        %v4714 = vld [vmem:[#allocation9 + $0xdc] sm:$0xf]
        %v4715 = vld [vmem:[#allocation9 + $0xe0] sm:$0xf]
        %v4716 = vld [vmem:[#allocation9 + $0xe4] sm:$0xf]
        %v4717 = vld [vmem:[#allocation9 + $0xe8] sm:$0xf]
        %v4718 = vld [vmem:[#allocation9 + $0xec] sm:$0xf]
        %v4719 = vld [vmem:[#allocation9 + $0xf0] sm:$0xf]
        %v4720 = vld [vmem:[#allocation9 + $0xf4] sm:$0xf]
        %v4721 = vld [vmem:[#allocation9 + $0xf8] sm:$0xf]
        %v4722 = vld [vmem:[#allocation9 + $0xfc] sm:$0xf]
        %v4723 = vld [vmem:[#allocation9 + $0x100] sm:$0xf]
        %v4724 = vld [vmem:[#allocation9 + $0x104] sm:$0xf]
        %v4725 = vld [vmem:[#allocation9 + $0x108] sm:$0xf]
        %v4726 = vld [vmem:[#allocation9 + $0x10c] sm:$0xf]
        %v4727 = vld [vmem:[#allocation9 + $0x110] sm:$0xf]
        %v4728 = vld [vmem:[#allocation9 + $0x114] sm:$0xf]
        %v4729 = vld [vmem:[#allocation9 + $0x118] sm:$0xf]
        %v4730 = vld [vmem:[#allocation9 + $0x11c] sm:$0xf]
        %v4731 = vld [vmem:[#allocation10] sm:$0x1]
        %v4733 = vperm.slane %v4731, 0
        %v4807 = vunpack.c.l.b16 %v4659
        %v4808 = vunpack.c.l.b16 %v4660
        %v4809 = vunpack.c.l.b16 %v4661
        %v4810 = vunpack.c.l.b16 %v4662
        %v4811 = vunpack.c.l.b16 %v4663
        %v4812 = vunpack.c.l.b16 %v4664
        %v4813 = vunpack.c.l.b16 %v4665
        %v4814 = vunpack.c.l.b16 %v4666
        %v4815 = vunpack.c.l.b16 %v4667
        %v4816 = vunpack.c.l.b16 %v4668
        %v4817 = vunpack.c.l.b16 %v4669
        %v4818 = vunpack.c.l.b16 %v4670
        %v4819 = vunpack.c.l.b16 %v4671
        %v4820 = vunpack.c.l.b16 %v4672
        %v4821 = vunpack.c.l.b16 %v4673
        %v4822 = vunpack.c.l.b16 %v4674
        %v4823 = vunpack.c.l.b16 %v4675
        %v4824 = vunpack.c.l.b16 %v4676
        %v4825 = vunpack.c.l.b16 %v4677
        %v4826 = vunpack.c.l.b16 %v4678
        %v4827 = vunpack.c.l.b16 %v4679
        %v4828 = vunpack.c.l.b16 %v4680
        %v4829 = vunpack.c.l.b16 %v4681
        %v4830 = vunpack.c.l.b16 %v4682
        %v4831 = vunpack.c.l.b16 %v4683
        %v4832 = vunpack.c.l.b16 %v4684
        %v4833 = vunpack.c.l.b16 %v4685
        %v4834 = vunpack.c.l.b16 %v4686
        %v4835 = vunpack.c.l.b16 %v4687
        %v4836 = vunpack.c.l.b16 %v4688
        %v4837 = vunpack.c.l.b16 %v4689
        %v4838 = vunpack.c.l.b16 %v4690
        %v4839 = vunpack.c.l.b16 %v4691
        %v4840 = vunpack.c.l.b16 %v4692
        %v4841 = vunpack.c.l.b16 %v4693
        %v4842 = vunpack.c.l.b16 %v4694
        %v4843 = vunpack.c.l.b16 %v4695
        %v4844 = vunpack.c.l.b16 %v4696
        %v4845 = vunpack.c.l.b16 %v4697
        %v4846 = vunpack.c.l.b16 %v4698
        %v4847 = vunpack.c.l.b16 %v4699
        %v4848 = vunpack.c.l.b16 %v4700
        %v4849 = vunpack.c.l.b16 %v4701
        %v4850 = vunpack.c.l.b16 %v4702
        %v4851 = vunpack.c.l.b16 %v4703
        %v4852 = vunpack.c.l.b16 %v4704
        %v4853 = vunpack.c.l.b16 %v4705
        %v4854 = vunpack.c.l.b16 %v4706
        %v4855 = vunpack.c.l.b16 %v4707
        %v4856 = vunpack.c.l.b16 %v4708
        %v4857 = vunpack.c.l.b16 %v4709
        %v4858 = vunpack.c.l.b16 %v4710
        %v4859 = vunpack.c.l.b16 %v4711
        %v4860 = vunpack.c.l.b16 %v4712
        %v4861 = vunpack.c.l.b16 %v4713
        %v4862 = vunpack.c.l.b16 %v4714
        %v4863 = vunpack.c.l.b16 %v4715
        %v4864 = vunpack.c.l.b16 %v4716
        %v4865 = vunpack.c.l.b16 %v4717
        %v4866 = vunpack.c.l.b16 %v4718
        %v4867 = vunpack.c.l.b16 %v4719
        %v4868 = vunpack.c.l.b16 %v4720
        %v4869 = vunpack.c.l.b16 %v4721
        %v4870 = vunpack.c.l.b16 %v4722
        %v4871 = vunpack.c.l.b16 %v4723
        %v4872 = vunpack.c.l.b16 %v4724
        %v4873 = vunpack.c.l.b16 %v4725
        %v4874 = vunpack.c.l.b16 %v4726
        %v4875 = vunpack.c.l.b16 %v4727
        %v4876 = vunpack.c.l.b16 %v4728
        %v4877 = vunpack.c.l.b16 %v4729
        %v4878 = vunpack.c.l.b16 %v4730
        %v4879 = vpack.c.b16 %v4808, %v4807
        %v4880 = vpack.c.b16 %v4810, %v4809
        %v4881 = vpack.c.b16 %v4812, %v4811
        %v4882 = vpack.c.b16 %v4814, %v4813
        %v4883 = vpack.c.b16 %v4816, %v4815
        %v4884 = vpack.c.b16 %v4818, %v4817
        %v4885 = vpack.c.b16 %v4820, %v4819
        %v4886 = vpack.c.b16 %v4822, %v4821
        %v4887 = vpack.c.b16 %v4824, %v4823
        %v4888 = vpack.c.b16 %v4826, %v4825
        %v4889 = vpack.c.b16 %v4828, %v4827
        %v4890 = vpack.c.b16 %v4830, %v4829
        %v4891 = vpack.c.b16 %v4832, %v4831
        %v4892 = vpack.c.b16 %v4834, %v4833
        %v4893 = vpack.c.b16 %v4836, %v4835
        %v4894 = vpack.c.b16 %v4838, %v4837
        %v4895 = vpack.c.b16 %v4840, %v4839
        %v4896 = vpack.c.b16 %v4842, %v4841
        %v4897 = vpack.c.b16 %v4844, %v4843
        %v4898 = vpack.c.b16 %v4846, %v4845
        %v4899 = vpack.c.b16 %v4848, %v4847
        %v4900 = vpack.c.b16 %v4850, %v4849
        %v4901 = vpack.c.b16 %v4852, %v4851
        %v4902 = vpack.c.b16 %v4854, %v4853
        %v4903 = vpack.c.b16 %v4856, %v4855
        %v4904 = vpack.c.b16 %v4858, %v4857
        %v4905 = vpack.c.b16 %v4860, %v4859
        %v4906 = vpack.c.b16 %v4862, %v4861
        %v4907 = vpack.c.b16 %v4864, %v4863
        %v4908 = vpack.c.b16 %v4866, %v4865
        %v4909 = vpack.c.b16 %v4868, %v4867
        %v4910 = vpack.c.b16 %v4870, %v4869
        %v4911 = vpack.c.b16 %v4872, %v4871
        %v4912 = vpack.c.b16 %v4874, %v4873
        %v4913 = vpack.c.b16 %v4876, %v4875
        %v4914 = vpack.c.b16 %v4878, %v4877
        %v4952 = vsel %vm294, %v4387, 0
        %v4955 = vsel %vm294, %v4388, 0
        %v4958 = vsel %vm294, %v4389, 0
        %v4961 = vsel %vm294, %v4390, 0
        %v4964 = vsel %vm294, %v4391, 0
        %v4967 = vsel %vm294, %v4392, 0
        %v4970 = vsel %vm294, %v4393, 0
        %v4973 = vsel %vm294, %v4394, 0
        %v4976 = vsel %vm294, %v4395, 0
        %v4979 = vsel %vm294, %v4396, 0
        %v4982 = vsel %vm294, %v4397, 0
        %v4985 = vsel %vm294, %v4398, 0
        %v4988 = vsel %vm294, %v4399, 0
        %v4991 = vsel %vm294, %v4400, 0
        %v4994 = vsel %vm294, %v4401, 0
        %v4997 = vsel %vm294, %v4402, 0
        %4999 = vmatpush.bf16.msra.mxu0 %v4886
        %5000 = vmatpush.bf16.msra.mxu0 %v4885
        %5001 = vmatpush.bf16.msra.mxu0 %v4884
        %5002 = vmatpush.bf16.msra.mxu0 %v4883
        %5003 = vmatpush.bf16.msra.mxu0 %v4882
        %5004 = vmatpush.bf16.msra.mxu0 %v4881
        %5005 = vmatpush.bf16.msra.mxu0 %v4880
        %5006 = vmatpush.bf16.msra.mxu0 %v4879
        %5007 = vmatmul.bf16.gmra.mxu0 %v4405
        %v5008 = vpop.f32.mrf.mxu0
        %v5009 = vadd.f32 %v4733, %v5008
        %v5010 = vpop.f32.mrf.mxu0
        %v5011 = vadd.f32 %v4733, %v5010
        %5012 = vmatmul.bf16.gmra.mxu0 %v4409
        %v5013 = vpop.f32.mrf.mxu0
        %v5014 = vadd.f32 %v4733, %v5013
        %v5015 = vpop.f32.mrf.mxu0
        %v5016 = vadd.f32 %v4733, %v5015
        %5017 = vmatmul.bf16.gmra.mxu0 %v4413
        %v5018 = vpop.f32.mrf.mxu0
        %v5019 = vadd.f32 %v4733, %v5018
        %v5020 = vpop.f32.mrf.mxu0
        %v5021 = vadd.f32 %v4733, %v5020
        %5022 = vmatmul.bf16.gmra.mxu0 %v4417
        %v5023 = vpop.f32.mrf.mxu0
        %v5024 = vadd.f32 %v4733, %v5023
        %v5025 = vpop.f32.mrf.mxu0
        %v5026 = vadd.f32 %v4733, %v5025
        %5027 = vmatmul.bf16.gmra.mxu0 %v4421
        %v5028 = vpop.f32.mrf.mxu0
        %v5029 = vadd.f32 %v4733, %v5028
        %v5030 = vpop.f32.mrf.mxu0
        %v5031 = vadd.f32 %v4733, %v5030
        %5032 = vmatmul.bf16.gmra.mxu0 %v4425
        %v5033 = vpop.f32.mrf.mxu0
        %v5034 = vadd.f32 %v4733, %v5033
        %v5035 = vpop.f32.mrf.mxu0
        %v5036 = vadd.f32 %v4733, %v5035
        %5037 = vmatmul.bf16.gmra.mxu0 %v4429
        %v5038 = vpop.f32.mrf.mxu0
        %v5039 = vadd.f32 %v4733, %v5038
        %v5040 = vpop.f32.mrf.mxu0
        %v5041 = vadd.f32 %v4733, %v5040
        %5042 = vmatmul.bf16.gmra.mxu0 %v4433
        %v5043 = vpop.f32.mrf.mxu0
        %v5044 = vadd.f32 %v4733, %v5043
        %v5045 = vpop.f32.mrf.mxu0
        %v5046 = vadd.f32 %v4733, %v5045
        %5047 = vmatmul.bf16.gmra.mxu0 %v4437
        %v5048 = vpop.f32.mrf.mxu0
        %v5049 = vadd.f32 %v4733, %v5048
        %v5050 = vpop.f32.mrf.mxu0
        %v5051 = vadd.f32 %v4733, %v5050
        %5052 = vmatmul.bf16.gmra.mxu0 %v4441
        %v5053 = vpop.f32.mrf.mxu0
        %v5054 = vadd.f32 %v4733, %v5053
        %v5055 = vpop.f32.mrf.mxu0
        %v5056 = vadd.f32 %v4733, %v5055
        %5057 = vmatmul.bf16.gmra.mxu0 %v4445
        %v5058 = vpop.f32.mrf.mxu0
        %v5059 = vadd.f32 %v4733, %v5058
        %v5060 = vpop.f32.mrf.mxu0
        %v5061 = vadd.f32 %v4733, %v5060
        %5062 = vmatmul.bf16.gmra.mxu0 %v4449
        %v5063 = vpop.f32.mrf.mxu0
        %v5064 = vadd.f32 %v4733, %v5063
        %v5065 = vpop.f32.mrf.mxu0
        %v5066 = vadd.f32 %v4733, %v5065
        %5067 = vmatmul.bf16.gmra.mxu0 %v4453
        %v5068 = vpop.f32.mrf.mxu0
        %v5069 = vadd.f32 %v4733, %v5068
        %v5070 = vpop.f32.mrf.mxu0
        %v5071 = vadd.f32 %v4733, %v5070
        %5072 = vmatmul.bf16.gmra.mxu0 %v4457
        %v5073 = vpop.f32.mrf.mxu0
        %v5074 = vadd.f32 %v4733, %v5073
        %v5075 = vpop.f32.mrf.mxu0
        %v5076 = vadd.f32 %v4733, %v5075
        %5077 = vmatmul.bf16.gmra.mxu0 %v4461
        %v5078 = vpop.f32.mrf.mxu0
        %v5079 = vadd.f32 %v4733, %v5078
        %v5080 = vpop.f32.mrf.mxu0
        %v5081 = vadd.f32 %v4733, %v5080
        %5082 = vmatmul.bf16.gmra.mxu0 %v4465
        %v5083 = vpop.f32.mrf.mxu0
        %v5084 = vadd.f32 %v4733, %v5083
        %v5085 = vpop.f32.mrf.mxu0
        %v5086 = vadd.f32 %v4733, %v5085
        %5087 = vdwg.mxu0
        %5088 = vmatpush.bf16.msra.mxu0 %v4894
        %5089 = vmatpush.bf16.msra.mxu0 %v4893
        %5090 = vmatpush.bf16.msra.mxu0 %v4892
        %5091 = vmatpush.bf16.msra.mxu0 %v4891
        %5092 = vmatpush.bf16.msra.mxu0 %v4890
        %5093 = vmatpush.bf16.msra.mxu0 %v4889
        %5094 = vmatpush.bf16.msra.mxu0 %v4888
        %5095 = vmatpush.bf16.msra.mxu0 %v4887
        %5096 = vmatmul.bf16.gmra.mxu0 %v4469
        %v5097 = vpop.f32.mrf.mxu0
        %v5098 = vadd.f32 %v5009, %v5097
        %v5099 = vpop.f32.mrf.mxu0
        %v5100 = vadd.f32 %v5011, %v5099
        %5101 = vmatmul.bf16.gmra.mxu0 %v4473
        %v5102 = vpop.f32.mrf.mxu0
        %v5103 = vadd.f32 %v5014, %v5102
        %v5104 = vpop.f32.mrf.mxu0
        %v5105 = vadd.f32 %v5016, %v5104
        %5106 = vmatmul.bf16.gmra.mxu0 %v4477
        %v5107 = vpop.f32.mrf.mxu0
        %v5108 = vadd.f32 %v5019, %v5107
        %v5109 = vpop.f32.mrf.mxu0
        %v5110 = vadd.f32 %v5021, %v5109
        %5111 = vmatmul.bf16.gmra.mxu0 %v4481
        %v5112 = vpop.f32.mrf.mxu0
        %v5113 = vadd.f32 %v5024, %v5112
        %v5114 = vpop.f32.mrf.mxu0
        %v5115 = vadd.f32 %v5026, %v5114
        %5116 = vmatmul.bf16.gmra.mxu0 %v4485
        %v5117 = vpop.f32.mrf.mxu0
        %v5118 = vadd.f32 %v5029, %v5117
        %v5119 = vpop.f32.mrf.mxu0
        %v5120 = vadd.f32 %v5031, %v5119
        %5121 = vmatmul.bf16.gmra.mxu0 %v4489
        %v5122 = vpop.f32.mrf.mxu0
        %v5123 = vadd.f32 %v5034, %v5122
        %v5124 = vpop.f32.mrf.mxu0
        %v5125 = vadd.f32 %v5036, %v5124
        %5126 = vmatmul.bf16.gmra.mxu0 %v4493
        %v5127 = vpop.f32.mrf.mxu0
        %v5128 = vadd.f32 %v5039, %v5127
        %v5129 = vpop.f32.mrf.mxu0
        %v5130 = vadd.f32 %v5041, %v5129
        %5131 = vmatmul.bf16.gmra.mxu0 %v4497
        %v5132 = vpop.f32.mrf.mxu0
        %v5133 = vadd.f32 %v5044, %v5132
        %v5134 = vpop.f32.mrf.mxu0
        %v5135 = vadd.f32 %v5046, %v5134
        %5136 = vmatmul.bf16.gmra.mxu0 %v4501
        %v5137 = vpop.f32.mrf.mxu0
        %v5138 = vadd.f32 %v5049, %v5137
        %v5139 = vpop.f32.mrf.mxu0
        %v5140 = vadd.f32 %v5051, %v5139
        %5141 = vmatmul.bf16.gmra.mxu0 %v4505
        %v5142 = vpop.f32.mrf.mxu0
        %v5143 = vadd.f32 %v5054, %v5142
        %v5144 = vpop.f32.mrf.mxu0
        %v5145 = vadd.f32 %v5056, %v5144
        %5146 = vmatmul.bf16.gmra.mxu0 %v4509
        %v5147 = vpop.f32.mrf.mxu0
        %v5148 = vadd.f32 %v5059, %v5147
        %v5149 = vpop.f32.mrf.mxu0
        %v5150 = vadd.f32 %v5061, %v5149
        %5151 = vmatmul.bf16.gmra.mxu0 %v4513
        %v5152 = vpop.f32.mrf.mxu0
        %v5153 = vadd.f32 %v5064, %v5152
        %v5154 = vpop.f32.mrf.mxu0
        %v5155 = vadd.f32 %v5066, %v5154
        %5156 = vmatmul.bf16.gmra.mxu0 %v4517
        %v5157 = vpop.f32.mrf.mxu0
        %v5158 = vadd.f32 %v5069, %v5157
        %v5159 = vpop.f32.mrf.mxu0
        %v5160 = vadd.f32 %v5071, %v5159
        %5161 = vmatmul.bf16.gmra.mxu0 %v4521
        %v5162 = vpop.f32.mrf.mxu0
        %v5163 = vadd.f32 %v5074, %v5162
        %v5164 = vpop.f32.mrf.mxu0
        %v5165 = vadd.f32 %v5076, %v5164
        %5166 = vmatmul.bf16.gmra.mxu0 %v4525
        %v5167 = vpop.f32.mrf.mxu0
        %v5168 = vadd.f32 %v5079, %v5167
        %v5169 = vpop.f32.mrf.mxu0
        %v5170 = vadd.f32 %v5081, %v5169
        %5171 = vmatmul.bf16.gmra.mxu0 %v4529
        %v5172 = vpop.f32.mrf.mxu0
        %v5173 = vadd.f32 %v5084, %v5172
        %v5174 = vpop.f32.mrf.mxu0
        %v5175 = vadd.f32 %v5086, %v5174
        %5176 = vdwg.mxu0
        %5177 = vmatpush.bf16.msra.mxu0 %v4902
        %5178 = vmatpush.bf16.msra.mxu0 %v4901
        %5179 = vmatpush.bf16.msra.mxu0 %v4900
        %5180 = vmatpush.bf16.msra.mxu0 %v4899
        %5181 = vmatpush.bf16.msra.mxu0 %v4898
        %5182 = vmatpush.bf16.msra.mxu0 %v4897
        %5183 = vmatpush.bf16.msra.mxu0 %v4896
        %5184 = vmatpush.bf16.msra.mxu0 %v4895
        %5185 = vmatmul.bf16.gmra.mxu0 %v4533
        %v5186 = vpop.f32.mrf.mxu0
        %v5187 = vadd.f32 %v5098, %v5186
        %v5188 = vpop.f32.mrf.mxu0
        %v5189 = vadd.f32 %v5100, %v5188
        %5190 = vmatmul.bf16.gmra.mxu0 %v4537
        %v5191 = vpop.f32.mrf.mxu0
        %v5192 = vadd.f32 %v5103, %v5191
        %v5193 = vpop.f32.mrf.mxu0
        %v5194 = vadd.f32 %v5105, %v5193
        %5195 = vmatmul.bf16.gmra.mxu0 %v4541
        %v5196 = vpop.f32.mrf.mxu0
        %v5197 = vadd.f32 %v5108, %v5196
        %v5198 = vpop.f32.mrf.mxu0
        %v5199 = vadd.f32 %v5110, %v5198
        %5200 = vmatmul.bf16.gmra.mxu0 %v4545
        %v5201 = vpop.f32.mrf.mxu0
        %v5202 = vadd.f32 %v5113, %v5201
        %v5203 = vpop.f32.mrf.mxu0
        %v5204 = vadd.f32 %v5115, %v5203
        %5205 = vmatmul.bf16.gmra.mxu0 %v4549
        %v5206 = vpop.f32.mrf.mxu0
        %v5207 = vadd.f32 %v5118, %v5206
        %v5208 = vpop.f32.mrf.mxu0
        %v5209 = vadd.f32 %v5120, %v5208
        %5210 = vmatmul.bf16.gmra.mxu0 %v4553
        %v5211 = vpop.f32.mrf.mxu0
        %v5212 = vadd.f32 %v5123, %v5211
        %v5213 = vpop.f32.mrf.mxu0
        %v5214 = vadd.f32 %v5125, %v5213
        %5215 = vmatmul.bf16.gmra.mxu0 %v4557
        %v5216 = vpop.f32.mrf.mxu0
        %v5217 = vadd.f32 %v5128, %v5216
        %v5218 = vpop.f32.mrf.mxu0
        %v5219 = vadd.f32 %v5130, %v5218
        %5220 = vmatmul.bf16.gmra.mxu0 %v4561
        %v5221 = vpop.f32.mrf.mxu0
        %v5222 = vadd.f32 %v5133, %v5221
        %v5223 = vpop.f32.mrf.mxu0
        %v5224 = vadd.f32 %v5135, %v5223
        %5225 = vmatmul.bf16.gmra.mxu0 %v4565
        %v5226 = vpop.f32.mrf.mxu0
        %v5227 = vadd.f32 %v5138, %v5226
        %v5228 = vpop.f32.mrf.mxu0
        %v5229 = vadd.f32 %v5140, %v5228
        %5230 = vmatmul.bf16.gmra.mxu0 %v4569
        %v5231 = vpop.f32.mrf.mxu0
        %v5232 = vadd.f32 %v5143, %v5231
        %v5233 = vpop.f32.mrf.mxu0
        %v5234 = vadd.f32 %v5145, %v5233
        %5235 = vmatmul.bf16.gmra.mxu0 %v4573
        %v5236 = vpop.f32.mrf.mxu0
        %v5237 = vadd.f32 %v5148, %v5236
        %v5238 = vpop.f32.mrf.mxu0
        %v5239 = vadd.f32 %v5150, %v5238
        %5240 = vmatmul.bf16.gmra.mxu0 %v4577
        %v5241 = vpop.f32.mrf.mxu0
        %v5242 = vadd.f32 %v5153, %v5241
        %v5243 = vpop.f32.mrf.mxu0
        %v5244 = vadd.f32 %v5155, %v5243
        %5245 = vmatmul.bf16.gmra.mxu0 %v4581
        %v5246 = vpop.f32.mrf.mxu0
        %v5247 = vadd.f32 %v5158, %v5246
        %v5248 = vpop.f32.mrf.mxu0
        %v5249 = vadd.f32 %v5160, %v5248
        %5250 = vmatmul.bf16.gmra.mxu0 %v4585
        %v5251 = vpop.f32.mrf.mxu0
        %v5252 = vadd.f32 %v5163, %v5251
        %v5253 = vpop.f32.mrf.mxu0
        %v5254 = vadd.f32 %v5165, %v5253
        %5255 = vmatmul.bf16.gmra.mxu0 %v4589
        %v5256 = vpop.f32.mrf.mxu0
        %v5257 = vadd.f32 %v5168, %v5256
        %v5258 = vpop.f32.mrf.mxu0
        %v5259 = vadd.f32 %v5170, %v5258
        %5260 = vmatmul.bf16.gmra.mxu0 %v4593
        %v5261 = vpop.f32.mrf.mxu0
        %v5262 = vadd.f32 %v5173, %v5261
        %v5263 = vpop.f32.mrf.mxu0
        %v5264 = vadd.f32 %v5175, %v5263
        %5265 = vdwg.mxu0
        %5266 = vmatpush.bf16.msra.mxu0 %v4910
        %5267 = vmatpush.bf16.msra.mxu0 %v4909
        %5268 = vmatpush.bf16.msra.mxu0 %v4908
        %5269 = vmatpush.bf16.msra.mxu0 %v4907
        %5270 = vmatpush.bf16.msra.mxu0 %v4906
        %5271 = vmatpush.bf16.msra.mxu0 %v4905
        %5272 = vmatpush.bf16.msra.mxu0 %v4904
        %5273 = vmatpush.bf16.msra.mxu0 %v4903
        %5274 = vmatmul.bf16.gmra.mxu0 %v4597
        %v5275 = vpop.f32.mrf.mxu0
        %v5276 = vadd.f32 %v5187, %v5275
        %v5277 = vpop.f32.mrf.mxu0
        %v5278 = vadd.f32 %v5189, %v5277
        %5279 = vmatmul.bf16.gmra.mxu0 %v4601
        %v5280 = vpop.f32.mrf.mxu0
        %v5281 = vadd.f32 %v5192, %v5280
        %v5282 = vpop.f32.mrf.mxu0
        %v5283 = vadd.f32 %v5194, %v5282
        %5284 = vmatmul.bf16.gmra.mxu0 %v4605
        %v5285 = vpop.f32.mrf.mxu0
        %v5286 = vadd.f32 %v5197, %v5285
        %v5287 = vpop.f32.mrf.mxu0
        %v5288 = vadd.f32 %v5199, %v5287
        %5289 = vmatmul.bf16.gmra.mxu0 %v4609
        %v5290 = vpop.f32.mrf.mxu0
        %v5291 = vadd.f32 %v5202, %v5290
        %v5292 = vpop.f32.mrf.mxu0
        %v5293 = vadd.f32 %v5204, %v5292
        %5294 = vmatmul.bf16.gmra.mxu0 %v4613
        %v5295 = vpop.f32.mrf.mxu0
        %v5296 = vadd.f32 %v5207, %v5295
        %v5297 = vpop.f32.mrf.mxu0
        %v5298 = vadd.f32 %v5209, %v5297
        %5299 = vmatmul.bf16.gmra.mxu0 %v4617
        %v5300 = vpop.f32.mrf.mxu0
        %v5301 = vadd.f32 %v5212, %v5300
        %v5302 = vpop.f32.mrf.mxu0
        %v5303 = vadd.f32 %v5214, %v5302
        %5304 = vmatmul.bf16.gmra.mxu0 %v4621
        %v5305 = vpop.f32.mrf.mxu0
        %v5306 = vadd.f32 %v5217, %v5305
        %v5307 = vpop.f32.mrf.mxu0
        %v5308 = vadd.f32 %v5219, %v5307
        %5309 = vmatmul.bf16.gmra.mxu0 %v4625
        %v5310 = vpop.f32.mrf.mxu0
        %v5311 = vadd.f32 %v5222, %v5310
        %v5312 = vpop.f32.mrf.mxu0
        %v5313 = vadd.f32 %v5224, %v5312
        %5314 = vmatmul.bf16.gmra.mxu0 %v4629
        %v5315 = vpop.f32.mrf.mxu0
        %v5316 = vadd.f32 %v5227, %v5315
        %v5317 = vpop.f32.mrf.mxu0
        %v5318 = vadd.f32 %v5229, %v5317
        %5319 = vmatmul.bf16.gmra.mxu0 %v4633
        %v5320 = vpop.f32.mrf.mxu0
        %v5321 = vadd.f32 %v5232, %v5320
        %v5322 = vpop.f32.mrf.mxu0
        %v5323 = vadd.f32 %v5234, %v5322
        %5324 = vmatmul.bf16.gmra.mxu0 %v4637
        %v5325 = vpop.f32.mrf.mxu0
        %v5326 = vadd.f32 %v5237, %v5325
        %v5327 = vpop.f32.mrf.mxu0
        %v5328 = vadd.f32 %v5239, %v5327
        %5329 = vmatmul.bf16.gmra.mxu0 %v4641
        %v5330 = vpop.f32.mrf.mxu0
        %v5331 = vadd.f32 %v5242, %v5330
        %v5332 = vpop.f32.mrf.mxu0
        %v5333 = vadd.f32 %v5244, %v5332
        %5334 = vmatmul.bf16.gmra.mxu0 %v4645
        %v5335 = vpop.f32.mrf.mxu0
        %v5336 = vadd.f32 %v5247, %v5335
        %v5337 = vpop.f32.mrf.mxu0
        %v5338 = vadd.f32 %v5249, %v5337
        %5339 = vmatmul.bf16.gmra.mxu0 %v4649
        %v5340 = vpop.f32.mrf.mxu0
        %v5341 = vadd.f32 %v5252, %v5340
        %v5342 = vpop.f32.mrf.mxu0
        %v5343 = vadd.f32 %v5254, %v5342
        %5344 = vmatmul.bf16.gmra.mxu0 %v4653
        %v5345 = vpop.f32.mrf.mxu0
        %v5346 = vadd.f32 %v5257, %v5345
        %v5347 = vpop.f32.mrf.mxu0
        %v5348 = vadd.f32 %v5259, %v5347
        %5349 = vmatmul.bf16.gmra.mxu0 %v4657
        %v5350 = vpop.f32.mrf.mxu0
        %v5351 = vadd.f32 %v5262, %v5350
        %v5352 = vpop.f32.mrf.mxu0
        %v5353 = vadd.f32 %v5264, %v5352
        %5354 = vdwg.mxu0
        %5355 = vmatpush.bf16.msra.mxu0 0
        %5356 = vmatpush.bf16.msra.mxu0 0
        %5357 = vmatpush.bf16.msra.mxu0 0
        %5358 = vmatpush.bf16.msra.mxu0 0
        %5359 = vmatpush.bf16.msra.mxu0 %v4914
        %5360 = vmatpush.bf16.msra.mxu0 %v4913
        %5361 = vmatpush.bf16.msra.mxu0 %v4912
        %5362 = vmatpush.bf16.msra.mxu0 %v4911
        %5363 = vmatmul.bf16.gmra.mxu0 %v4952
        %v5364 = vpop.f32.mrf.mxu0
        %v5365 = vadd.f32 %v5276, %v5364
        %v5366 = vpop.f32.mrf.mxu0
        %v5367 = vadd.f32 %v5278, %v5366
        %5368 = vmatmul.bf16.gmra.mxu0 %v4955
        %v5369 = vpop.f32.mrf.mxu0
        %v5370 = vadd.f32 %v5281, %v5369
        %v5371 = vpop.f32.mrf.mxu0
        %v5372 = vadd.f32 %v5283, %v5371
        %5373 = vmatmul.bf16.gmra.mxu0 %v4958
        %v5374 = vpop.f32.mrf.mxu0
        %v5375 = vadd.f32 %v5286, %v5374
        %v5376 = vpop.f32.mrf.mxu0
        %v5377 = vadd.f32 %v5288, %v5376
        %5378 = vmatmul.bf16.gmra.mxu0 %v4961
        %v5379 = vpop.f32.mrf.mxu0
        %v5380 = vadd.f32 %v5291, %v5379
        %v5381 = vpop.f32.mrf.mxu0
        %v5382 = vadd.f32 %v5293, %v5381
        %5383 = vmatmul.bf16.gmra.mxu0 %v4964
        %v5384 = vpop.f32.mrf.mxu0
        %v5385 = vadd.f32 %v5296, %v5384
        %v5386 = vpop.f32.mrf.mxu0
        %v5387 = vadd.f32 %v5298, %v5386
        %5388 = vmatmul.bf16.gmra.mxu0 %v4967
        %v5389 = vpop.f32.mrf.mxu0
        %v5390 = vadd.f32 %v5301, %v5389
        %v5391 = vpop.f32.mrf.mxu0
        %v5392 = vadd.f32 %v5303, %v5391
        %5393 = vmatmul.bf16.gmra.mxu0 %v4970
        %v5394 = vpop.f32.mrf.mxu0
        %v5395 = vadd.f32 %v5306, %v5394
        %v5396 = vpop.f32.mrf.mxu0
        %v5397 = vadd.f32 %v5308, %v5396
        %5398 = vmatmul.bf16.gmra.mxu0 %v4973
        %v5399 = vpop.f32.mrf.mxu0
        %v5400 = vadd.f32 %v5311, %v5399
        %v5401 = vpop.f32.mrf.mxu0
        %v5402 = vadd.f32 %v5313, %v5401
        %5403 = vmatmul.bf16.gmra.mxu0 %v4976
        %v5404 = vpop.f32.mrf.mxu0
        %v5405 = vadd.f32 %v5316, %v5404
        %v5406 = vpop.f32.mrf.mxu0
        %v5407 = vadd.f32 %v5318, %v5406
        %5408 = vmatmul.bf16.gmra.mxu0 %v4979
        %v5409 = vpop.f32.mrf.mxu0
        %v5410 = vadd.f32 %v5321, %v5409
        %v5411 = vpop.f32.mrf.mxu0
        %v5412 = vadd.f32 %v5323, %v5411
        %5413 = vmatmul.bf16.gmra.mxu0 %v4982
        %v5414 = vpop.f32.mrf.mxu0
        %v5415 = vadd.f32 %v5326, %v5414
        %v5416 = vpop.f32.mrf.mxu0
        %v5417 = vadd.f32 %v5328, %v5416
        %5418 = vmatmul.bf16.gmra.mxu0 %v4985
        %v5419 = vpop.f32.mrf.mxu0
        %v5420 = vadd.f32 %v5331, %v5419
        %v5421 = vpop.f32.mrf.mxu0
        %v5422 = vadd.f32 %v5333, %v5421
        %5423 = vmatmul.bf16.gmra.mxu0 %v4988
        %v5424 = vpop.f32.mrf.mxu0
        %v5425 = vadd.f32 %v5336, %v5424
        %v5426 = vpop.f32.mrf.mxu0
        %v5427 = vadd.f32 %v5338, %v5426
        %5428 = vmatmul.bf16.gmra.mxu0 %v4991
        %v5429 = vpop.f32.mrf.mxu0
        %v5430 = vadd.f32 %v5341, %v5429
        %v5431 = vpop.f32.mrf.mxu0
        %v5432 = vadd.f32 %v5343, %v5431
        %5433 = vmatmul.bf16.gmra.mxu0 %v4994
        %v5434 = vpop.f32.mrf.mxu0
        %v5435 = vadd.f32 %v5346, %v5434
        %v5436 = vpop.f32.mrf.mxu0
        %v5437 = vadd.f32 %v5348, %v5436
        %5438 = vmatmul.bf16.gmra.mxu0 %v4997
        %v5439 = vpop.f32.mrf.mxu0
        %v5440 = vadd.f32 %v5351, %v5439
        %v5441 = vpop.f32.mrf.mxu0
        %v5442 = vadd.f32 %v5353, %v5441
        %5443 = vdwg.mxu0
        %v5444 = vld [vmem:[%s250] sm:$0xff]
        %v5445 = vld [vmem:[%s250 + $0x8] sm:$0xff]
        %v5446 = vld [vmem:[%s250 + $0x10] sm:$0xff]
        %v5447 = vld [vmem:[%s250 + $0x18] sm:$0xff]
        %v5448 = vld [vmem:[%s250 + $0x20] sm:$0xff]
        %v5449 = vld [vmem:[%s250 + $0x28] sm:$0xff]
        %v5450 = vld [vmem:[%s250 + $0x30] sm:$0xff]
        %v5451 = vld [vmem:[%s250 + $0x38] sm:$0xff]
        %v5452 = vld [vmem:[%s250 + $0x40] sm:$0xff]
        %v5453 = vld [vmem:[%s250 + $0x48] sm:$0xff]
        %v5454 = vld [vmem:[%s250 + $0x50] sm:$0xff]
        %v5455 = vld [vmem:[%s250 + $0x58] sm:$0xff]
        %v5456 = vld [vmem:[%s250 + $0x60] sm:$0xff]
        %v5457 = vld [vmem:[%s250 + $0x68] sm:$0xff]
        %v5458 = vld [vmem:[%s250 + $0x70] sm:$0xff]
        %v5459 = vld [vmem:[%s250 + $0x78] sm:$0xff]
        %v5460 = vld [vmem:[%s250 + $0x80] sm:$0xff]
        %v5461 = vld [vmem:[%s250 + $0x88] sm:$0xff]
        %v5462 = vld [vmem:[%s250 + $0x90] sm:$0xff]
        %v5463 = vld [vmem:[%s250 + $0x98] sm:$0xff]
        %v5464 = vld [vmem:[%s250 + $0xa0] sm:$0xff]
        %v5465 = vld [vmem:[%s250 + $0xa8] sm:$0xff]
        %v5466 = vld [vmem:[%s250 + $0xb0] sm:$0xff]
        %v5467 = vld [vmem:[%s250 + $0xb8] sm:$0xff]
        %v5468 = vld [vmem:[%s250 + $0xc0] sm:$0xff]
        %v5469 = vld [vmem:[%s250 + $0xc8] sm:$0xff]
        %v5470 = vld [vmem:[%s250 + $0xd0] sm:$0xff]
        %v5471 = vld [vmem:[%s250 + $0xd8] sm:$0xff]
        %v5472 = vld [vmem:[%s250 + $0xe0] sm:$0xff]
        %v5473 = vld [vmem:[%s250 + $0xe8] sm:$0xff]
        %v5474 = vld [vmem:[%s250 + $0xf0] sm:$0xff]
        %v5475 = vld [vmem:[%s250 + $0xf8] sm:$0xff]
        %v5476 = vadd.f32 %v5444, %v5365
        %v5477 = vadd.f32 %v5445, %v5367
        %v5478 = vadd.f32 %v5446, %v5370
        %v5479 = vadd.f32 %v5447, %v5372
        %v5480 = vadd.f32 %v5448, %v5375
        %v5481 = vadd.f32 %v5449, %v5377
        %v5482 = vadd.f32 %v5450, %v5380
        %v5483 = vadd.f32 %v5451, %v5382
        %v5484 = vadd.f32 %v5452, %v5385
        %v5485 = vadd.f32 %v5453, %v5387
        %v5486 = vadd.f32 %v5454, %v5390
        %v5487 = vadd.f32 %v5455, %v5392
        %v5488 = vadd.f32 %v5456, %v5395
        %v5489 = vadd.f32 %v5457, %v5397
        %v5490 = vadd.f32 %v5458, %v5400
        %v5491 = vadd.f32 %v5459, %v5402
        %v5492 = vadd.f32 %v5460, %v5405
        %v5493 = vadd.f32 %v5461, %v5407
        %v5494 = vadd.f32 %v5462, %v5410
        %v5495 = vadd.f32 %v5463, %v5412
        %v5496 = vadd.f32 %v5464, %v5415
        %v5497 = vadd.f32 %v5465, %v5417
        %v5498 = vadd.f32 %v5466, %v5420
        %v5499 = vadd.f32 %v5467, %v5422
        %v5500 = vadd.f32 %v5468, %v5425
        %v5501 = vadd.f32 %v5469, %v5427
        %v5502 = vadd.f32 %v5470, %v5430
        %v5503 = vadd.f32 %v5471, %v5432
        %v5504 = vadd.f32 %v5472, %v5435
        %v5505 = vadd.f32 %v5473, %v5437
        %v5506 = vadd.f32 %v5474, %v5440
        %v5507 = vadd.f32 %v5475, %v5442
        %5508 = vst.msk [vmem:[%s292] sm:$0xff] %vm294, %v5476
        %5509 = vst.msk [vmem:[%s292 + $0x8] sm:$0xff] %vm294, %v5477
        %5510 = vst.msk [vmem:[%s292 + $0x10] sm:$0xff] %vm294, %v5478
        %5511 = vst.msk [vmem:[%s292 + $0x18] sm:$0xff] %vm294, %v5479
        %5512 = vst.msk [vmem:[%s292 + $0x20] sm:$0xff] %vm294, %v5480
        %5513 = vst.msk [vmem:[%s292 + $0x28] sm:$0xff] %vm294, %v5481
        %5514 = vst.msk [vmem:[%s292 + $0x30] sm:$0xff] %vm294, %v5482
        %5515 = vst.msk [vmem:[%s292 + $0x38] sm:$0xff] %vm294, %v5483
        %5516 = vst.msk [vmem:[%s292 + $0x40] sm:$0xff] %vm294, %v5484
        %5517 = vst.msk [vmem:[%s292 + $0x48] sm:$0xff] %vm294, %v5485
        %5518 = vst.msk [vmem:[%s292 + $0x50] sm:$0xff] %vm294, %v5486
        %5519 = vst.msk [vmem:[%s292 + $0x58] sm:$0xff] %vm294, %v5487
        %5520 = vst.msk [vmem:[%s292 + $0x60] sm:$0xff] %vm294, %v5488
        %5521 = vst.msk [vmem:[%s292 + $0x68] sm:$0xff] %vm294, %v5489
        %5522 = vst.msk [vmem:[%s292 + $0x70] sm:$0xff] %vm294, %v5490
        %5523 = vst.msk [vmem:[%s292 + $0x78] sm:$0xff] %vm294, %v5491
        %5524 = vst.msk [vmem:[%s292 + $0x80] sm:$0xff] %vm294, %v5492
        %5525 = vst.msk [vmem:[%s292 + $0x88] sm:$0xff] %vm294, %v5493
        %5526 = vst.msk [vmem:[%s292 + $0x90] sm:$0xff] %vm294, %v5494
        %5527 = vst.msk [vmem:[%s292 + $0x98] sm:$0xff] %vm294, %v5495
        %5528 = vst.msk [vmem:[%s292 + $0xa0] sm:$0xff] %vm294, %v5496
        %5529 = vst.msk [vmem:[%s292 + $0xa8] sm:$0xff] %vm294, %v5497
        %5530 = vst.msk [vmem:[%s292 + $0xb0] sm:$0xff] %vm294, %v5498
        %5531 = vst.msk [vmem:[%s292 + $0xb8] sm:$0xff] %vm294, %v5499
        %5532 = vst.msk [vmem:[%s292 + $0xc0] sm:$0xff] %vm294, %v5500
        %5533 = vst.msk [vmem:[%s292 + $0xc8] sm:$0xff] %vm294, %v5501
        %5534 = vst.msk [vmem:[%s292 + $0xd0] sm:$0xff] %vm294, %v5502
        %5535 = vst.msk [vmem:[%s292 + $0xd8] sm:$0xff] %vm294, %v5503
        %5536 = vst.msk [vmem:[%s292 + $0xe0] sm:$0xff] %vm294, %v5504
        %5537 = vst.msk [vmem:[%s292 + $0xe8] sm:$0xff] %vm294, %v5505
        %5538 = vst.msk [vmem:[%s292 + $0xf0] sm:$0xff] %vm294, %v5506
        %5539 = vst.msk [vmem:[%s292 + $0xf8] sm:$0xff] %vm294, %v5507
        %s5540 = sand.u32 %s142, 1
        %s5541 = scalar_lea.sflag [#allocation6], %s5540
        %s5542 = sand.u32 %s142, 1
        %s5543 = smul.addr %s5542, 256
        %s5544 = scalar_lea.vmem [#allocation12], %s5543
        // Predicated region
        $region57: #{_lambda_.1} parent=39 // pred_check
          %p5545 = pneg %p152
        $region58: #{_lambda_.1} parent=39 // pred_check_branch
          %5547 = sbr.rel (%p5545) target = $region60
        $region59: #{_lambda_.1} parent=39 // pred_region
          %5549 = vsyncadd %s5541, 0
          %s5550 = smul.addr %s24, 32
          %s5551 = smul.addr %s5550, 8
          %s5552 = scalar_lea.hbm %s5, %s5551
          %s5553 = sshll.u32 %s5544, 4
          %s5554 = int_to_ptr.vmem [resolvable:$true] %s5553
          %s5555 = sshll.u32 %s5552, 4
          %s5556 = int_to_ptr.hbm [resolvable:$true] %s5555
          %5561 = dma.vmem_to_hbm [thread:$0]  %s5554, 4096, %s5556, %s5541, 128, 128, 8
        $region60: #{_lambda_.1} parent=39 // pred_fallthru
          _
      $region40: #{_lambda_.1} parent=5 // pred_fallthru
        _
      %p5562 = scmp.le.s32.totalorder 2, %s19
      // Predicated region
      $region61: #{_lambda_.1} parent=5 // pred_check
        %p5563 = pneg %p5562
      $region62: #{_lambda_.1} parent=5 // pred_check_branch
        %5565 = sbr.rel (%p5563) target = $region64
      $region63: #{_lambda_.1} parent=5 // pred_region
        %s5566 = ssub.s32 %s19, 2
        // Predicated region
        $region65: #{_lambda_.1} parent=63 // pred_check
          %p5567 = pneg %p158
        $region66: #{_lambda_.1} parent=63 // pred_check_branch
          %5569 = sbr.rel (%p5567) target = $region68
        $region67: #{_lambda_.1} parent=63 // pred_region
          %s5570 = sand.u32 %s143, 1
          %s5571 = scalar_lea.sflag [#allocation6], %s5570
          %s5572 = sand.u32 %s143, 1
          %s5573 = smul.addr %s5572, 256
          %s5574 = scalar_lea.vmem [#allocation12], %s5573
          %5576 = dma.done %s5571, 4096
        $region68: #{_lambda_.1} parent=63 // pred_fallthru
          _
      $region64: #{_lambda_.1} parent=5 // pred_fallthru
        _
    $region6: #{_lambda_.1} parent=1 // loop_footer
      %s23 = sadd.s32 1, %s19
    $region7: #{_lambda_.1} parent=1 // loop_footer_branch
      %18 = sbr.rel target = $region3
    $region8: #{_lambda_.1} parent=1 // loop_exit
      _
    %5577 = vsyncpa [#allocation5], 1
    %s5578 = scalar_lea.sflag [#allocation5], 1
    %5579 = vsyncpa %s5578, 1
    %5580 = vsyncpa [#allocation8], 1
    %5581 = vsyncpa [#allocation11], 1
    %5582 = vsyncpa [#allocation6], 1
    %s5583 = scalar_lea.sflag [#allocation6], 1
    %5584 = vsyncpa %s5583, 1

</llo_original>
